<compile_context>
chip_gen: v7x
topology: tpu7x:2x2x1
jax: 0.10.0
libtpu: 0.0.40
codegen_flags: <defaults>
</compile_context>

<pallas_src>
import jax
import jax.numpy as jnp
from jax.experimental import pallas as pl
from jax.experimental.pallas import tpu as pltpu

# Feature sizes of the PyTorch Net: 784 -> 512 -> 256 -> 10.
IN_F, H1, H2, OUT_F = 784, 512, 256, 10
OUT_PAD = 128   # logits padded to one full lane group (lane-dense output)


def _pick_tb(batch):
    """Batch tile: multiple of 128, >=2 grid steps when possible (v7x has 2
    TensorCores on the batch axis), capped at 512 (fits v5e's 16 MiB scoped
    VMEM default with f32 x tiles + double buffering)."""
    half = -(-batch // 2)               # ceil(B / 2)
    tb = -(-half // 128) * 128          # round up to a multiple of 128
    return int(max(128, min(512, tb)))


def mlp_kernel(x_ref, w1_ref, b1_ref, w2_ref, b2_ref, w3_ref, b3_ref, o_ref):
    # In-kernel bf16 cast of the f32 x tile (VPU work, hidden under the MXU).
    x = x_ref[...].astype(jnp.bfloat16)
    # fc1 + relu   (bf16 operands, f32 MXU accumulation)
    h = jnp.dot(x, w1_ref[...], preferred_element_type=jnp.float32)
    h = jnp.maximum(h + b1_ref[...], 0.0).astype(jnp.bfloat16)
    # fc2 + relu
    h = jnp.dot(h, w2_ref[...], preferred_element_type=jnp.float32)
    h = jnp.maximum(h + b2_ref[...], 0.0).astype(jnp.bfloat16)
    # fc3 (logits; columns 10..127 stay zero because w3/b3 are zero-padded).
    h = jnp.dot(h, w3_ref[...], preferred_element_type=jnp.float32) + b3_ref[...]
    o_ref[...] = h.astype(o_ref.dtype)   # bf16 writeback (halved output HBM bytes)


def prep_params(params):
    """One-time re-layout of PyTorch-style ((out,in) W, (out,) b) params.

    Weights -> (in, out) bf16 slabs (w3 zero-padded to 128 output lanes).
    Biases  -> (1, out) f32 rows (final bias padded to 128 lanes).
    """
    (w1, b1), (w2, b2), (w3, b3) = params
    w1t = w1.T.astype(jnp.bfloat16)                       # (784, 512), no K pad
    w2t = w2.T.astype(jnp.bfloat16)                       # (512, 256)
    w3t = (
        jnp.zeros((H2, OUT_PAD), jnp.bfloat16)
        .at[:, :OUT_F]
        .set(w3.T.astype(jnp.bfloat16))
    )
    b1r = b1[None, :].astype(jnp.float32)
    b2r = b2[None, :].astype(jnp.float32)
    b3r = jnp.zeros((1, OUT_PAD), jnp.float32).at[:, :OUT_F].set(b3)
    return w1t, b1r, w2t, b2r, w3t, b3r


@jax.jit
def net_forward(x, prepped):
    """Fused 3-layer MLP forward: (B, 784) f32 -> (B, 10) f32 logits."""
    w1t, b1r, w2t, b2r, w3t, b3r = prepped
    B = x.shape[0]
    TB = _pick_tb(B)
    n_tiles = pl.cdiv(B, TB)

    cost = pl.CostEstimate(
        flops=2 * B * (IN_F * H1 + H1 * H2 + H2 * OUT_F),
        transcendentals=0,
        bytes_accessed=(
            B * (IN_F * 4 + OUT_PAD * 2)                         # x in, logits out
            + (IN_F * H1 + H1 * H2 + H2 * OUT_PAD) * 2           # bf16 weights
            + (H1 + H2 + OUT_PAD) * 4                            # f32 biases
        ),
    )

    out = pl.pallas_call(
        mlp_kernel,
        out_shape=jax.ShapeDtypeStruct((B, OUT_PAD), jnp.bfloat16),
        grid=(n_tiles,),
        in_specs=[
            pl.BlockSpec((TB, IN_F), lambda i: (i, 0)),     # x tile (pipelined, f32)
            pl.BlockSpec((IN_F, H1), lambda i: (0, 0)),     # weights: VMEM-resident
            pl.BlockSpec((1, H1), lambda i: (0, 0)),
            pl.BlockSpec((H1, H2), lambda i: (0, 0)),
            pl.BlockSpec((1, H2), lambda i: (0, 0)),
            pl.BlockSpec((H2, OUT_PAD), lambda i: (0, 0)),
            pl.BlockSpec((1, OUT_PAD), lambda i: (0, 0)),
        ],
        out_specs=pl.BlockSpec((TB, OUT_PAD), lambda i: (i, 0)),
        compiler_params=pltpu.CompilerParams(
            dimension_semantics=("parallel",),
        ),
        cost_estimate=cost,
    )(x, w1t, b1r, w2t, b2r, w3t, b3r)

    # Slice real logits and return f32 (wrapper-side; keep the [:, :10] slice
    # before any downstream reduction since padded lanes are not meaningful).
    return out[:, :OUT_F].astype(jnp.float32)


def init_params(key):
    """Deterministic PyTorch-style (Kaiming-uniform-ish) initialization (f32)."""
    def linear_init(k, in_f, out_f):
        k_w, k_b = jax.random.split(k)
        bound = 1.0 / jnp.sqrt(in_f)
        w = jax.random.uniform(k_w, (out_f, in_f), jnp.float32, -bound, bound)
        b = jax.random.uniform(k_b, (out_f,), jnp.float32, -bound, bound)
        return w, b

    k1, k2, k3 = jax.random.split(key, 3)
    return (
        linear_init(k1, IN_F, H1),
        linear_init(k2, H1, H2),
        linear_init(k3, H2, OUT_F),
    )


def reference_forward(x, params):
    (w1, b1), (w2, b2), (w3, b3) = params
    h = jnp.maximum(x @ w1.T + b1, 0.0)
    h = jnp.maximum(h @ w2.T + b2, 0.0)
    return h @ w3.T + b3


if __name__ == "__main__":
    key = jax.random.PRNGKey(0)
    k_params, k_x = jax.random.split(key)
    params = init_params(k_params)
    prepped = prep_params(params)          # one-time re-layout (outside hot path)

    B = 200                                 # non-multiple of TB: exercises the partial last block
    x = jax.random.normal(k_x, (B, IN_F), jnp.float32)

    out = net_forward(x, prepped)
    out = jax.block_until_ready(out)

    ref = reference_forward(x, params)      # f32 reference
    assert out.shape == (B, OUT_F), out.shape
    # bf16 matmul operands + bf16 logits writeback with f32 MXU accumulation
    # -> loosened tolerance vs the f32 reference.
    assert jnp.allclose(out, ref, atol=5e-2, rtol=5e-2), (
        "mismatch vs reference, max abs diff = "
        f"{float(jnp.max(jnp.abs(out - ref)))}"
    )

    print("KERNEL_OK")
</pallas_src>

<mosaic_0001>
module attributes {stable_mosaic.version = 11 : i64} {
  func.func @mlp_kernel(%arg0: i32, %arg1: memref<128x784xf32, #tpu.memory_space<vmem>>, %arg2: memref<784x512xbf16, #tpu.memory_space<vmem>>, %arg3: memref<1x512xf32, #tpu.memory_space<vmem>>, %arg4: memref<512x256xbf16, #tpu.memory_space<vmem>>, %arg5: memref<1x256xf32, #tpu.memory_space<vmem>>, %arg6: memref<256x128xbf16, #tpu.memory_space<vmem>>, %arg7: memref<1x128xf32, #tpu.memory_space<vmem>>, %arg8: memref<128x128xbf16, #tpu.memory_space<vmem>>) attributes {dimension_semantics = [#tpu.dimension_semantics<parallel>], iteration_bounds = array<i64: 2>, scalar_prefetch = 0 : i64, scratch_operands = 0 : i64, tpu.core_type = #tpu.core_type<tc>, window_params = [{transform_indices = @transform_0, window_bounds = array<i64: 128, 784>}, {pipeline_mode = #tpu.pipeline_mode<synchronous>, transform_indices = @transform_1, window_bounds = array<i64: 784, 512>}, {pipeline_mode = #tpu.pipeline_mode<synchronous>, transform_indices = @transform_2, window_bounds = array<i64: 1, 512>}, {pipeline_mode = #tpu.pipeline_mode<synchronous>, transform_indices = @transform_3, window_bounds = array<i64: 512, 256>}, {pipeline_mode = #tpu.pipeline_mode<synchronous>, transform_indices = @transform_4, window_bounds = array<i64: 1, 256>}, {pipeline_mode = #tpu.pipeline_mode<synchronous>, transform_indices = @transform_5, window_bounds = array<i64: 256, 128>}, {pipeline_mode = #tpu.pipeline_mode<synchronous>, transform_indices = @transform_6, window_bounds = array<i64: 1, 128>}, {transform_indices = @transform_7, window_bounds = array<i64: 128, 128>}]} {
    %c0 = arith.constant 0 : index
    %c0_0 = arith.constant 0 : index
    %0 = vector.load %arg1[%c0, %c0_0] : memref<128x784xf32, #tpu.memory_space<vmem>>, vector<128x784xf32>
    %1 = arith.truncf %0 : vector<128x784xf32> to vector<128x784xbf16>
    %c0_1 = arith.constant 0 : index
    %c0_2 = arith.constant 0 : index
    %2 = vector.load %arg2[%c0_1, %c0_2] : memref<784x512xbf16, #tpu.memory_space<vmem>>, vector<784x512xbf16>
    %cst = arith.constant dense<0.000000e+00> : vector<128x512xf32>
    %3 = tpu.matmul %1, %2, %cst {dimension_numbers = #tpu.dot_dimension_numbers<[1], [0], [0], [1], [0, 0, 1, 1], [], []>} : vector<128x784xbf16>, vector<784x512xbf16>, vector<128x512xf32> -> vector<128x512xf32>
    %c0_3 = arith.constant 0 : index
    %c0_4 = arith.constant 0 : index
    %4 = vector.load %arg3[%c0_3, %c0_4] : memref<1x512xf32, #tpu.memory_space<vmem>>, vector<1x512xf32>
    %5 = vector.broadcast %4 : vector<1x512xf32> to vector<128x512xf32>
    %6 = arith.addf %3, %5 : vector<128x512xf32>
    %cst_5 = arith.constant 0.000000e+00 : f32
    %7 = vector.broadcast %cst_5 : f32 to vector<128x512xf32>
    %8 = arith.maximumf %6, %7 : vector<128x512xf32>
    %9 = arith.truncf %8 : vector<128x512xf32> to vector<128x512xbf16>
    %c0_6 = arith.constant 0 : index
    %c0_7 = arith.constant 0 : index
    %10 = vector.load %arg4[%c0_6, %c0_7] : memref<512x256xbf16, #tpu.memory_space<vmem>>, vector<512x256xbf16>
    %cst_8 = arith.constant dense<0.000000e+00> : vector<128x256xf32>
    %11 = tpu.matmul %9, %10, %cst_8 {dimension_numbers = #tpu.dot_dimension_numbers<[1], [0], [0], [1], [0, 0, 1, 1], [], []>} : vector<128x512xbf16>, vector<512x256xbf16>, vector<128x256xf32> -> vector<128x256xf32>
    %c0_9 = arith.constant 0 : index
    %c0_10 = arith.constant 0 : index
    %12 = vector.load %arg5[%c0_9, %c0_10] : memref<1x256xf32, #tpu.memory_space<vmem>>, vector<1x256xf32>
    %13 = vector.broadcast %12 : vector<1x256xf32> to vector<128x256xf32>
    %14 = arith.addf %11, %13 : vector<128x256xf32>
    %cst_11 = arith.constant 0.000000e+00 : f32
    %15 = vector.broadcast %cst_11 : f32 to vector<128x256xf32>
    %16 = arith.maximumf %14, %15 : vector<128x256xf32>
    %17 = arith.truncf %16 : vector<128x256xf32> to vector<128x256xbf16>
    %c0_12 = arith.constant 0 : index
    %c0_13 = arith.constant 0 : index
    %18 = vector.load %arg6[%c0_12, %c0_13] : memref<256x128xbf16, #tpu.memory_space<vmem>>, vector<256x128xbf16>
    %cst_14 = arith.constant dense<0.000000e+00> : vector<128x128xf32>
    %19 = tpu.matmul %17, %18, %cst_14 {dimension_numbers = #tpu.dot_dimension_numbers<[1], [0], [0], [1], [0, 0, 1, 1], [], []>} : vector<128x256xbf16>, vector<256x128xbf16>, vector<128x128xf32> -> vector<128x128xf32>
    %c0_15 = arith.constant 0 : index
    %c0_16 = arith.constant 0 : index
    %20 = vector.load %arg7[%c0_15, %c0_16] : memref<1x128xf32, #tpu.memory_space<vmem>>, vector<1x128xf32>
    %21 = vector.broadcast %20 : vector<1x128xf32> to vector<128x128xf32>
    %22 = arith.addf %19, %21 : vector<128x128xf32>
    %23 = arith.truncf %22 : vector<128x128xf32> to vector<128x128xbf16>
    %c0_17 = arith.constant 0 : index
    %c0_18 = arith.constant 0 : index
    %24 = vector.load %arg8[%c0_17, %c0_18] : memref<128x128xbf16, #tpu.memory_space<vmem>>, vector<128x128xbf16>
    tpu.vector_store %arg8[%c0_17, %c0_18], %23 {strides = array<i32>} : memref<128x128xbf16, #tpu.memory_space<vmem>>, vector<128x128xbf16>,
    return
  }
  func.func @transform_0(%arg0: i32) -> (i32, i32) {
    %c0_i32 = arith.constant 0 : i32
    %c0_i32_0 = arith.constant 0 : i32
    return %arg0, %c0_i32 : i32, i32
  }
  func.func @transform_1(%arg0: i32) -> (i32, i32) {
    %c0_i32 = arith.constant 0 : i32
    %c0_i32_0 = arith.constant 0 : i32
    %c0_i32_1 = arith.constant 0 : i32
    return %c0_i32, %c0_i32_0 : i32, i32
  }
  func.func @transform_2(%arg0: i32) -> (i32, i32) {
    %c0_i32 = arith.constant 0 : i32
    %c0_i32_0 = arith.constant 0 : i32
    %c0_i32_1 = arith.constant 0 : i32
    return %c0_i32, %c0_i32_0 : i32, i32
  }
  func.func @transform_3(%arg0: i32) -> (i32, i32) {
    %c0_i32 = arith.constant 0 : i32
    %c0_i32_0 = arith.constant 0 : i32
    %c0_i32_1 = arith.constant 0 : i32
    return %c0_i32, %c0_i32_0 : i32, i32
  }
  func.func @transform_4(%arg0: i32) -> (i32, i32) {
    %c0_i32 = arith.constant 0 : i32
    %c0_i32_0 = arith.constant 0 : i32
    %c0_i32_1 = arith.constant 0 : i32
    return %c0_i32, %c0_i32_0 : i32, i32
  }
  func.func @transform_5(%arg0: i32) -> (i32, i32) {
    %c0_i32 = arith.constant 0 : i32
    %c0_i32_0 = arith.constant 0 : i32
    %c0_i32_1 = arith.constant 0 : i32
    return %c0_i32, %c0_i32_0 : i32, i32
  }
  func.func @transform_6(%arg0: i32) -> (i32, i32) {
    %c0_i32 = arith.constant 0 : i32
    %c0_i32_0 = arith.constant 0 : i32
    %c0_i32_1 = arith.constant 0 : i32
    return %c0_i32, %c0_i32_0 : i32, i32
  }
  func.func @transform_7(%arg0: i32) -> (i32, i32) {
    %c0_i32 = arith.constant 0 : i32
    %c0_i32_0 = arith.constant 0 : i32
    return %arg0, %c0_i32 : i32, i32
  }
}

</mosaic_0001>

<llo_original>
// kernel: net_forward.1
$region0: #{net_forward.1}
  #allocation0 [shape = 'u32[]', space=smem, size = 0x4, offset = 0x4, fixed_abs, tag = 'smem constant byte address 0x4 - core index']
  #allocation1 [shape = 'u32[144,128]{1,0:T(1,128)}', space=vmem, size = 0x12000, scoped, tag = 'internal scratch']
  %s0 = inlined_call_operand.hbm [shape: f32[200,784], index: 0, kind: input, shape index: {}]
  %s1 = inlined_call_operand.hbm [shape: bf16[784,512], index: 1, kind: input, shape index: {}]
  %s2 = inlined_call_operand.vmem [shape: f32[1,512], index: 2, kind: input, shape index: {}]
  %s3 = inlined_call_operand.hbm [shape: bf16[512,256], index: 3, kind: input, shape index: {}]
  %s4 = inlined_call_operand.vmem [shape: f32[1,256], index: 4, kind: input, shape index: {}]
  %s5 = inlined_call_operand.hbm [shape: bf16[256,128], index: 5, kind: input, shape index: {}]
  %s6 = inlined_call_operand.vmem [shape: f32[1,128], index: 6, kind: input, shape index: {}]
  %s7 = inlined_call_operand.vmem [shape: bf16[200,128], index: 7, kind: output, shape index: {}]
  %s8 = sld [smem:[#allocation0]]
  $region121: #{net_forward.1} parent=0
    _
  %s10 = ssub.s32 1, %s8
  %s11 = scalar_select 0, %s10, %s8
  $region1: #{net_forward.1} parent=0
    #allocation2 [shape = 'u8[917504]{0}', space=vmem, size = 0xe0000, scoped, tag = 'input window, operand 0']
    #allocation3 [shape = 's32[2]{0}', space=sflag, size = 0x8, scoped, tag = 'scoped memory for net_forward.1']
    #allocation4 [shape = 'u8[802816]{0}', space=vmem, size = 0xc4000, scoped, tag = 'input window, operand 1, single buffered']
    #allocation5 [shape = 's32[1]{0}', space=sflag, size = 0x4, scoped, tag = 'scoped memory for net_forward.1']
    #allocation6 [shape = 'u8[262144]{0}', space=vmem, size = 0x40000, scoped, tag = 'input window, operand 3, single buffered']
    #allocation7 [shape = 'u8[65536]{0}', space=vmem, size = 0x10000, scoped, tag = 'input window, operand 5, single buffered']
    #allocation8 [shape = 's32[1]{0}', space=sflag, size = 0x4, scoped, tag = 'scoped memory for net_forward.1']
    #allocation9 [shape = 'u8[65536]{0}', space=vmem, size = 0x10000, scoped, tag = 'output window, operand 0']
    %12 = vsyncpa [#allocation3], 0
    %s13 = scalar_lea.sflag [#allocation3], 1
    %14 = vsyncpa %s13, 0
    %15 = vsyncpa [#allocation5], 0
    %16 = vsyncpa [#allocation8], 0
    loop: start=0, step=1, limit=4
    $region2: #{net_forward.1} parent=1 // loop_pre_header
      _
    $region3: #{net_forward.1} parent=1 // loop_header
      %s18 = sphi 0, %s22
      %p19 = scmp.ge.s32.totalorder %s18, 4
      %s28 = sphi 0, %s30
      %s31 = sphi 0, %s28
      %s32 = sphi 0, %s31
      %s48 = sphi 0, %s32
      %s52 = sphi 0, %s52
      %s54 = sphi 0, %s52
      %s55 = sphi 0, %s54
      %s69 = sphi 0, %s55
      %s73 = sphi 0, %s73
      %s75 = sphi 0, %s73
      %s76 = sphi 0, %s75
      %s90 = sphi 0, %s76
      %s94 = sphi 0, %s94
      %s96 = sphi 0, %s94
      %s97 = sphi 0, %s96
      %s111 = sphi 0, %s97
      %s115 = sphi 0, %s115
      %s117 = sphi 0, %s115
      %s118 = sphi 0, %s117
      %s132 = sphi 0, %s118
      %s136 = sphi 0, %s136
      %s138 = sphi 0, %s136
      %s139 = sphi 0, %s138
      %s153 = sphi 0, %s139
      %s157 = sphi 0, %s157
      %s159 = sphi 0, %s157
      %s160 = sphi 0, %s159
      %s174 = sphi 0, %s160
      %s180 = sphi 0, %s182
      %s183 = sphi 0, %s180
      %s184 = sphi 0, %s183
      %s200 = sphi 0, %s184
    $region4: #{net_forward.1} parent=1 // loop_header_branch
      %21 = sbr.rel (%p19) target = $region8
    $region5: #{net_forward.1} parent=1 // loop_body
      %s23 = ssub.s32 %s18, 1
      %s24 = ssub.s32 %s18, 2
      %s25 = sadd.s32 %s18, 1
      %s26 = ssub.s32 %s18, %s25
      %p27 = scmp.eq.s32.totalorder %s26, 0
      %s29 = sadd.s32 %s28, 1
      %s30 = scalar_select %p27, %s28, %s29
      %p33 = pneg %p27
      %p34 = scmp.eq.s32.totalorder %s18, 1
      %p35 = por %p33, %p34
      %p36 = scmp.ne.s32.totalorder %s28, %s31
      %p37 = scmp.eq.s32.totalorder %s18, 0
      %p38 = por %p36, %p37
      %p39 = scmp.ne.s32.totalorder %s28, %s31
      %p40 = scmp.eq.s32.totalorder %s23, 1
      %p41 = por %p39, %p40
      %p42 = scmp.ne.s32.totalorder %s31, %s32
      %p43 = scmp.eq.s32.totalorder %s23, 0
      %p44 = por %p42, %p43
      %p45 = scmp.ne.s32.totalorder %s31, %s32
      %p46 = scmp.eq.s32.totalorder %s24, 1
      %p47 = por %p45, %p46
      %p49 = scmp.ne.s32.totalorder %s32, %s48
      %p50 = scmp.eq.s32.totalorder %s24, 0
      %p51 = por %p49, %p50
      %s53 = sadd.s32 %s52, 1
      %p56 = scmp.eq.s32.totalorder %s18, 1
      %p57 = scmp.ne.s32.totalorder %s52, %s54
      %p58 = scmp.eq.s32.totalorder %s18, 0
      %p59 = por %p57, %p58
      %p60 = scmp.ne.s32.totalorder %s52, %s54
      %p61 = scmp.eq.s32.totalorder %s23, 1
      %p62 = por %p60, %p61
      %p63 = scmp.ne.s32.totalorder %s54, %s55
      %p64 = scmp.eq.s32.totalorder %s23, 0
      %p65 = por %p63, %p64
      %p66 = scmp.ne.s32.totalorder %s54, %s55
      %p67 = scmp.eq.s32.totalorder %s24, 1
      %p68 = por %p66, %p67
      %p70 = scmp.ne.s32.totalorder %s55, %s69
      %p71 = scmp.eq.s32.totalorder %s24, 0
      %p72 = por %p70, %p71
      %s74 = sadd.s32 %s73, 1
      %p77 = scmp.eq.s32.totalorder %s18, 1
      %p78 = scmp.ne.s32.totalorder %s73, %s75
      %p79 = scmp.eq.s32.totalorder %s18, 0
      %p80 = por %p78, %p79
      %p81 = scmp.ne.s32.totalorder %s73, %s75
      %p82 = scmp.eq.s32.totalorder %s23, 1
      %p83 = por %p81, %p82
      %p84 = scmp.ne.s32.totalorder %s75, %s76
      %p85 = scmp.eq.s32.totalorder %s23, 0
      %p86 = por %p84, %p85
      %p87 = scmp.ne.s32.totalorder %s75, %s76
      %p88 = scmp.eq.s32.totalorder %s24, 1
      %p89 = por %p87, %p88
      %p91 = scmp.ne.s32.totalorder %s76, %s90
      %p92 = scmp.eq.s32.totalorder %s24, 0
      %p93 = por %p91, %p92
      %s95 = sadd.s32 %s94, 1
      %p98 = scmp.eq.s32.totalorder %s18, 1
      %p99 = scmp.ne.s32.totalorder %s94, %s96
      %p100 = scmp.eq.s32.totalorder %s18, 0
      %p101 = por %p99, %p100
      %p102 = scmp.ne.s32.totalorder %s94, %s96
      %p103 = scmp.eq.s32.totalorder %s23, 1
      %p104 = por %p102, %p103
      %p105 = scmp.ne.s32.totalorder %s96, %s97
      %p106 = scmp.eq.s32.totalorder %s23, 0
      %p107 = por %p105, %p106
      %p108 = scmp.ne.s32.totalorder %s96, %s97
      %p109 = scmp.eq.s32.totalorder %s24, 1
      %p110 = por %p108, %p109
      %p112 = scmp.ne.s32.totalorder %s97, %s111
      %p113 = scmp.eq.s32.totalorder %s24, 0
      %p114 = por %p112, %p113
      %s116 = sadd.s32 %s115, 1
      %p119 = scmp.eq.s32.totalorder %s18, 1
      %p120 = scmp.ne.s32.totalorder %s115, %s117
      %p121 = scmp.eq.s32.totalorder %s18, 0
      %p122 = por %p120, %p121
      %p123 = scmp.ne.s32.totalorder %s115, %s117
      %p124 = scmp.eq.s32.totalorder %s23, 1
      %p125 = por %p123, %p124
      %p126 = scmp.ne.s32.totalorder %s117, %s118
      %p127 = scmp.eq.s32.totalorder %s23, 0
      %p128 = por %p126, %p127
      %p129 = scmp.ne.s32.totalorder %s117, %s118
      %p130 = scmp.eq.s32.totalorder %s24, 1
      %p131 = por %p129, %p130
      %p133 = scmp.ne.s32.totalorder %s118, %s132
      %p134 = scmp.eq.s32.totalorder %s24, 0
      %p135 = por %p133, %p134
      %s137 = sadd.s32 %s136, 1
      %p140 = scmp.eq.s32.totalorder %s18, 1
      %p141 = scmp.ne.s32.totalorder %s136, %s138
      %p142 = scmp.eq.s32.totalorder %s18, 0
      %p143 = por %p141, %p142
      %p144 = scmp.ne.s32.totalorder %s136, %s138
      %p145 = scmp.eq.s32.totalorder %s23, 1
      %p146 = por %p144, %p145
      %p147 = scmp.ne.s32.totalorder %s138, %s139
      %p148 = scmp.eq.s32.totalorder %s23, 0
      %p149 = por %p147, %p148
      %p150 = scmp.ne.s32.totalorder %s138, %s139
      %p151 = scmp.eq.s32.totalorder %s24, 1
      %p152 = por %p150, %p151
      %p154 = scmp.ne.s32.totalorder %s139, %s153
      %p155 = scmp.eq.s32.totalorder %s24, 0
      %p156 = por %p154, %p155
      %s158 = sadd.s32 %s157, 1
      %p161 = scmp.eq.s32.totalorder %s18, 1
      %p162 = scmp.ne.s32.totalorder %s157, %s159
      %p163 = scmp.eq.s32.totalorder %s18, 0
      %p164 = por %p162, %p163
      %p165 = scmp.ne.s32.totalorder %s157, %s159
      %p166 = scmp.eq.s32.totalorder %s23, 1
      %p167 = por %p165, %p166
      %p168 = scmp.ne.s32.totalorder %s159, %s160
      %p169 = scmp.eq.s32.totalorder %s23, 0
      %p170 = por %p168, %p169
      %p171 = scmp.ne.s32.totalorder %s159, %s160
      %p172 = scmp.eq.s32.totalorder %s24, 1
      %p173 = por %p171, %p172
      %p175 = scmp.ne.s32.totalorder %s160, %s174
      %p176 = scmp.eq.s32.totalorder %s24, 0
      %p177 = por %p175, %p176
      %s178 = ssub.s32 %s18, %s25
      %p179 = scmp.eq.s32.totalorder %s178, 0
      %s181 = sadd.s32 %s180, 1
      %s182 = scalar_select %p179, %s180, %s181
      %p185 = pneg %p179
      %p186 = scmp.eq.s32.totalorder %s18, 1
      %p187 = por %p185, %p186
      %p188 = scmp.ne.s32.totalorder %s180, %s183
      %p189 = scmp.eq.s32.totalorder %s18, 0
      %p190 = por %p188, %p189
      %p191 = scmp.ne.s32.totalorder %s180, %s183
      %p192 = scmp.eq.s32.totalorder %s23, 1
      %p193 = por %p191, %p192
      %p194 = scmp.ne.s32.totalorder %s183, %s184
      %p195 = scmp.eq.s32.totalorder %s23, 0
      %p196 = por %p194, %p195
      %p197 = scmp.ne.s32.totalorder %s183, %s184
      %p198 = scmp.eq.s32.totalorder %s24, 1
      %p199 = por %p197, %p198
      %p201 = scmp.ne.s32.totalorder %s184, %s200
      %p202 = scmp.eq.s32.totalorder %s24, 0
      %p203 = por %p201, %p202
      %p204 = scmp.le.s32.totalorder 1, %s18
      %p205 = scmp.lt.s32.totalorder %s18, 3
      %p206 = pnand %p204, %p205
      %p207 = pneg %p206
      // Predicated region
      $region9: #{net_forward.1} parent=5 // pred_check
        _
      $region10: #{net_forward.1} parent=5 // pred_check_branch
        %209 = sbr.rel (%p206) target = $region12
      $region11: #{net_forward.1} parent=5 // pred_region
        %s210 = ssub.s32 %s18, 1
        // Predicated region
        $region13: #{net_forward.1} parent=11 // pred_check
          %p211 = pneg %p65
        $region14: #{net_forward.1} parent=11 // pred_check_branch
          %213 = sbr.rel (%p211) target = $region16
        $region15: #{net_forward.1} parent=11 // pred_region
          %s215 = ssub.s32 25088, 25088
          %216 = vsyncadd [#allocation5], %s215
          %s217 = sshll.u32 [#allocation4], 4
          %s218 = int_to_ptr.vmem [resolvable:$true] %s217
          %223 = dma.hbm_to_vmem [thread:$0]  %s1, 25088, %s218, [#allocation5], 256, 256, 16
        $region16: #{net_forward.1} parent=11 // pred_fallthru
          _
        // Predicated region
        $region17: #{net_forward.1} parent=11 // pred_check
          %p224 = pneg %p86
        $region18: #{net_forward.1} parent=11 // pred_check_branch
          %226 = sbr.rel (%p224) target = $region20
        $region19: #{net_forward.1} parent=11 // pred_region
          _
        $region20: #{net_forward.1} parent=11 // pred_fallthru
          _
        // Predicated region
        $region21: #{net_forward.1} parent=11 // pred_check
          %p227 = pneg %p107
        $region22: #{net_forward.1} parent=11 // pred_check_branch
          %229 = sbr.rel (%p227) target = $region24
        $region23: #{net_forward.1} parent=11 // pred_region
          %s231 = ssub.s32 8192, 8192
          %232 = vsyncadd [#allocation5], %s231
          %s233 = sshll.u32 [#allocation6], 4
          %s234 = int_to_ptr.vmem [resolvable:$true] %s233
          %239 = dma.hbm_to_vmem [thread:$0]  %s3, 8192, %s234, [#allocation5], 128, 128, 8
        $region24: #{net_forward.1} parent=11 // pred_fallthru
          _
        // Predicated region
        $region25: #{net_forward.1} parent=11 // pred_check
          %p240 = pneg %p128
        $region26: #{net_forward.1} parent=11 // pred_check_branch
          %242 = sbr.rel (%p240) target = $region28
        $region27: #{net_forward.1} parent=11 // pred_region
          _
        $region28: #{net_forward.1} parent=11 // pred_fallthru
          _
        // Predicated region
        $region29: #{net_forward.1} parent=11 // pred_check
          %p243 = pneg %p149
        $region30: #{net_forward.1} parent=11 // pred_check_branch
          %245 = sbr.rel (%p243) target = $region32
        $region31: #{net_forward.1} parent=11 // pred_region
          %s247 = ssub.s32 2048, 2048
          %248 = vsyncadd [#allocation8], %s247
          %s249 = sshll.u32 [#allocation7], 4
          %s250 = int_to_ptr.vmem [resolvable:$true] %s249
          %255 = dma.hbm_to_vmem [thread:$0]  %s5, 2048, %s250, [#allocation8], 64, 64, 4
        $region32: #{net_forward.1} parent=11 // pred_fallthru
          _
        // Predicated region
        $region33: #{net_forward.1} parent=11 // pred_check
          %p256 = pneg %p170
        $region34: #{net_forward.1} parent=11 // pred_check_branch
          %258 = sbr.rel (%p256) target = $region36
        $region35: #{net_forward.1} parent=11 // pred_region
          _
        $region36: #{net_forward.1} parent=11 // pred_fallthru
          _
      $region12: #{net_forward.1} parent=5 // pred_fallthru
        _
      %p259 = scmp.lt.s32.totalorder %s18, 2
      // Predicated region
      $region37: #{net_forward.1} parent=5 // pred_check
        %p260 = pneg %p259
      $region38: #{net_forward.1} parent=5 // pred_check_branch
        %262 = sbr.rel (%p260) target = $region40
      $region39: #{net_forward.1} parent=5 // pred_region
        // Predicated region
        $region41: #{net_forward.1} parent=39 // pred_check
          %p263 = pneg %p38
        $region42: #{net_forward.1} parent=39 // pred_check_branch
          %265 = sbr.rel (%p263) target = $region44
        $region43: #{net_forward.1} parent=39 // pred_region
          %s266 = sand.u32 %s28, 1
          %s267 = scalar_lea.sflag [#allocation3], %s266
          %s268 = sand.u32 %s28, 1
          %s269 = smul.addr %s268, 896
          %s270 = scalar_lea.vmem [#allocation2], %s269
          %s271 = smul.u32 16, %s18
          %s272 = ssub.s32 25, %s271
          %p273 = scmp.lt.s32.totalorder %s272, 16
          %s274 = scalar_select %p273, %s272, 16
          %s275 = smul.u32 128, %s274
          %s276 = smul.u32 %s275, 7
          %s278 = ssub.s32 14336, %s276
          %279 = vsyncadd %s267, %s278
          %p280 = scmp.ne.s32.totalorder 0, %s276
          %s281 = smul.addr %s271, 7
          %s282 = smul.addr %s281, 128
          %s283 = scalar_lea.hbm %s0, %s282
          %s284 = smul.u32 56, %s274
          %s285 = sshll.u32 %s270, 4
          %s286 = int_to_ptr.vmem [resolvable:$true] %s285
          %s287 = sshll.u32 %s284, 4
          %291 = dma.hbm_to_vmem [thread:$0]  (%p280), %s283, %s287, %s286, %s267, 896, 896, 56
        $region44: #{net_forward.1} parent=39 // pred_fallthru
          _
      $region40: #{net_forward.1} parent=5 // pred_fallthru
        _
      %p292 = scmp.le.s32.totalorder 1, %s18
      %p293 = scmp.lt.s32.totalorder %s18, 3
      %p294 = pnand %p292, %p293
      %p295 = pneg %p294
      // Predicated region
      $region45: #{net_forward.1} parent=5 // pred_check
        _
      $region46: #{net_forward.1} parent=5 // pred_check_branch
        %297 = sbr.rel (%p294) target = $region48
      $region47: #{net_forward.1} parent=5 // pred_region
        %s298 = ssub.s32 %s18, 1
        %s299 = sand.u32 %s31, 1
        %s300 = scalar_lea.sflag [#allocation3], %s299
        %s301 = sand.u32 %s31, 1
        %s302 = smul.addr %s301, 896
        %s303 = scalar_lea.vmem [#allocation2], %s302
        // Predicated region
        $region49: #{net_forward.1} parent=47 // pred_check
          %p304 = pneg %p44
        $region50: #{net_forward.1} parent=47 // pred_check_branch
          %306 = sbr.rel (%p304) target = $region52
        $region51: #{net_forward.1} parent=47 // pred_region
          %307 = dma.done %s300, 14336
        $region52: #{net_forward.1} parent=47 // pred_fallthru
          _
        // Predicated region
        $region53: #{net_forward.1} parent=47 // pred_check
          %p308 = pneg %p65
        $region54: #{net_forward.1} parent=47 // pred_check_branch
          %310 = sbr.rel (%p308) target = $region56
        $region55: #{net_forward.1} parent=47 // pred_region
          %311 = dma.done [#allocation5], 25088
        $region56: #{net_forward.1} parent=47 // pred_fallthru
          _
        // Predicated region
        $region57: #{net_forward.1} parent=47 // pred_check
          %p312 = pneg %p107
        $region58: #{net_forward.1} parent=47 // pred_check_branch
          %314 = sbr.rel (%p312) target = $region60
        $region59: #{net_forward.1} parent=47 // pred_region
          %315 = dma.done [#allocation5], 8192
        $region60: #{net_forward.1} parent=47 // pred_fallthru
          _
        // Predicated region
        $region61: #{net_forward.1} parent=47 // pred_check
          %p316 = pneg %p149
        $region62: #{net_forward.1} parent=47 // pred_check_branch
          %318 = sbr.rel (%p316) target = $region64
        $region63: #{net_forward.1} parent=47 // pred_region
          %319 = dma.done [#allocation8], 2048
        $region64: #{net_forward.1} parent=47 // pred_fallthru
          _
        %s320 = sand.u32 %s31, 1
        %s321 = scalar_lea.sflag [#allocation3], %s320
        %s322 = sand.u32 %s31, 1
        %s323 = smul.addr %s322, 896
        %s324 = scalar_lea.vmem [#allocation2], %s323
        %p325 = pneg %p44
        %p326 = pneg %p41
        %p327 = pneg %p65
        %p328 = pneg %p62
        %p329 = pneg %p86
        %p330 = pneg %p83
        %p331 = pneg %p107
        %p332 = pneg %p104
        %p333 = pneg %p128
        %p334 = pneg %p125
        %p335 = pneg %p149
        %p336 = pneg %p146
        %p337 = pneg %p170
        %p338 = pneg %p167
        %p339 = pneg %p196
        %p340 = pneg %p193
        %s341 = sand.u32 %s183, 1
        %s342 = sand.u32 %s183, 1
        %s343 = smul.addr %s342, 64
        %s344 = scalar_lea.vmem [#allocation9], %s343
        %s345 = smul.u32 16, %s23
        %s346 = ssub.s32 25, %s345
        %p347 = scmp.lt.s32.totalorder %s346, 16
        %s348 = scalar_select %p347, %s346, 16
        %s349 = smul.u32 128, %s348
        %s350 = smul.u32 %s349, 7
        %s351 = smul.u32 16, %s23
        %s352 = ssub.s32 25, %s351
        %p353 = scmp.lt.s32.totalorder %s352, 16
        %s354 = scalar_select %p353, %s352, 16
        %s355 = smul.u32 64, %s354
        %v357 = vld [vmem:[%s303] sm:$0xff]
        %v358 = vld [vmem:[%s303 + $0x8] sm:$0xff]
        %v359 = vld [vmem:[%s303 + $0x10] sm:$0xff]
        %v360 = vld [vmem:[%s303 + $0x18] sm:$0xff]
        %v361 = vld [vmem:[%s303 + $0x20] sm:$0xff]
        %v362 = vld [vmem:[%s303 + $0x28] sm:$0xff]
        %v363 = vld [vmem:[%s303 + $0x30] sm:$0xff]
        %v364 = vld [vmem:[%s303 + $0x38] sm:$0xff]
        %v365 = vld [vmem:[%s303 + $0x40] sm:$0xff]
        %v366 = vld [vmem:[%s303 + $0x48] sm:$0xff]
        %v367 = vld [vmem:[%s303 + $0x50] sm:$0xff]
        %v368 = vld [vmem:[%s303 + $0x58] sm:$0xff]
        %v369 = vld [vmem:[%s303 + $0x60] sm:$0xff]
        %v370 = vld [vmem:[%s303 + $0x68] sm:$0xff]
        %v371 = vld [vmem:[%s303 + $0x70] sm:$0xff]
        %v372 = vld [vmem:[%s303 + $0x78] sm:$0xff]
        %v373 = vld [vmem:[%s303 + $0x80] sm:$0xff]
        %v374 = vld [vmem:[%s303 + $0x88] sm:$0xff]
        %v375 = vld [vmem:[%s303 + $0x90] sm:$0xff]
        %v376 = vld [vmem:[%s303 + $0x98] sm:$0xff]
        %v377 = vld [vmem:[%s303 + $0xa0] sm:$0xff]
        %v378 = vld [vmem:[%s303 + $0xa8] sm:$0xff]
        %v379 = vld [vmem:[%s303 + $0xb0] sm:$0xff]
        %v380 = vld [vmem:[%s303 + $0xb8] sm:$0xff]
        %v381 = vld [vmem:[%s303 + $0xc0] sm:$0xff]
        %v382 = vld [vmem:[%s303 + $0xc8] sm:$0xff]
        %v383 = vld [vmem:[%s303 + $0xd0] sm:$0xff]
        %v384 = vld [vmem:[%s303 + $0xd8] sm:$0xff]
        %v385 = vld [vmem:[%s303 + $0xe0] sm:$0xff]
        %v386 = vld [vmem:[%s303 + $0xe8] sm:$0xff]
        %v387 = vld [vmem:[%s303 + $0xf0] sm:$0xff]
        %v388 = vld [vmem:[%s303 + $0xf8] sm:$0xff]
        %v389 = vld [vmem:[%s303 + $0x100] sm:$0xff]
        %v390 = vld [vmem:[%s303 + $0x108] sm:$0xff]
        %v391 = vld [vmem:[%s303 + $0x110] sm:$0xff]
        %v392 = vld [vmem:[%s303 + $0x118] sm:$0xff]
        %v393 = vld [vmem:[%s303 + $0x120] sm:$0xff]
        %v394 = vld [vmem:[%s303 + $0x128] sm:$0xff]
        %v395 = vld [vmem:[%s303 + $0x130] sm:$0xff]
        %v396 = vld [vmem:[%s303 + $0x138] sm:$0xff]
        %v397 = vld [vmem:[%s303 + $0x140] sm:$0xff]
        %v398 = vld [vmem:[%s303 + $0x148] sm:$0xff]
        %v399 = vld [vmem:[%s303 + $0x150] sm:$0xff]
        %v400 = vld [vmem:[%s303 + $0x158] sm:$0xff]
        %v401 = vld [vmem:[%s303 + $0x160] sm:$0xff]
        %v402 = vld [vmem:[%s303 + $0x168] sm:$0xff]
        %v403 = vld [vmem:[%s303 + $0x170] sm:$0xff]
        %v404 = vld [vmem:[%s303 + $0x178] sm:$0xff]
        %v405 = vld [vmem:[%s303 + $0x180] sm:$0xff]
        %v406 = vld [vmem:[%s303 + $0x188] sm:$0xff]
        %v407 = vld [vmem:[%s303 + $0x190] sm:$0xff]
        %v408 = vld [vmem:[%s303 + $0x198] sm:$0xff]
        %v409 = vld [vmem:[%s303 + $0x1a0] sm:$0xff]
        %v410 = vld [vmem:[%s303 + $0x1a8] sm:$0xff]
        %v411 = vld [vmem:[%s303 + $0x1b0] sm:$0xff]
        %v412 = vld [vmem:[%s303 + $0x1b8] sm:$0xff]
        %v413 = vld [vmem:[%s303 + $0x1c0] sm:$0xff]
        %v414 = vld [vmem:[%s303 + $0x1c8] sm:$0xff]
        %v415 = vld [vmem:[%s303 + $0x1d0] sm:$0xff]
        %v416 = vld [vmem:[%s303 + $0x1d8] sm:$0xff]
        %v417 = vld [vmem:[%s303 + $0x1e0] sm:$0xff]
        %v418 = vld [vmem:[%s303 + $0x1e8] sm:$0xff]
        %v419 = vld [vmem:[%s303 + $0x1f0] sm:$0xff]
        %v420 = vld [vmem:[%s303 + $0x1f8] sm:$0xff]
        %v421 = vld [vmem:[%s303 + $0x200] sm:$0xff]
        %v422 = vld [vmem:[%s303 + $0x208] sm:$0xff]
        %v423 = vld [vmem:[%s303 + $0x210] sm:$0xff]
        %v424 = vld [vmem:[%s303 + $0x218] sm:$0xff]
        %v425 = vld [vmem:[%s303 + $0x220] sm:$0xff]
        %v426 = vld [vmem:[%s303 + $0x228] sm:$0xff]
        %v427 = vld [vmem:[%s303 + $0x230] sm:$0xff]
        %v428 = vld [vmem:[%s303 + $0x238] sm:$0xff]
        %v429 = vld [vmem:[%s303 + $0x240] sm:$0xff]
        %v430 = vld [vmem:[%s303 + $0x248] sm:$0xff]
        %v431 = vld [vmem:[%s303 + $0x250] sm:$0xff]
        %v432 = vld [vmem:[%s303 + $0x258] sm:$0xff]
        %v433 = vld [vmem:[%s303 + $0x260] sm:$0xff]
        %v434 = vld [vmem:[%s303 + $0x268] sm:$0xff]
        %v435 = vld [vmem:[%s303 + $0x270] sm:$0xff]
        %v436 = vld [vmem:[%s303 + $0x278] sm:$0xff]
        %v437 = vld [vmem:[%s303 + $0x280] sm:$0xff]
        %v438 = vld [vmem:[%s303 + $0x288] sm:$0xff]
        %v439 = vld [vmem:[%s303 + $0x290] sm:$0xff]
        %v440 = vld [vmem:[%s303 + $0x298] sm:$0xff]
        %v441 = vld [vmem:[%s303 + $0x2a0] sm:$0xff]
        %v442 = vld [vmem:[%s303 + $0x2a8] sm:$0xff]
        %v443 = vld [vmem:[%s303 + $0x2b0] sm:$0xff]
        %v444 = vld [vmem:[%s303 + $0x2b8] sm:$0xff]
        %v445 = vld [vmem:[%s303 + $0x2c0] sm:$0xff]
        %v446 = vld [vmem:[%s303 + $0x2c8] sm:$0xff]
        %v447 = vld [vmem:[%s303 + $0x2d0] sm:$0xff]
        %v448 = vld [vmem:[%s303 + $0x2d8] sm:$0xff]
        %v449 = vld [vmem:[%s303 + $0x2e0] sm:$0xff]
        %v450 = vld [vmem:[%s303 + $0x2e8] sm:$0xff]
        %v451 = vld [vmem:[%s303 + $0x2f0] sm:$0xff]
        %v452 = vld [vmem:[%s303 + $0x2f8] sm:$0xff]
        %v453 = vld [vmem:[%s303 + $0x300] sm:$0xff]
        %v454 = vld [vmem:[%s303 + $0x308] sm:$0xff]
        %v455 = vld [vmem:[%s303 + $0x310] sm:$0xff]
        %v456 = vld [vmem:[%s303 + $0x318] sm:$0xff]
        %v457 = vld [vmem:[%s303 + $0x320] sm:$0xff]
        %v458 = vld [vmem:[%s303 + $0x328] sm:$0xff]
        %v459 = vld [vmem:[%s303 + $0x330] sm:$0xff]
        %v460 = vld [vmem:[%s303 + $0x338] sm:$0xff]
        %v461 = vld [vmem:[%s303 + $0x340] sm:$0xff]
        %v462 = vld [vmem:[%s303 + $0x348] sm:$0xff]
        %v463 = vld [vmem:[%s303 + $0x350] sm:$0xff]
        %v464 = vld [vmem:[%s303 + $0x358] sm:$0xff]
        %v465 = vld [vmem:[%s303 + $0x360] sm:$0xff]
        %v466 = vld [vmem:[%s303 + $0x368] sm:$0xff]
        %v467 = vld [vmem:[%s303 + $0x370] sm:$0xff]
        %v468 = vld [vmem:[%s303 + $0x378] sm:$0xff]
        %v469 = vpack.c.bf16 %v364, %v357
        %v470 = vpack.c.bf16 %v365, %v358
        %v471 = vpack.c.bf16 %v366, %v359
        %v472 = vpack.c.bf16 %v367, %v360
        %v473 = vpack.c.bf16 %v368, %v361
        %v474 = vpack.c.bf16 %v369, %v362
        %v475 = vpack.c.bf16 %v370, %v363
        %v476 = vpack.c.bf16 %v378, %v371
        %v477 = vpack.c.bf16 %v379, %v372
        %v478 = vpack.c.bf16 %v380, %v373
        %v479 = vpack.c.bf16 %v381, %v374
        %v480 = vpack.c.bf16 %v382, %v375
        %v481 = vpack.c.bf16 %v383, %v376
        %v482 = vpack.c.bf16 %v384, %v377
        %v483 = vpack.c.bf16 %v392, %v385
        %v484 = vpack.c.bf16 %v393, %v386
        %v485 = vpack.c.bf16 %v394, %v387
        %v486 = vpack.c.bf16 %v395, %v388
        %v487 = vpack.c.bf16 %v396, %v389
        %v488 = vpack.c.bf16 %v397, %v390
        %v489 = vpack.c.bf16 %v398, %v391
        %v490 = vpack.c.bf16 %v406, %v399
        %v491 = vpack.c.bf16 %v407, %v400
        %v492 = vpack.c.bf16 %v408, %v401
        %v493 = vpack.c.bf16 %v409, %v402
        %v494 = vpack.c.bf16 %v410, %v403
        %v495 = vpack.c.bf16 %v411, %v404
        %v496 = vpack.c.bf16 %v412, %v405
        %v497 = vpack.c.bf16 %v420, %v413
        %v498 = vpack.c.bf16 %v421, %v414
        %v499 = vpack.c.bf16 %v422, %v415
        %v500 = vpack.c.bf16 %v423, %v416
        %v501 = vpack.c.bf16 %v424, %v417
        %v502 = vpack.c.bf16 %v425, %v418
        %v503 = vpack.c.bf16 %v426, %v419
        %v504 = vpack.c.bf16 %v434, %v427
        %v505 = vpack.c.bf16 %v435, %v428
        %v506 = vpack.c.bf16 %v436, %v429
        %v507 = vpack.c.bf16 %v437, %v430
        %v508 = vpack.c.bf16 %v438, %v431
        %v509 = vpack.c.bf16 %v439, %v432
        %v510 = vpack.c.bf16 %v440, %v433
        %v511 = vpack.c.bf16 %v448, %v441
        %v512 = vpack.c.bf16 %v449, %v442
        %v513 = vpack.c.bf16 %v450, %v443
        %v514 = vpack.c.bf16 %v451, %v444
        %v515 = vpack.c.bf16 %v452, %v445
        %v516 = vpack.c.bf16 %v453, %v446
        %v517 = vpack.c.bf16 %v454, %v447
        %v518 = vpack.c.bf16 %v462, %v455
        %v519 = vpack.c.bf16 %v463, %v456
        %v520 = vpack.c.bf16 %v464, %v457
        %v521 = vpack.c.bf16 %v465, %v458
        %v522 = vpack.c.bf16 %v466, %v459
        %v523 = vpack.c.bf16 %v467, %v460
        %v524 = vpack.c.bf16 %v468, %v461
        %v525 = vld [vmem:[#allocation4] sm:$0xff]
        %v526 = vld [vmem:[#allocation4 + $0x8] sm:$0xff]
        %v527 = vld [vmem:[#allocation4 + $0x10] sm:$0xff]
        %v528 = vld [vmem:[#allocation4 + $0x18] sm:$0xff]
        %v529 = vld [vmem:[#allocation4 + $0x20] sm:$0xff]
        %v530 = vld [vmem:[#allocation4 + $0x28] sm:$0xff]
        %v531 = vld [vmem:[#allocation4 + $0x30] sm:$0xff]
        %v532 = vld [vmem:[#allocation4 + $0x38] sm:$0xff]
        %v533 = vld [vmem:[#allocation4 + $0x40] sm:$0xff]
        %v534 = vld [vmem:[#allocation4 + $0x48] sm:$0xff]
        %v535 = vld [vmem:[#allocation4 + $0x50] sm:$0xff]
        %v536 = vld [vmem:[#allocation4 + $0x58] sm:$0xff]
        %v537 = vld [vmem:[#allocation4 + $0x60] sm:$0xff]
        %v538 = vld [vmem:[#allocation4 + $0x68] sm:$0xff]
        %v539 = vld [vmem:[#allocation4 + $0x70] sm:$0xff]
        %v540 = vld [vmem:[#allocation4 + $0x78] sm:$0xff]
        %v541 = vld [vmem:[#allocation4 + $0x80] sm:$0xff]
        %v542 = vld [vmem:[#allocation4 + $0x88] sm:$0xff]
        %v543 = vld [vmem:[#allocation4 + $0x90] sm:$0xff]
        %v544 = vld [vmem:[#allocation4 + $0x98] sm:$0xff]
        %v545 = vld [vmem:[#allocation4 + $0xa0] sm:$0xff]
        %v546 = vld [vmem:[#allocation4 + $0xa8] sm:$0xff]
        %v547 = vld [vmem:[#allocation4 + $0xb0] sm:$0xff]
        %v548 = vld [vmem:[#allocation4 + $0xb8] sm:$0xff]
        %v549 = vld [vmem:[#allocation4 + $0xc0] sm:$0xff]
        %v550 = vld [vmem:[#allocation4 + $0xc8] sm:$0xff]
        %v551 = vld [vmem:[#allocation4 + $0xd0] sm:$0xff]
        %v552 = vld [vmem:[#allocation4 + $0xd8] sm:$0xff]
        %v553 = vld [vmem:[#allocation4 + $0xe0] sm:$0xff]
        %v554 = vld [vmem:[#allocation4 + $0xe8] sm:$0xff]
        %v555 = vld [vmem:[#allocation4 + $0xf0] sm:$0xff]
        %v556 = vld [vmem:[#allocation4 + $0xf8] sm:$0xff]
        %v557 = vld [vmem:[#allocation4 + $0x100] sm:$0xff]
        %v558 = vld [vmem:[#allocation4 + $0x108] sm:$0xff]
        %v559 = vld [vmem:[#allocation4 + $0x110] sm:$0xff]
        %v560 = vld [vmem:[#allocation4 + $0x118] sm:$0xff]
        %v561 = vld [vmem:[#allocation4 + $0x120] sm:$0xff]
        %v562 = vld [vmem:[#allocation4 + $0x128] sm:$0xff]
        %v563 = vld [vmem:[#allocation4 + $0x130] sm:$0xff]
        %v564 = vld [vmem:[#allocation4 + $0x138] sm:$0xff]
        %v565 = vld [vmem:[#allocation4 + $0x140] sm:$0xff]
        %v566 = vld [vmem:[#allocation4 + $0x148] sm:$0xff]
        %v567 = vld [vmem:[#allocation4 + $0x150] sm:$0xff]
        %v568 = vld [vmem:[#allocation4 + $0x158] sm:$0xff]
        %v569 = vld [vmem:[#allocation4 + $0x160] sm:$0xff]
        %v570 = vld [vmem:[#allocation4 + $0x168] sm:$0xff]
        %v571 = vld [vmem:[#allocation4 + $0x170] sm:$0xff]
        %v572 = vld [vmem:[#allocation4 + $0x178] sm:$0xff]
        %v573 = vld [vmem:[#allocation4 + $0x180] sm:$0xff]
        %v574 = vld [vmem:[#allocation4 + $0x188] sm:$0xff]
        %v575 = vld [vmem:[#allocation4 + $0x190] sm:$0xff]
        %v576 = vld [vmem:[#allocation4 + $0x198] sm:$0xff]
        %v577 = vld [vmem:[#allocation4 + $0x1a0] sm:$0xff]
        %v578 = vld [vmem:[#allocation4 + $0x1a8] sm:$0xff]
        %v579 = vld [vmem:[#allocation4 + $0x1b0] sm:$0xff]
        %v580 = vld [vmem:[#allocation4 + $0x1b8] sm:$0xff]
        %v581 = vld [vmem:[#allocation4 + $0x1c0] sm:$0xff]
        %v582 = vld [vmem:[#allocation4 + $0x1c8] sm:$0xff]
        %v583 = vld [vmem:[#allocation4 + $0x1d0] sm:$0xff]
        %v584 = vld [vmem:[#allocation4 + $0x1d8] sm:$0xff]
        %v585 = vld [vmem:[#allocation4 + $0x1e0] sm:$0xff]
        %v586 = vld [vmem:[#allocation4 + $0x1e8] sm:$0xff]
        %v587 = vld [vmem:[#allocation4 + $0x1f0] sm:$0xff]
        %v588 = vld [vmem:[#allocation4 + $0x1f8] sm:$0xff]
        %v589 = vld [vmem:[#allocation4 + $0x200] sm:$0xff]
        %v590 = vld [vmem:[#allocation4 + $0x208] sm:$0xff]
        %v591 = vld [vmem:[#allocation4 + $0x210] sm:$0xff]
        %v592 = vld [vmem:[#allocation4 + $0x218] sm:$0xff]
        %v593 = vld [vmem:[#allocation4 + $0x220] sm:$0xff]
        %v594 = vld [vmem:[#allocation4 + $0x228] sm:$0xff]
        %v595 = vld [vmem:[#allocation4 + $0x230] sm:$0xff]
        %v596 = vld [vmem:[#allocation4 + $0x238] sm:$0xff]
        %v597 = vld [vmem:[#allocation4 + $0x240] sm:$0xff]
        %v598 = vld [vmem:[#allocation4 + $0x248] sm:$0xff]
        %v599 = vld [vmem:[#allocation4 + $0x250] sm:$0xff]
        %v600 = vld [vmem:[#allocation4 + $0x258] sm:$0xff]
        %v601 = vld [vmem:[#allocation4 + $0x260] sm:$0xff]
        %v602 = vld [vmem:[#allocation4 + $0x268] sm:$0xff]
        %v603 = vld [vmem:[#allocation4 + $0x270] sm:$0xff]
        %v604 = vld [vmem:[#allocation4 + $0x278] sm:$0xff]
        %v605 = vld [vmem:[#allocation4 + $0x280] sm:$0xff]
        %v606 = vld [vmem:[#allocation4 + $0x288] sm:$0xff]
        %v607 = vld [vmem:[#allocation4 + $0x290] sm:$0xff]
        %v608 = vld [vmem:[#allocation4 + $0x298] sm:$0xff]
        %v609 = vld [vmem:[#allocation4 + $0x2a0] sm:$0xff]
        %v610 = vld [vmem:[#allocation4 + $0x2a8] sm:$0xff]
        %v611 = vld [vmem:[#allocation4 + $0x2b0] sm:$0xff]
        %v612 = vld [vmem:[#allocation4 + $0x2b8] sm:$0xff]
        %v613 = vld [vmem:[#allocation4 + $0x2c0] sm:$0xff]
        %v614 = vld [vmem:[#allocation4 + $0x2c8] sm:$0xff]
        %v615 = vld [vmem:[#allocation4 + $0x2d0] sm:$0xff]
        %v616 = vld [vmem:[#allocation4 + $0x2d8] sm:$0xff]
        %v617 = vld [vmem:[#allocation4 + $0x2e0] sm:$0xff]
        %v618 = vld [vmem:[#allocation4 + $0x2e8] sm:$0xff]
        %v619 = vld [vmem:[#allocation4 + $0x2f0] sm:$0xff]
        %v620 = vld [vmem:[#allocation4 + $0x2f8] sm:$0xff]
        %v621 = vld [vmem:[#allocation4 + $0x300] sm:$0xff]
        %v622 = vld [vmem:[#allocation4 + $0x308] sm:$0xff]
        %v623 = vld [vmem:[#allocation4 + $0x310] sm:$0xff]
        %v624 = vld [vmem:[#allocation4 + $0x318] sm:$0xff]
        %v625 = vld [vmem:[#allocation4 + $0x320] sm:$0xff]
        %v626 = vld [vmem:[#allocation4 + $0x328] sm:$0xff]
        %v627 = vld [vmem:[#allocation4 + $0x330] sm:$0xff]
        %v628 = vld [vmem:[#allocation4 + $0x338] sm:$0xff]
        %v629 = vld [vmem:[#allocation4 + $0x340] sm:$0xff]
        %v630 = vld [vmem:[#allocation4 + $0x348] sm:$0xff]
        %v631 = vld [vmem:[#allocation4 + $0x350] sm:$0xff]
        %v632 = vld [vmem:[#allocation4 + $0x358] sm:$0xff]
        %v633 = vld [vmem:[#allocation4 + $0x360] sm:$0xff]
        %v634 = vld [vmem:[#allocation4 + $0x368] sm:$0xff]
        %v635 = vld [vmem:[#allocation4 + $0x370] sm:$0xff]
        %v636 = vld [vmem:[#allocation4 + $0x378] sm:$0xff]
        %v637 = vld [vmem:[#allocation4 + $0x380] sm:$0xff]
        %v638 = vld [vmem:[#allocation4 + $0x388] sm:$0xff]
        %v639 = vld [vmem:[#allocation4 + $0x390] sm:$0xff]
        %v640 = vld [vmem:[#allocation4 + $0x398] sm:$0xff]
        %v641 = vld [vmem:[#allocation4 + $0x3a0] sm:$0xff]
        %v642 = vld [vmem:[#allocation4 + $0x3a8] sm:$0xff]
        %v643 = vld [vmem:[#allocation4 + $0x3b0] sm:$0xff]
        %v644 = vld [vmem:[#allocation4 + $0x3b8] sm:$0xff]
        %v645 = vld [vmem:[#allocation4 + $0x3c0] sm:$0xff]
        %v646 = vld [vmem:[#allocation4 + $0x3c8] sm:$0xff]
        %v647 = vld [vmem:[#allocation4 + $0x3d0] sm:$0xff]
        %v648 = vld [vmem:[#allocation4 + $0x3d8] sm:$0xff]
        %v649 = vld [vmem:[#allocation4 + $0x3e0] sm:$0xff]
        %v650 = vld [vmem:[#allocation4 + $0x3e8] sm:$0xff]
        %v651 = vld [vmem:[#allocation4 + $0x3f0] sm:$0xff]
        %v652 = vld [vmem:[#allocation4 + $0x3f8] sm:$0xff]
        %v653 = vld [vmem:[#allocation4 + $0x400] sm:$0xff]
        %v654 = vld [vmem:[#allocation4 + $0x408] sm:$0xff]
        %v655 = vld [vmem:[#allocation4 + $0x410] sm:$0xff]
        %v656 = vld [vmem:[#allocation4 + $0x418] sm:$0xff]
        %v657 = vld [vmem:[#allocation4 + $0x420] sm:$0xff]
        %v658 = vld [vmem:[#allocation4 + $0x428] sm:$0xff]
        %v659 = vld [vmem:[#allocation4 + $0x430] sm:$0xff]
        %v660 = vld [vmem:[#allocation4 + $0x438] sm:$0xff]
        %v661 = vld [vmem:[#allocation4 + $0x440] sm:$0xff]
        %v662 = vld [vmem:[#allocation4 + $0x448] sm:$0xff]
        %v663 = vld [vmem:[#allocation4 + $0x450] sm:$0xff]
        %v664 = vld [vmem:[#allocation4 + $0x458] sm:$0xff]
        %v665 = vld [vmem:[#allocation4 + $0x460] sm:$0xff]
        %v666 = vld [vmem:[#allocation4 + $0x468] sm:$0xff]
        %v667 = vld [vmem:[#allocation4 + $0x470] sm:$0xff]
        %v668 = vld [vmem:[#allocation4 + $0x478] sm:$0xff]
        %v669 = vld [vmem:[#allocation4 + $0x480] sm:$0xff]
        %v670 = vld [vmem:[#allocation4 + $0x488] sm:$0xff]
        %v671 = vld [vmem:[#allocation4 + $0x490] sm:$0xff]
        %v672 = vld [vmem:[#allocation4 + $0x498] sm:$0xff]
        %v673 = vld [vmem:[#allocation4 + $0x4a0] sm:$0xff]
        %v674 = vld [vmem:[#allocation4 + $0x4a8] sm:$0xff]
        %v675 = vld [vmem:[#allocation4 + $0x4b0] sm:$0xff]
        %v676 = vld [vmem:[#allocation4 + $0x4b8] sm:$0xff]
        %v677 = vld [vmem:[#allocation4 + $0x4c0] sm:$0xff]
        %v678 = vld [vmem:[#allocation4 + $0x4c8] sm:$0xff]
        %v679 = vld [vmem:[#allocation4 + $0x4d0] sm:$0xff]
        %v680 = vld [vmem:[#allocation4 + $0x4d8] sm:$0xff]
        %v681 = vld [vmem:[#allocation4 + $0x4e0] sm:$0xff]
        %v682 = vld [vmem:[#allocation4 + $0x4e8] sm:$0xff]
        %v683 = vld [vmem:[#allocation4 + $0x4f0] sm:$0xff]
        %v684 = vld [vmem:[#allocation4 + $0x4f8] sm:$0xff]
        %v685 = vld [vmem:[#allocation4 + $0x500] sm:$0xff]
        %v686 = vld [vmem:[#allocation4 + $0x508] sm:$0xff]
        %v687 = vld [vmem:[#allocation4 + $0x510] sm:$0xff]
        %v688 = vld [vmem:[#allocation4 + $0x518] sm:$0xff]
        %v689 = vld [vmem:[#allocation4 + $0x520] sm:$0xff]
        %v690 = vld [vmem:[#allocation4 + $0x528] sm:$0xff]
        %v691 = vld [vmem:[#allocation4 + $0x530] sm:$0xff]
        %v692 = vld [vmem:[#allocation4 + $0x538] sm:$0xff]
        %v693 = vld [vmem:[#allocation4 + $0x540] sm:$0xff]
        %v694 = vld [vmem:[#allocation4 + $0x548] sm:$0xff]
        %v695 = vld [vmem:[#allocation4 + $0x550] sm:$0xff]
        %v696 = vld [vmem:[#allocation4 + $0x558] sm:$0xff]
        %v697 = vld [vmem:[#allocation4 + $0x560] sm:$0xff]
        %v698 = vld [vmem:[#allocation4 + $0x568] sm:$0xff]
        %v699 = vld [vmem:[#allocation4 + $0x570] sm:$0xff]
        %v700 = vld [vmem:[#allocation4 + $0x578] sm:$0xff]
        %v701 = vld [vmem:[#allocation4 + $0x580] sm:$0xff]
        %v702 = vld [vmem:[#allocation4 + $0x588] sm:$0xff]
        %v703 = vld [vmem:[#allocation4 + $0x590] sm:$0xff]
        %v704 = vld [vmem:[#allocation4 + $0x598] sm:$0xff]
        %v705 = vld [vmem:[#allocation4 + $0x5a0] sm:$0xff]
        %v706 = vld [vmem:[#allocation4 + $0x5a8] sm:$0xff]
        %v707 = vld [vmem:[#allocation4 + $0x5b0] sm:$0xff]
        %v708 = vld [vmem:[#allocation4 + $0x5b8] sm:$0xff]
        %v709 = vld [vmem:[#allocation4 + $0x5c0] sm:$0xff]
        %v710 = vld [vmem:[#allocation4 + $0x5c8] sm:$0xff]
        %v711 = vld [vmem:[#allocation4 + $0x5d0] sm:$0xff]
        %v712 = vld [vmem:[#allocation4 + $0x5d8] sm:$0xff]
        %v713 = vld [vmem:[#allocation4 + $0x5e0] sm:$0xff]
        %v714 = vld [vmem:[#allocation4 + $0x5e8] sm:$0xff]
        %v715 = vld [vmem:[#allocation4 + $0x5f0] sm:$0xff]
        %v716 = vld [vmem:[#allocation4 + $0x5f8] sm:$0xff]
        %v717 = vld [vmem:[#allocation4 + $0x600] sm:$0xff]
        %v718 = vld [vmem:[#allocation4 + $0x608] sm:$0xff]
        %v719 = vld [vmem:[#allocation4 + $0x610] sm:$0xff]
        %v720 = vld [vmem:[#allocation4 + $0x618] sm:$0xff]
        %v721 = vld [vmem:[%s2] sm:$0xf]
        %v723 = vlaneseq
        %v724 = vshrl.u32 %v723, 7
        %v725 = vsub.s32 0, %v724
        %v726 = vrot.slane %v721, %v725
        %v727 = vlaneseq
        %v728 = vshrl.u32 %v727, 7
        %v729 = vsub.s32 1, %v728
        %v730 = vrot.slane %v721, %v729
        %v731 = vlaneseq
        %v732 = vshrl.u32 %v731, 7
        %v733 = vsub.s32 2, %v732
        %v734 = vrot.slane %v721, %v733
        %v735 = vlaneseq
        %v736 = vshrl.u32 %v735, 7
        %v737 = vsub.s32 3, %v736
        %v738 = vrot.slane %v721, %v737
        %v939 = vunpack.c.l.b16 %v525
        %v940 = vunpack.c.h.b16 %v525
        %v941 = vunpack.c.l.b16 %v526
        %v942 = vunpack.c.h.b16 %v526
        %v943 = vunpack.c.l.b16 %v527
        %v944 = vunpack.c.h.b16 %v527
        %v945 = vunpack.c.l.b16 %v528
        %v946 = vunpack.c.h.b16 %v528
        %v947 = vunpack.c.l.b16 %v529
        %v948 = vunpack.c.h.b16 %v529
        %v949 = vunpack.c.l.b16 %v530
        %v950 = vunpack.c.h.b16 %v530
        %v951 = vunpack.c.l.b16 %v531
        %v952 = vunpack.c.h.b16 %v531
        %v953 = vunpack.c.l.b16 %v532
        %v954 = vunpack.c.h.b16 %v532
        %v955 = vunpack.c.l.b16 %v533
        %v956 = vunpack.c.h.b16 %v533
        %v957 = vunpack.c.l.b16 %v534
        %v958 = vunpack.c.h.b16 %v534
        %v959 = vunpack.c.l.b16 %v535
        %v960 = vunpack.c.h.b16 %v535
        %v961 = vunpack.c.l.b16 %v536
        %v962 = vunpack.c.h.b16 %v536
        %v963 = vunpack.c.l.b16 %v537
        %v964 = vunpack.c.h.b16 %v537
        %v965 = vunpack.c.l.b16 %v538
        %v966 = vunpack.c.h.b16 %v538
        %v967 = vunpack.c.l.b16 %v539
        %v968 = vunpack.c.h.b16 %v539
        %v969 = vunpack.c.l.b16 %v540
        %v970 = vunpack.c.h.b16 %v540
        %v971 = vunpack.c.l.b16 %v541
        %v972 = vunpack.c.h.b16 %v541
        %v973 = vunpack.c.l.b16 %v542
        %v974 = vunpack.c.h.b16 %v542
        %v975 = vunpack.c.l.b16 %v543
        %v976 = vunpack.c.h.b16 %v543
        %v977 = vunpack.c.l.b16 %v544
        %v978 = vunpack.c.h.b16 %v544
        %v979 = vunpack.c.l.b16 %v545
        %v980 = vunpack.c.h.b16 %v545
        %v981 = vunpack.c.l.b16 %v546
        %v982 = vunpack.c.h.b16 %v546
        %v983 = vunpack.c.l.b16 %v547
        %v984 = vunpack.c.h.b16 %v547
        %v985 = vunpack.c.l.b16 %v548
        %v986 = vunpack.c.h.b16 %v548
        %v987 = vunpack.c.l.b16 %v549
        %v988 = vunpack.c.h.b16 %v549
        %v989 = vunpack.c.l.b16 %v550
        %v990 = vunpack.c.h.b16 %v550
        %v991 = vunpack.c.l.b16 %v551
        %v992 = vunpack.c.h.b16 %v551
        %v993 = vunpack.c.l.b16 %v552
        %v994 = vunpack.c.h.b16 %v552
        %v995 = vunpack.c.l.b16 %v553
        %v996 = vunpack.c.h.b16 %v553
        %v997 = vunpack.c.l.b16 %v554
        %v998 = vunpack.c.h.b16 %v554
        %v999 = vunpack.c.l.b16 %v555
        %v1000 = vunpack.c.h.b16 %v555
        %v1001 = vunpack.c.l.b16 %v556
        %v1002 = vunpack.c.h.b16 %v556
        %v1003 = vunpack.c.l.b16 %v557
        %v1004 = vunpack.c.h.b16 %v557
        %v1005 = vunpack.c.l.b16 %v558
        %v1006 = vunpack.c.h.b16 %v558
        %v1007 = vunpack.c.l.b16 %v559
        %v1008 = vunpack.c.h.b16 %v559
        %v1009 = vunpack.c.l.b16 %v560
        %v1010 = vunpack.c.h.b16 %v560
        %v1011 = vunpack.c.l.b16 %v561
        %v1012 = vunpack.c.h.b16 %v561
        %v1013 = vunpack.c.l.b16 %v562
        %v1014 = vunpack.c.h.b16 %v562
        %v1015 = vunpack.c.l.b16 %v563
        %v1016 = vunpack.c.h.b16 %v563
        %v1017 = vunpack.c.l.b16 %v564
        %v1018 = vunpack.c.h.b16 %v564
        %v1019 = vunpack.c.l.b16 %v565
        %v1020 = vunpack.c.h.b16 %v565
        %v1021 = vunpack.c.l.b16 %v566
        %v1022 = vunpack.c.h.b16 %v566
        %v1023 = vunpack.c.l.b16 %v567
        %v1024 = vunpack.c.h.b16 %v567
        %v1025 = vunpack.c.l.b16 %v568
        %v1026 = vunpack.c.h.b16 %v568
        %v1027 = vunpack.c.l.b16 %v569
        %v1028 = vunpack.c.h.b16 %v569
        %v1029 = vunpack.c.l.b16 %v570
        %v1030 = vunpack.c.h.b16 %v570
        %v1031 = vunpack.c.l.b16 %v571
        %v1032 = vunpack.c.h.b16 %v571
        %v1033 = vunpack.c.l.b16 %v572
        %v1034 = vunpack.c.h.b16 %v572
        %v1035 = vunpack.c.l.b16 %v573
        %v1036 = vunpack.c.h.b16 %v573
        %v1037 = vunpack.c.l.b16 %v574
        %v1038 = vunpack.c.h.b16 %v574
        %v1039 = vunpack.c.l.b16 %v575
        %v1040 = vunpack.c.h.b16 %v575
        %v1041 = vunpack.c.l.b16 %v576
        %v1042 = vunpack.c.h.b16 %v576
        %v1043 = vunpack.c.l.b16 %v577
        %v1044 = vunpack.c.h.b16 %v577
        %v1045 = vunpack.c.l.b16 %v578
        %v1046 = vunpack.c.h.b16 %v578
        %v1047 = vunpack.c.l.b16 %v579
        %v1048 = vunpack.c.h.b16 %v579
        %v1049 = vunpack.c.l.b16 %v580
        %v1050 = vunpack.c.h.b16 %v580
        %v1051 = vunpack.c.l.b16 %v581
        %v1052 = vunpack.c.h.b16 %v581
        %v1053 = vunpack.c.l.b16 %v582
        %v1054 = vunpack.c.h.b16 %v582
        %v1055 = vunpack.c.l.b16 %v583
        %v1056 = vunpack.c.h.b16 %v583
        %v1057 = vunpack.c.l.b16 %v584
        %v1058 = vunpack.c.h.b16 %v584
        %v1059 = vunpack.c.l.b16 %v585
        %v1060 = vunpack.c.h.b16 %v585
        %v1061 = vunpack.c.l.b16 %v586
        %v1062 = vunpack.c.h.b16 %v586
        %v1063 = vunpack.c.l.b16 %v587
        %v1064 = vunpack.c.h.b16 %v587
        %v1065 = vunpack.c.l.b16 %v588
        %v1066 = vunpack.c.h.b16 %v588
        %v1067 = vunpack.c.l.b16 %v589
        %v1068 = vunpack.c.h.b16 %v589
        %v1069 = vunpack.c.l.b16 %v590
        %v1070 = vunpack.c.h.b16 %v590
        %v1071 = vunpack.c.l.b16 %v591
        %v1072 = vunpack.c.h.b16 %v591
        %v1073 = vunpack.c.l.b16 %v592
        %v1074 = vunpack.c.h.b16 %v592
        %v1075 = vunpack.c.l.b16 %v593
        %v1076 = vunpack.c.h.b16 %v593
        %v1077 = vunpack.c.l.b16 %v594
        %v1078 = vunpack.c.h.b16 %v594
        %v1079 = vunpack.c.l.b16 %v595
        %v1080 = vunpack.c.h.b16 %v595
        %v1081 = vunpack.c.l.b16 %v596
        %v1082 = vunpack.c.h.b16 %v596
        %v1083 = vunpack.c.l.b16 %v597
        %v1084 = vunpack.c.h.b16 %v597
        %v1085 = vunpack.c.l.b16 %v598
        %v1086 = vunpack.c.h.b16 %v598
        %v1087 = vunpack.c.l.b16 %v599
        %v1088 = vunpack.c.h.b16 %v599
        %v1089 = vunpack.c.l.b16 %v600
        %v1090 = vunpack.c.h.b16 %v600
        %v1091 = vunpack.c.l.b16 %v601
        %v1092 = vunpack.c.h.b16 %v601
        %v1093 = vunpack.c.l.b16 %v602
        %v1094 = vunpack.c.h.b16 %v602
        %v1095 = vunpack.c.l.b16 %v603
        %v1096 = vunpack.c.h.b16 %v603
        %v1097 = vunpack.c.l.b16 %v604
        %v1098 = vunpack.c.h.b16 %v604
        %v1099 = vunpack.c.l.b16 %v605
        %v1100 = vunpack.c.h.b16 %v605
        %v1101 = vunpack.c.l.b16 %v606
        %v1102 = vunpack.c.h.b16 %v606
        %v1103 = vunpack.c.l.b16 %v607
        %v1104 = vunpack.c.h.b16 %v607
        %v1105 = vunpack.c.l.b16 %v608
        %v1106 = vunpack.c.h.b16 %v608
        %v1107 = vunpack.c.l.b16 %v609
        %v1108 = vunpack.c.h.b16 %v609
        %v1109 = vunpack.c.l.b16 %v610
        %v1110 = vunpack.c.h.b16 %v610
        %v1111 = vunpack.c.l.b16 %v611
        %v1112 = vunpack.c.h.b16 %v611
        %v1113 = vunpack.c.l.b16 %v612
        %v1114 = vunpack.c.h.b16 %v612
        %v1115 = vunpack.c.l.b16 %v613
        %v1116 = vunpack.c.h.b16 %v613
        %v1117 = vunpack.c.l.b16 %v614
        %v1118 = vunpack.c.h.b16 %v614
        %v1119 = vunpack.c.l.b16 %v615
        %v1120 = vunpack.c.h.b16 %v615
        %v1121 = vunpack.c.l.b16 %v616
        %v1122 = vunpack.c.h.b16 %v616
        %v1123 = vunpack.c.l.b16 %v617
        %v1124 = vunpack.c.h.b16 %v617
        %v1125 = vunpack.c.l.b16 %v618
        %v1126 = vunpack.c.h.b16 %v618
        %v1127 = vunpack.c.l.b16 %v619
        %v1128 = vunpack.c.h.b16 %v619
        %v1129 = vunpack.c.l.b16 %v620
        %v1130 = vunpack.c.h.b16 %v620
        %v1131 = vunpack.c.l.b16 %v621
        %v1132 = vunpack.c.h.b16 %v621
        %v1133 = vunpack.c.l.b16 %v622
        %v1134 = vunpack.c.h.b16 %v622
        %v1135 = vunpack.c.l.b16 %v623
        %v1136 = vunpack.c.h.b16 %v623
        %v1137 = vunpack.c.l.b16 %v624
        %v1138 = vunpack.c.h.b16 %v624
        %v1139 = vunpack.c.l.b16 %v625
        %v1140 = vunpack.c.h.b16 %v625
        %v1141 = vunpack.c.l.b16 %v626
        %v1142 = vunpack.c.h.b16 %v626
        %v1143 = vunpack.c.l.b16 %v627
        %v1144 = vunpack.c.h.b16 %v627
        %v1145 = vunpack.c.l.b16 %v628
        %v1146 = vunpack.c.h.b16 %v628
        %v1147 = vunpack.c.l.b16 %v629
        %v1148 = vunpack.c.h.b16 %v629
        %v1149 = vunpack.c.l.b16 %v630
        %v1150 = vunpack.c.h.b16 %v630
        %v1151 = vunpack.c.l.b16 %v631
        %v1152 = vunpack.c.h.b16 %v631
        %v1153 = vunpack.c.l.b16 %v632
        %v1154 = vunpack.c.h.b16 %v632
        %v1155 = vunpack.c.l.b16 %v633
        %v1156 = vunpack.c.h.b16 %v633
        %v1157 = vunpack.c.l.b16 %v634
        %v1158 = vunpack.c.h.b16 %v634
        %v1159 = vunpack.c.l.b16 %v635
        %v1160 = vunpack.c.h.b16 %v635
        %v1161 = vunpack.c.l.b16 %v636
        %v1162 = vunpack.c.h.b16 %v636
        %v1163 = vunpack.c.l.b16 %v637
        %v1164 = vunpack.c.h.b16 %v637
        %v1165 = vunpack.c.l.b16 %v638
        %v1166 = vunpack.c.h.b16 %v638
        %v1167 = vunpack.c.l.b16 %v639
        %v1168 = vunpack.c.h.b16 %v639
        %v1169 = vunpack.c.l.b16 %v640
        %v1170 = vunpack.c.h.b16 %v640
        %v1171 = vunpack.c.l.b16 %v641
        %v1172 = vunpack.c.h.b16 %v641
        %v1173 = vunpack.c.l.b16 %v642
        %v1174 = vunpack.c.h.b16 %v642
        %v1175 = vunpack.c.l.b16 %v643
        %v1176 = vunpack.c.h.b16 %v643
        %v1177 = vunpack.c.l.b16 %v644
        %v1178 = vunpack.c.h.b16 %v644
        %v1179 = vunpack.c.l.b16 %v645
        %v1180 = vunpack.c.h.b16 %v645
        %v1181 = vunpack.c.l.b16 %v646
        %v1182 = vunpack.c.h.b16 %v646
        %v1183 = vunpack.c.l.b16 %v647
        %v1184 = vunpack.c.h.b16 %v647
        %v1185 = vunpack.c.l.b16 %v648
        %v1186 = vunpack.c.h.b16 %v648
        %v1187 = vunpack.c.l.b16 %v649
        %v1188 = vunpack.c.h.b16 %v649
        %v1189 = vunpack.c.l.b16 %v650
        %v1190 = vunpack.c.h.b16 %v650
        %v1191 = vunpack.c.l.b16 %v651
        %v1192 = vunpack.c.h.b16 %v651
        %v1193 = vunpack.c.l.b16 %v652
        %v1194 = vunpack.c.h.b16 %v652
        %v1195 = vunpack.c.l.b16 %v653
        %v1196 = vunpack.c.h.b16 %v653
        %v1197 = vunpack.c.l.b16 %v654
        %v1198 = vunpack.c.h.b16 %v654
        %v1199 = vunpack.c.l.b16 %v655
        %v1200 = vunpack.c.h.b16 %v655
        %v1201 = vunpack.c.l.b16 %v656
        %v1202 = vunpack.c.h.b16 %v656
        %v1203 = vunpack.c.l.b16 %v657
        %v1204 = vunpack.c.h.b16 %v657
        %v1205 = vunpack.c.l.b16 %v658
        %v1206 = vunpack.c.h.b16 %v658
        %v1207 = vunpack.c.l.b16 %v659
        %v1208 = vunpack.c.h.b16 %v659
        %v1209 = vunpack.c.l.b16 %v660
        %v1210 = vunpack.c.h.b16 %v660
        %v1211 = vunpack.c.l.b16 %v661
        %v1212 = vunpack.c.h.b16 %v661
        %v1213 = vunpack.c.l.b16 %v662
        %v1214 = vunpack.c.h.b16 %v662
        %v1215 = vunpack.c.l.b16 %v663
        %v1216 = vunpack.c.h.b16 %v663
        %v1217 = vunpack.c.l.b16 %v664
        %v1218 = vunpack.c.h.b16 %v664
        %v1219 = vunpack.c.l.b16 %v665
        %v1220 = vunpack.c.h.b16 %v665
        %v1221 = vunpack.c.l.b16 %v666
        %v1222 = vunpack.c.h.b16 %v666
        %v1223 = vunpack.c.l.b16 %v667
        %v1224 = vunpack.c.h.b16 %v667
        %v1225 = vunpack.c.l.b16 %v668
        %v1226 = vunpack.c.h.b16 %v668
        %v1227 = vunpack.c.l.b16 %v669
        %v1228 = vunpack.c.h.b16 %v669
        %v1229 = vunpack.c.l.b16 %v670
        %v1230 = vunpack.c.h.b16 %v670
        %v1231 = vunpack.c.l.b16 %v671
        %v1232 = vunpack.c.h.b16 %v671
        %v1233 = vunpack.c.l.b16 %v672
        %v1234 = vunpack.c.h.b16 %v672
        %v1235 = vunpack.c.l.b16 %v673
        %v1236 = vunpack.c.h.b16 %v673
        %v1237 = vunpack.c.l.b16 %v674
        %v1238 = vunpack.c.h.b16 %v674
        %v1239 = vunpack.c.l.b16 %v675
        %v1240 = vunpack.c.h.b16 %v675
        %v1241 = vunpack.c.l.b16 %v676
        %v1242 = vunpack.c.h.b16 %v676
        %v1243 = vunpack.c.l.b16 %v677
        %v1244 = vunpack.c.h.b16 %v677
        %v1245 = vunpack.c.l.b16 %v678
        %v1246 = vunpack.c.h.b16 %v678
        %v1247 = vunpack.c.l.b16 %v679
        %v1248 = vunpack.c.h.b16 %v679
        %v1249 = vunpack.c.l.b16 %v680
        %v1250 = vunpack.c.h.b16 %v680
        %v1251 = vunpack.c.l.b16 %v681
        %v1252 = vunpack.c.h.b16 %v681
        %v1253 = vunpack.c.l.b16 %v682
        %v1254 = vunpack.c.h.b16 %v682
        %v1255 = vunpack.c.l.b16 %v683
        %v1256 = vunpack.c.h.b16 %v683
        %v1257 = vunpack.c.l.b16 %v684
        %v1258 = vunpack.c.h.b16 %v684
        %v1259 = vunpack.c.l.b16 %v685
        %v1260 = vunpack.c.h.b16 %v685
        %v1261 = vunpack.c.l.b16 %v686
        %v1262 = vunpack.c.h.b16 %v686
        %v1263 = vunpack.c.l.b16 %v687
        %v1264 = vunpack.c.h.b16 %v687
        %v1265 = vunpack.c.l.b16 %v688
        %v1266 = vunpack.c.h.b16 %v688
        %v1267 = vunpack.c.l.b16 %v689
        %v1268 = vunpack.c.h.b16 %v689
        %v1269 = vunpack.c.l.b16 %v690
        %v1270 = vunpack.c.h.b16 %v690
        %v1271 = vunpack.c.l.b16 %v691
        %v1272 = vunpack.c.h.b16 %v691
        %v1273 = vunpack.c.l.b16 %v692
        %v1274 = vunpack.c.h.b16 %v692
        %v1275 = vunpack.c.l.b16 %v693
        %v1276 = vunpack.c.h.b16 %v693
        %v1277 = vunpack.c.l.b16 %v694
        %v1278 = vunpack.c.h.b16 %v694
        %v1279 = vunpack.c.l.b16 %v695
        %v1280 = vunpack.c.h.b16 %v695
        %v1281 = vunpack.c.l.b16 %v696
        %v1282 = vunpack.c.h.b16 %v696
        %v1283 = vunpack.c.l.b16 %v697
        %v1284 = vunpack.c.h.b16 %v697
        %v1285 = vunpack.c.l.b16 %v698
        %v1286 = vunpack.c.h.b16 %v698
        %v1287 = vunpack.c.l.b16 %v699
        %v1288 = vunpack.c.h.b16 %v699
        %v1289 = vunpack.c.l.b16 %v700
        %v1290 = vunpack.c.h.b16 %v700
        %v1291 = vunpack.c.l.b16 %v701
        %v1292 = vunpack.c.h.b16 %v701
        %v1293 = vunpack.c.l.b16 %v702
        %v1294 = vunpack.c.h.b16 %v702
        %v1295 = vunpack.c.l.b16 %v703
        %v1296 = vunpack.c.h.b16 %v703
        %v1297 = vunpack.c.l.b16 %v704
        %v1298 = vunpack.c.h.b16 %v704
        %v1299 = vunpack.c.l.b16 %v705
        %v1300 = vunpack.c.h.b16 %v705
        %v1301 = vunpack.c.l.b16 %v706
        %v1302 = vunpack.c.h.b16 %v706
        %v1303 = vunpack.c.l.b16 %v707
        %v1304 = vunpack.c.h.b16 %v707
        %v1305 = vunpack.c.l.b16 %v708
        %v1306 = vunpack.c.h.b16 %v708
        %v1307 = vunpack.c.l.b16 %v709
        %v1308 = vunpack.c.h.b16 %v709
        %v1309 = vunpack.c.l.b16 %v710
        %v1310 = vunpack.c.h.b16 %v710
        %v1311 = vunpack.c.l.b16 %v711
        %v1312 = vunpack.c.h.b16 %v711
        %v1313 = vunpack.c.l.b16 %v712
        %v1314 = vunpack.c.h.b16 %v712
        %v1315 = vunpack.c.l.b16 %v713
        %v1316 = vunpack.c.h.b16 %v713
        %v1317 = vunpack.c.l.b16 %v714
        %v1318 = vunpack.c.h.b16 %v714
        %v1319 = vunpack.c.l.b16 %v715
        %v1320 = vunpack.c.h.b16 %v715
        %v1321 = vunpack.c.l.b16 %v716
        %v1322 = vunpack.c.h.b16 %v716
        %v1323 = vunpack.c.l.b16 %v717
        %v1324 = vunpack.c.h.b16 %v717
        %v1325 = vunpack.c.l.b16 %v718
        %v1326 = vunpack.c.h.b16 %v718
        %v1327 = vunpack.c.l.b16 %v719
        %v1328 = vunpack.c.h.b16 %v719
        %v1329 = vunpack.c.l.b16 %v720
        %v1330 = vunpack.c.h.b16 %v720
        %v1331 = vpack.c.b16 %v943, %v939
        %v1332 = vpack.c.b16 %v944, %v940
        %v1333 = vpack.c.b16 %v945, %v941
        %v1334 = vpack.c.b16 %v946, %v942
        %v1335 = vpack.c.b16 %v951, %v947
        %v1336 = vpack.c.b16 %v952, %v948
        %v1337 = vpack.c.b16 %v953, %v949
        %v1338 = vpack.c.b16 %v954, %v950
        %v1339 = vpack.c.b16 %v959, %v955
        %v1340 = vpack.c.b16 %v960, %v956
        %v1341 = vpack.c.b16 %v961, %v957
        %v1342 = vpack.c.b16 %v962, %v958
        %v1343 = vpack.c.b16 %v967, %v963
        %v1344 = vpack.c.b16 %v968, %v964
        %v1345 = vpack.c.b16 %v969, %v965
        %v1346 = vpack.c.b16 %v970, %v966
        %v1347 = vpack.c.b16 %v975, %v971
        %v1348 = vpack.c.b16 %v976, %v972
        %v1349 = vpack.c.b16 %v977, %v973
        %v1350 = vpack.c.b16 %v978, %v974
        %v1351 = vpack.c.b16 %v983, %v979
        %v1352 = vpack.c.b16 %v984, %v980
        %v1353 = vpack.c.b16 %v985, %v981
        %v1354 = vpack.c.b16 %v986, %v982
        %v1355 = vpack.c.b16 %v991, %v987
        %v1356 = vpack.c.b16 %v992, %v988
        %v1357 = vpack.c.b16 %v993, %v989
        %v1358 = vpack.c.b16 %v994, %v990
        %v1359 = vpack.c.b16 %v999, %v995
        %v1360 = vpack.c.b16 %v1000, %v996
        %v1361 = vpack.c.b16 %v1001, %v997
        %v1362 = vpack.c.b16 %v1002, %v998
        %v1363 = vpack.c.b16 %v1007, %v1003
        %v1364 = vpack.c.b16 %v1008, %v1004
        %v1365 = vpack.c.b16 %v1009, %v1005
        %v1366 = vpack.c.b16 %v1010, %v1006
        %v1367 = vpack.c.b16 %v1015, %v1011
        %v1368 = vpack.c.b16 %v1016, %v1012
        %v1369 = vpack.c.b16 %v1017, %v1013
        %v1370 = vpack.c.b16 %v1018, %v1014
        %v1371 = vpack.c.b16 %v1023, %v1019
        %v1372 = vpack.c.b16 %v1024, %v1020
        %v1373 = vpack.c.b16 %v1025, %v1021
        %v1374 = vpack.c.b16 %v1026, %v1022
        %v1375 = vpack.c.b16 %v1031, %v1027
        %v1376 = vpack.c.b16 %v1032, %v1028
        %v1377 = vpack.c.b16 %v1033, %v1029
        %v1378 = vpack.c.b16 %v1034, %v1030
        %v1379 = vpack.c.b16 %v1039, %v1035
        %v1380 = vpack.c.b16 %v1040, %v1036
        %v1381 = vpack.c.b16 %v1041, %v1037
        %v1382 = vpack.c.b16 %v1042, %v1038
        %v1383 = vpack.c.b16 %v1047, %v1043
        %v1384 = vpack.c.b16 %v1048, %v1044
        %v1385 = vpack.c.b16 %v1049, %v1045
        %v1386 = vpack.c.b16 %v1050, %v1046
        %v1387 = vpack.c.b16 %v1055, %v1051
        %v1388 = vpack.c.b16 %v1056, %v1052
        %v1389 = vpack.c.b16 %v1057, %v1053
        %v1390 = vpack.c.b16 %v1058, %v1054
        %v1391 = vpack.c.b16 %v1063, %v1059
        %v1392 = vpack.c.b16 %v1064, %v1060
        %v1393 = vpack.c.b16 %v1065, %v1061
        %v1394 = vpack.c.b16 %v1066, %v1062
        %v1395 = vpack.c.b16 %v1071, %v1067
        %v1396 = vpack.c.b16 %v1072, %v1068
        %v1397 = vpack.c.b16 %v1073, %v1069
        %v1398 = vpack.c.b16 %v1074, %v1070
        %v1399 = vpack.c.b16 %v1079, %v1075
        %v1400 = vpack.c.b16 %v1080, %v1076
        %v1401 = vpack.c.b16 %v1081, %v1077
        %v1402 = vpack.c.b16 %v1082, %v1078
        %v1403 = vpack.c.b16 %v1087, %v1083
        %v1404 = vpack.c.b16 %v1088, %v1084
        %v1405 = vpack.c.b16 %v1089, %v1085
        %v1406 = vpack.c.b16 %v1090, %v1086
        %v1407 = vpack.c.b16 %v1095, %v1091
        %v1408 = vpack.c.b16 %v1096, %v1092
        %v1409 = vpack.c.b16 %v1097, %v1093
        %v1410 = vpack.c.b16 %v1098, %v1094
        %v1411 = vpack.c.b16 %v1103, %v1099
        %v1412 = vpack.c.b16 %v1104, %v1100
        %v1413 = vpack.c.b16 %v1105, %v1101
        %v1414 = vpack.c.b16 %v1106, %v1102
        %v1415 = vpack.c.b16 %v1111, %v1107
        %v1416 = vpack.c.b16 %v1112, %v1108
        %v1417 = vpack.c.b16 %v1113, %v1109
        %v1418 = vpack.c.b16 %v1114, %v1110
        %v1419 = vpack.c.b16 %v1119, %v1115
        %v1420 = vpack.c.b16 %v1120, %v1116
        %v1421 = vpack.c.b16 %v1121, %v1117
        %v1422 = vpack.c.b16 %v1122, %v1118
        %v1423 = vpack.c.b16 %v1127, %v1123
        %v1424 = vpack.c.b16 %v1128, %v1124
        %v1425 = vpack.c.b16 %v1129, %v1125
        %v1426 = vpack.c.b16 %v1130, %v1126
        %v1427 = vpack.c.b16 %v1135, %v1131
        %v1428 = vpack.c.b16 %v1136, %v1132
        %v1429 = vpack.c.b16 %v1137, %v1133
        %v1430 = vpack.c.b16 %v1138, %v1134
        %v1431 = vpack.c.b16 %v1143, %v1139
        %v1432 = vpack.c.b16 %v1144, %v1140
        %v1433 = vpack.c.b16 %v1145, %v1141
        %v1434 = vpack.c.b16 %v1146, %v1142
        %v1435 = vpack.c.b16 %v1151, %v1147
        %v1436 = vpack.c.b16 %v1152, %v1148
        %v1437 = vpack.c.b16 %v1153, %v1149
        %v1438 = vpack.c.b16 %v1154, %v1150
        %v1439 = vpack.c.b16 %v1159, %v1155
        %v1440 = vpack.c.b16 %v1160, %v1156
        %v1441 = vpack.c.b16 %v1161, %v1157
        %v1442 = vpack.c.b16 %v1162, %v1158
        %v1443 = vpack.c.b16 %v1167, %v1163
        %v1444 = vpack.c.b16 %v1168, %v1164
        %v1445 = vpack.c.b16 %v1169, %v1165
        %v1446 = vpack.c.b16 %v1170, %v1166
        %v1447 = vpack.c.b16 %v1175, %v1171
        %v1448 = vpack.c.b16 %v1176, %v1172
        %v1449 = vpack.c.b16 %v1177, %v1173
        %v1450 = vpack.c.b16 %v1178, %v1174
        %v1451 = vpack.c.b16 %v1183, %v1179
        %v1452 = vpack.c.b16 %v1184, %v1180
        %v1453 = vpack.c.b16 %v1185, %v1181
        %v1454 = vpack.c.b16 %v1186, %v1182
        %v1455 = vpack.c.b16 %v1191, %v1187
        %v1456 = vpack.c.b16 %v1192, %v1188
        %v1457 = vpack.c.b16 %v1193, %v1189
        %v1458 = vpack.c.b16 %v1194, %v1190
        %v1459 = vpack.c.b16 %v1199, %v1195
        %v1460 = vpack.c.b16 %v1200, %v1196
        %v1461 = vpack.c.b16 %v1201, %v1197
        %v1462 = vpack.c.b16 %v1202, %v1198
        %v1463 = vpack.c.b16 %v1207, %v1203
        %v1464 = vpack.c.b16 %v1208, %v1204
        %v1465 = vpack.c.b16 %v1209, %v1205
        %v1466 = vpack.c.b16 %v1210, %v1206
        %v1467 = vpack.c.b16 %v1215, %v1211
        %v1468 = vpack.c.b16 %v1216, %v1212
        %v1469 = vpack.c.b16 %v1217, %v1213
        %v1470 = vpack.c.b16 %v1218, %v1214
        %v1471 = vpack.c.b16 %v1223, %v1219
        %v1472 = vpack.c.b16 %v1224, %v1220
        %v1473 = vpack.c.b16 %v1225, %v1221
        %v1474 = vpack.c.b16 %v1226, %v1222
        %v1475 = vpack.c.b16 %v1231, %v1227
        %v1476 = vpack.c.b16 %v1232, %v1228
        %v1477 = vpack.c.b16 %v1233, %v1229
        %v1478 = vpack.c.b16 %v1234, %v1230
        %v1479 = vpack.c.b16 %v1239, %v1235
        %v1480 = vpack.c.b16 %v1240, %v1236
        %v1481 = vpack.c.b16 %v1241, %v1237
        %v1482 = vpack.c.b16 %v1242, %v1238
        %v1483 = vpack.c.b16 %v1247, %v1243
        %v1484 = vpack.c.b16 %v1248, %v1244
        %v1485 = vpack.c.b16 %v1249, %v1245
        %v1486 = vpack.c.b16 %v1250, %v1246
        %v1487 = vpack.c.b16 %v1255, %v1251
        %v1488 = vpack.c.b16 %v1256, %v1252
        %v1489 = vpack.c.b16 %v1257, %v1253
        %v1490 = vpack.c.b16 %v1258, %v1254
        %v1491 = vpack.c.b16 %v1263, %v1259
        %v1492 = vpack.c.b16 %v1264, %v1260
        %v1493 = vpack.c.b16 %v1265, %v1261
        %v1494 = vpack.c.b16 %v1266, %v1262
        %v1495 = vpack.c.b16 %v1271, %v1267
        %v1496 = vpack.c.b16 %v1272, %v1268
        %v1497 = vpack.c.b16 %v1273, %v1269
        %v1498 = vpack.c.b16 %v1274, %v1270
        %v1499 = vpack.c.b16 %v1279, %v1275
        %v1500 = vpack.c.b16 %v1280, %v1276
        %v1501 = vpack.c.b16 %v1281, %v1277
        %v1502 = vpack.c.b16 %v1282, %v1278
        %v1503 = vpack.c.b16 %v1287, %v1283
        %v1504 = vpack.c.b16 %v1288, %v1284
        %v1505 = vpack.c.b16 %v1289, %v1285
        %v1506 = vpack.c.b16 %v1290, %v1286
        %v1507 = vpack.c.b16 %v1295, %v1291
        %v1508 = vpack.c.b16 %v1296, %v1292
        %v1509 = vpack.c.b16 %v1297, %v1293
        %v1510 = vpack.c.b16 %v1298, %v1294
        %v1511 = vpack.c.b16 %v1303, %v1299
        %v1512 = vpack.c.b16 %v1304, %v1300
        %v1513 = vpack.c.b16 %v1305, %v1301
        %v1514 = vpack.c.b16 %v1306, %v1302
        %v1515 = vpack.c.b16 %v1311, %v1307
        %v1516 = vpack.c.b16 %v1312, %v1308
        %v1517 = vpack.c.b16 %v1313, %v1309
        %v1518 = vpack.c.b16 %v1314, %v1310
        %v1519 = vpack.c.b16 %v1319, %v1315
        %v1520 = vpack.c.b16 %v1320, %v1316
        %v1521 = vpack.c.b16 %v1321, %v1317
        %v1522 = vpack.c.b16 %v1322, %v1318
        %v1523 = vpack.c.b16 %v1327, %v1323
        %v1524 = vpack.c.b16 %v1328, %v1324
        %v1525 = vpack.c.b16 %v1329, %v1325
        %v1526 = vpack.c.b16 %v1330, %v1326
        %vm1723 = vcmask 130048
        %v1725 = vsel %vm1723, %v475, 0
        %v1728 = vsel %vm1723, %v482, 0
        %v1731 = vsel %vm1723, %v489, 0
        %v1734 = vsel %vm1723, %v496, 0
        %v1737 = vsel %vm1723, %v503, 0
        %v1740 = vsel %vm1723, %v510, 0
        %v1743 = vsel %vm1723, %v517, 0
        %v1746 = vsel %vm1723, %v524, 0
        %1748 = vmatprep.subr.bf16.mxu0 %v1332
        %1749 = vmatpush1.bf16.msra.mxu0 %v1331
        %1750 = vmatprep.subr.bf16.mxu0 %v1336
        %1751 = vmatpush1.bf16.msra.mxu0 %v1335
        %1752 = vmatprep.subr.bf16.mxu0 %v1340
        %1753 = vmatpush1.bf16.msra.mxu0 %v1339
        %1754 = vmatprep.subr.bf16.mxu0 %v1344
        %1755 = vmatpush1.bf16.msra.mxu0 %v1343
        %1756 = vmatprep.subr.bf16.mxu0 %v1348
        %1757 = vmatpush1.bf16.msra.mxu0 %v1347
        %1758 = vmatprep.subr.bf16.mxu0 %v1352
        %1759 = vmatpush1.bf16.msra.mxu0 %v1351
        %1760 = vmatprep.subr.bf16.mxu0 %v1356
        %1761 = vmatpush1.bf16.msra.mxu0 %v1355
        %1762 = vmatprep.subr.bf16.mxu0 %v1360
        %1763 = vmatpush1.bf16.msra.mxu0 %v1359
        %1764 = vmatprep.subr.bf16.mxu0 %v1364
        %1765 = vmatpush1.bf16.msra.mxu0 %v1363
        %1766 = vmatprep.subr.bf16.mxu0 %v1368
        %1767 = vmatpush1.bf16.msra.mxu0 %v1367
        %1768 = vmatprep.subr.bf16.mxu0 %v1372
        %1769 = vmatpush1.bf16.msra.mxu0 %v1371
        %1770 = vmatprep.subr.bf16.mxu0 %v1376
        %1771 = vmatpush1.bf16.msra.mxu0 %v1375
        %1772 = vmatprep.subr.bf16.mxu0 %v1380
        %1773 = vmatpush1.bf16.msra.mxu0 %v1379
        %1774 = vmatprep.subr.bf16.mxu0 %v1384
        %1775 = vmatpush1.bf16.msra.mxu0 %v1383
        %1776 = vmatprep.subr.bf16.mxu0 %v1388
        %1777 = vmatpush1.bf16.msra.mxu0 %v1387
        %1778 = vmatprep.subr.bf16.mxu0 %v1392
        %1779 = vmatpush1.bf16.msra.mxu0 %v1391
        %1780 = vmatprep.mubr.bf16.mxu0 %v470
        %1781 = vmatmul.mubr.bf16.gmra.mrb[0].mxu0 %v469
        %v1782 = vpop.f32.mrb[0].mxu0
        %v1783 = vadd.f32 %v726, %v1782
        %v1784 = vpop.f32.mrb[0].mxu0
        %v1785 = vadd.f32 %v730, %v1784
        %v1786 = vpop.f32.mrb[0].mxu0
        %v1787 = vadd.f32 %v726, %v1786
        %v1788 = vpop.f32.mrb[0].mxu0
        %v1789 = vadd.f32 %v730, %v1788
        %1790 = vmatprep.mubr.bf16.mxu0 %v477
        %1791 = vmatmul.mubr.bf16.gmra.mrb[0].mxu0 %v476
        %v1792 = vpop.f32.mrb[0].mxu0
        %v1793 = vadd.f32 %v726, %v1792
        %v1794 = vpop.f32.mrb[0].mxu0
        %v1795 = vadd.f32 %v730, %v1794
        %v1796 = vpop.f32.mrb[0].mxu0
        %v1797 = vadd.f32 %v726, %v1796
        %v1798 = vpop.f32.mrb[0].mxu0
        %v1799 = vadd.f32 %v730, %v1798
        %1800 = vmatprep.mubr.bf16.mxu0 %v484
        %1801 = vmatmul.mubr.bf16.gmra.mrb[0].mxu0 %v483
        %v1802 = vpop.f32.mrb[0].mxu0
        %v1803 = vadd.f32 %v726, %v1802
        %v1804 = vpop.f32.mrb[0].mxu0
        %v1805 = vadd.f32 %v730, %v1804
        %v1806 = vpop.f32.mrb[0].mxu0
        %v1807 = vadd.f32 %v726, %v1806
        %v1808 = vpop.f32.mrb[0].mxu0
        %v1809 = vadd.f32 %v730, %v1808
        %1810 = vmatprep.mubr.bf16.mxu0 %v491
        %1811 = vmatmul.mubr.bf16.gmra.mrb[0].mxu0 %v490
        %v1812 = vpop.f32.mrb[0].mxu0
        %v1813 = vadd.f32 %v726, %v1812
        %v1814 = vpop.f32.mrb[0].mxu0
        %v1815 = vadd.f32 %v730, %v1814
        %v1816 = vpop.f32.mrb[0].mxu0
        %v1817 = vadd.f32 %v726, %v1816
        %v1818 = vpop.f32.mrb[0].mxu0
        %v1819 = vadd.f32 %v730, %v1818
        %1820 = vmatprep.mubr.bf16.mxu0 %v498
        %1821 = vmatmul.mubr.bf16.gmra.mrb[0].mxu0 %v497
        %v1822 = vpop.f32.mrb[0].mxu0
        %v1823 = vadd.f32 %v726, %v1822
        %v1824 = vpop.f32.mrb[0].mxu0
        %v1825 = vadd.f32 %v730, %v1824
        %v1826 = vpop.f32.mrb[0].mxu0
        %v1827 = vadd.f32 %v726, %v1826
        %v1828 = vpop.f32.mrb[0].mxu0
        %v1829 = vadd.f32 %v730, %v1828
        %1830 = vmatprep.mubr.bf16.mxu0 %v505
        %1831 = vmatmul.mubr.bf16.gmra.mrb[0].mxu0 %v504
        %v1832 = vpop.f32.mrb[0].mxu0
        %v1833 = vadd.f32 %v726, %v1832
        %v1834 = vpop.f32.mrb[0].mxu0
        %v1835 = vadd.f32 %v730, %v1834
        %v1836 = vpop.f32.mrb[0].mxu0
        %v1837 = vadd.f32 %v726, %v1836
        %v1838 = vpop.f32.mrb[0].mxu0
        %v1839 = vadd.f32 %v730, %v1838
        %1840 = vmatprep.mubr.bf16.mxu0 %v512
        %1841 = vmatmul.mubr.bf16.gmra.mrb[0].mxu0 %v511
        %v1842 = vpop.f32.mrb[0].mxu0
        %v1843 = vadd.f32 %v726, %v1842
        %v1844 = vpop.f32.mrb[0].mxu0
        %v1845 = vadd.f32 %v730, %v1844
        %v1846 = vpop.f32.mrb[0].mxu0
        %v1847 = vadd.f32 %v726, %v1846
        %v1848 = vpop.f32.mrb[0].mxu0
        %v1849 = vadd.f32 %v730, %v1848
        %1850 = vmatprep.mubr.bf16.mxu0 %v519
        %1851 = vmatmul.mubr.bf16.gmra.mrb[0].mxu0 %v518
        %v1852 = vpop.f32.mrb[0].mxu0
        %v1853 = vadd.f32 %v726, %v1852
        %v1854 = vpop.f32.mrb[0].mxu0
        %v1855 = vadd.f32 %v730, %v1854
        %v1856 = vpop.f32.mrb[0].mxu0
        %v1857 = vadd.f32 %v726, %v1856
        %v1858 = vpop.f32.mrb[0].mxu0
        %v1859 = vadd.f32 %v730, %v1858
        %1860 = vdwg.mxu0
        %1861 = vmatprep.subr.bf16.mxu0 %v1396
        %1862 = vmatpush1.bf16.msra.mxu0 %v1395
        %1863 = vmatprep.subr.bf16.mxu0 %v1400
        %1864 = vmatpush1.bf16.msra.mxu0 %v1399
        %1865 = vmatprep.subr.bf16.mxu0 %v1404
        %1866 = vmatpush1.bf16.msra.mxu0 %v1403
        %1867 = vmatprep.subr.bf16.mxu0 %v1408
        %1868 = vmatpush1.bf16.msra.mxu0 %v1407
        %1869 = vmatprep.subr.bf16.mxu0 %v1412
        %1870 = vmatpush1.bf16.msra.mxu0 %v1411
        %1871 = vmatprep.subr.bf16.mxu0 %v1416
        %1872 = vmatpush1.bf16.msra.mxu0 %v1415
        %1873 = vmatprep.subr.bf16.mxu0 %v1420
        %1874 = vmatpush1.bf16.msra.mxu0 %v1419
        %1875 = vmatprep.subr.bf16.mxu0 %v1424
        %1876 = vmatpush1.bf16.msra.mxu0 %v1423
        %1877 = vmatprep.subr.bf16.mxu0 %v1428
        %1878 = vmatpush1.bf16.msra.mxu0 %v1427
        %1879 = vmatprep.subr.bf16.mxu0 %v1432
        %1880 = vmatpush1.bf16.msra.mxu0 %v1431
        %1881 = vmatprep.subr.bf16.mxu0 %v1436
        %1882 = vmatpush1.bf16.msra.mxu0 %v1435
        %1883 = vmatprep.subr.bf16.mxu0 %v1440
        %1884 = vmatpush1.bf16.msra.mxu0 %v1439
        %1885 = vmatprep.subr.bf16.mxu0 %v1444
        %1886 = vmatpush1.bf16.msra.mxu0 %v1443
        %1887 = vmatprep.subr.bf16.mxu0 %v1448
        %1888 = vmatpush1.bf16.msra.mxu0 %v1447
        %1889 = vmatprep.subr.bf16.mxu0 %v1452
        %1890 = vmatpush1.bf16.msra.mxu0 %v1451
        %1891 = vmatprep.subr.bf16.mxu0 %v1456
        %1892 = vmatpush1.bf16.msra.mxu0 %v1455
        %1893 = vmatprep.mubr.bf16.mxu0 %v472
        %1894 = vmatmul.mubr.bf16.gmra.mrb[0].mxu0 %v471
        %v1895 = vpop.f32.mrb[0].mxu0
        %v1896 = vadd.f32 %v1783, %v1895
        %v1897 = vpop.f32.mrb[0].mxu0
        %v1898 = vadd.f32 %v1785, %v1897
        %v1899 = vpop.f32.mrb[0].mxu0
        %v1900 = vadd.f32 %v1787, %v1899
        %v1901 = vpop.f32.mrb[0].mxu0
        %v1902 = vadd.f32 %v1789, %v1901
        %1903 = vmatprep.mubr.bf16.mxu0 %v479
        %1904 = vmatmul.mubr.bf16.gmra.mrb[0].mxu0 %v478
        %v1905 = vpop.f32.mrb[0].mxu0
        %v1906 = vadd.f32 %v1793, %v1905
        %v1907 = vpop.f32.mrb[0].mxu0
        %v1908 = vadd.f32 %v1795, %v1907
        %v1909 = vpop.f32.mrb[0].mxu0
        %v1910 = vadd.f32 %v1797, %v1909
        %v1911 = vpop.f32.mrb[0].mxu0
        %v1912 = vadd.f32 %v1799, %v1911
        %1913 = vmatprep.mubr.bf16.mxu0 %v486
        %1914 = vmatmul.mubr.bf16.gmra.mrb[0].mxu0 %v485
        %v1915 = vpop.f32.mrb[0].mxu0
        %v1916 = vadd.f32 %v1803, %v1915
        %v1917 = vpop.f32.mrb[0].mxu0
        %v1918 = vadd.f32 %v1805, %v1917
        %v1919 = vpop.f32.mrb[0].mxu0
        %v1920 = vadd.f32 %v1807, %v1919
        %v1921 = vpop.f32.mrb[0].mxu0
        %v1922 = vadd.f32 %v1809, %v1921
        %1923 = vmatprep.mubr.bf16.mxu0 %v493
        %1924 = vmatmul.mubr.bf16.gmra.mrb[0].mxu0 %v492
        %v1925 = vpop.f32.mrb[0].mxu0
        %v1926 = vadd.f32 %v1813, %v1925
        %v1927 = vpop.f32.mrb[0].mxu0
        %v1928 = vadd.f32 %v1815, %v1927
        %v1929 = vpop.f32.mrb[0].mxu0
        %v1930 = vadd.f32 %v1817, %v1929
        %v1931 = vpop.f32.mrb[0].mxu0
        %v1932 = vadd.f32 %v1819, %v1931
        %1933 = vmatprep.mubr.bf16.mxu0 %v500
        %1934 = vmatmul.mubr.bf16.gmra.mrb[0].mxu0 %v499
        %v1935 = vpop.f32.mrb[0].mxu0
        %v1936 = vadd.f32 %v1823, %v1935
        %v1937 = vpop.f32.mrb[0].mxu0
        %v1938 = vadd.f32 %v1825, %v1937
        %v1939 = vpop.f32.mrb[0].mxu0
        %v1940 = vadd.f32 %v1827, %v1939
        %v1941 = vpop.f32.mrb[0].mxu0
        %v1942 = vadd.f32 %v1829, %v1941
        %1943 = vmatprep.mubr.bf16.mxu0 %v507
        %1944 = vmatmul.mubr.bf16.gmra.mrb[0].mxu0 %v506
        %v1945 = vpop.f32.mrb[0].mxu0
        %v1946 = vadd.f32 %v1833, %v1945
        %v1947 = vpop.f32.mrb[0].mxu0
        %v1948 = vadd.f32 %v1835, %v1947
        %v1949 = vpop.f32.mrb[0].mxu0
        %v1950 = vadd.f32 %v1837, %v1949
        %v1951 = vpop.f32.mrb[0].mxu0
        %v1952 = vadd.f32 %v1839, %v1951
        %1953 = vmatprep.mubr.bf16.mxu0 %v514
        %1954 = vmatmul.mubr.bf16.gmra.mrb[0].mxu0 %v513
        %v1955 = vpop.f32.mrb[0].mxu0
        %v1956 = vadd.f32 %v1843, %v1955
        %v1957 = vpop.f32.mrb[0].mxu0
        %v1958 = vadd.f32 %v1845, %v1957
        %v1959 = vpop.f32.mrb[0].mxu0
        %v1960 = vadd.f32 %v1847, %v1959
        %v1961 = vpop.f32.mrb[0].mxu0
        %v1962 = vadd.f32 %v1849, %v1961
        %1963 = vmatprep.mubr.bf16.mxu0 %v521
        %1964 = vmatmul.mubr.bf16.gmra.mrb[0].mxu0 %v520
        %v1965 = vpop.f32.mrb[0].mxu0
        %v1966 = vadd.f32 %v1853, %v1965
        %v1967 = vpop.f32.mrb[0].mxu0
        %v1968 = vadd.f32 %v1855, %v1967
        %v1969 = vpop.f32.mrb[0].mxu0
        %v1970 = vadd.f32 %v1857, %v1969
        %v1971 = vpop.f32.mrb[0].mxu0
        %v1972 = vadd.f32 %v1859, %v1971
        %1973 = vdwg.mxu0
        %1974 = vmatprep.subr.bf16.mxu0 %v1460
        %1975 = vmatpush1.bf16.msra.mxu0 %v1459
        %1976 = vmatprep.subr.bf16.mxu0 %v1464
        %1977 = vmatpush1.bf16.msra.mxu0 %v1463
        %1978 = vmatprep.subr.bf16.mxu0 %v1468
        %1979 = vmatpush1.bf16.msra.mxu0 %v1467
        %1980 = vmatprep.subr.bf16.mxu0 %v1472
        %1981 = vmatpush1.bf16.msra.mxu0 %v1471
        %1982 = vmatprep.subr.bf16.mxu0 %v1476
        %1983 = vmatpush1.bf16.msra.mxu0 %v1475
        %1984 = vmatprep.subr.bf16.mxu0 %v1480
        %1985 = vmatpush1.bf16.msra.mxu0 %v1479
        %1986 = vmatprep.subr.bf16.mxu0 %v1484
        %1987 = vmatpush1.bf16.msra.mxu0 %v1483
        %1988 = vmatprep.subr.bf16.mxu0 %v1488
        %1989 = vmatpush1.bf16.msra.mxu0 %v1487
        %1990 = vmatprep.subr.bf16.mxu0 %v1492
        %1991 = vmatpush1.bf16.msra.mxu0 %v1491
        %1992 = vmatprep.subr.bf16.mxu0 %v1496
        %1993 = vmatpush1.bf16.msra.mxu0 %v1495
        %1994 = vmatprep.subr.bf16.mxu0 %v1500
        %1995 = vmatpush1.bf16.msra.mxu0 %v1499
        %1996 = vmatprep.subr.bf16.mxu0 %v1504
        %1997 = vmatpush1.bf16.msra.mxu0 %v1503
        %1998 = vmatprep.subr.bf16.mxu0 %v1508
        %1999 = vmatpush1.bf16.msra.mxu0 %v1507
        %2000 = vmatprep.subr.bf16.mxu0 %v1512
        %2001 = vmatpush1.bf16.msra.mxu0 %v1511
        %2002 = vmatprep.subr.bf16.mxu0 %v1516
        %2003 = vmatpush1.bf16.msra.mxu0 %v1515
        %2004 = vmatprep.subr.bf16.mxu0 %v1520
        %2005 = vmatpush1.bf16.msra.mxu0 %v1519
        %2006 = vmatprep.mubr.bf16.mxu0 %v474
        %2007 = vmatmul.mubr.bf16.gmra.mrb[0].mxu0 %v473
        %v2008 = vpop.f32.mrb[0].mxu0
        %v2009 = vadd.f32 %v1896, %v2008
        %v2010 = vpop.f32.mrb[0].mxu0
        %v2011 = vadd.f32 %v1898, %v2010
        %v2012 = vpop.f32.mrb[0].mxu0
        %v2013 = vadd.f32 %v1900, %v2012
        %v2014 = vpop.f32.mrb[0].mxu0
        %v2015 = vadd.f32 %v1902, %v2014
        %2016 = vmatprep.mubr.bf16.mxu0 %v481
        %2017 = vmatmul.mubr.bf16.gmra.mrb[0].mxu0 %v480
        %v2018 = vpop.f32.mrb[0].mxu0
        %v2019 = vadd.f32 %v1906, %v2018
        %v2020 = vpop.f32.mrb[0].mxu0
        %v2021 = vadd.f32 %v1908, %v2020
        %v2022 = vpop.f32.mrb[0].mxu0
        %v2023 = vadd.f32 %v1910, %v2022
        %v2024 = vpop.f32.mrb[0].mxu0
        %v2025 = vadd.f32 %v1912, %v2024
        %2026 = vmatprep.mubr.bf16.mxu0 %v488
        %2027 = vmatmul.mubr.bf16.gmra.mrb[0].mxu0 %v487
        %v2028 = vpop.f32.mrb[0].mxu0
        %v2029 = vadd.f32 %v1916, %v2028
        %v2030 = vpop.f32.mrb[0].mxu0
        %v2031 = vadd.f32 %v1918, %v2030
        %v2032 = vpop.f32.mrb[0].mxu0
        %v2033 = vadd.f32 %v1920, %v2032
        %v2034 = vpop.f32.mrb[0].mxu0
        %v2035 = vadd.f32 %v1922, %v2034
        %2036 = vmatprep.mubr.bf16.mxu0 %v495
        %2037 = vmatmul.mubr.bf16.gmra.mrb[0].mxu0 %v494
        %v2038 = vpop.f32.mrb[0].mxu0
        %v2039 = vadd.f32 %v1926, %v2038
        %v2040 = vpop.f32.mrb[0].mxu0
        %v2041 = vadd.f32 %v1928, %v2040
        %v2042 = vpop.f32.mrb[0].mxu0
        %v2043 = vadd.f32 %v1930, %v2042
        %v2044 = vpop.f32.mrb[0].mxu0
        %v2045 = vadd.f32 %v1932, %v2044
        %2046 = vmatprep.mubr.bf16.mxu0 %v502
        %2047 = vmatmul.mubr.bf16.gmra.mrb[0].mxu0 %v501
        %v2048 = vpop.f32.mrb[0].mxu0
        %v2049 = vadd.f32 %v1936, %v2048
        %v2050 = vpop.f32.mrb[0].mxu0
        %v2051 = vadd.f32 %v1938, %v2050
        %v2052 = vpop.f32.mrb[0].mxu0
        %v2053 = vadd.f32 %v1940, %v2052
        %v2054 = vpop.f32.mrb[0].mxu0
        %v2055 = vadd.f32 %v1942, %v2054
        %2056 = vmatprep.mubr.bf16.mxu0 %v509
        %2057 = vmatmul.mubr.bf16.gmra.mrb[0].mxu0 %v508
        %v2058 = vpop.f32.mrb[0].mxu0
        %v2059 = vadd.f32 %v1946, %v2058
        %v2060 = vpop.f32.mrb[0].mxu0
        %v2061 = vadd.f32 %v1948, %v2060
        %v2062 = vpop.f32.mrb[0].mxu0
        %v2063 = vadd.f32 %v1950, %v2062
        %v2064 = vpop.f32.mrb[0].mxu0
        %v2065 = vadd.f32 %v1952, %v2064
        %2066 = vmatprep.mubr.bf16.mxu0 %v516
        %2067 = vmatmul.mubr.bf16.gmra.mrb[0].mxu0 %v515
        %v2068 = vpop.f32.mrb[0].mxu0
        %v2069 = vadd.f32 %v1956, %v2068
        %v2070 = vpop.f32.mrb[0].mxu0
        %v2071 = vadd.f32 %v1958, %v2070
        %v2072 = vpop.f32.mrb[0].mxu0
        %v2073 = vadd.f32 %v1960, %v2072
        %v2074 = vpop.f32.mrb[0].mxu0
        %v2075 = vadd.f32 %v1962, %v2074
        %2076 = vmatprep.mubr.bf16.mxu0 %v523
        %2077 = vmatmul.mubr.bf16.gmra.mrb[0].mxu0 %v522
        %v2078 = vpop.f32.mrb[0].mxu0
        %v2079 = vadd.f32 %v1966, %v2078
        %v2080 = vpop.f32.mrb[0].mxu0
        %v2081 = vadd.f32 %v1968, %v2080
        %v2082 = vpop.f32.mrb[0].mxu0
        %v2083 = vadd.f32 %v1970, %v2082
        %v2084 = vpop.f32.mrb[0].mxu0
        %v2085 = vadd.f32 %v1972, %v2084
        %2086 = vdwg.mxu0
        %2087 = vmatprep.subr.bf16.mxu0 %v1524
        %2088 = vmatpush1.bf16.msra.mxu0 %v1523
        %2089 = vmatprep.subr.bf16.mxu0 0
        %2090 = vmatpush1.bf16.msra.mxu0 0
        %2091 = vmatprep.subr.bf16.mxu0 0
        %2092 = vmatpush1.bf16.msra.mxu0 0
        %2093 = vmatprep.subr.bf16.mxu0 0
        %2094 = vmatpush1.bf16.msra.mxu0 0
        %2095 = vmatprep.subr.bf16.mxu0 0
        %2096 = vmatpush1.bf16.msra.mxu0 0
        %2097 = vmatprep.subr.bf16.mxu0 0
        %2098 = vmatpush1.bf16.msra.mxu0 0
        %2099 = vmatprep.subr.bf16.mxu0 0
        %2100 = vmatpush1.bf16.msra.mxu0 0
        %2101 = vmatprep.subr.bf16.mxu0 0
        %2102 = vmatpush1.bf16.msra.mxu0 0
        %2103 = vmatprep.subr.bf16.mxu0 0
        %2104 = vmatpush1.bf16.msra.mxu0 0
        %2105 = vmatprep.subr.bf16.mxu0 0
        %2106 = vmatpush1.bf16.msra.mxu0 0
        %2107 = vmatprep.subr.bf16.mxu0 0
        %2108 = vmatpush1.bf16.msra.mxu0 0
        %2109 = vmatprep.subr.bf16.mxu0 0
        %2110 = vmatpush1.bf16.msra.mxu0 0
        %2111 = vmatprep.subr.bf16.mxu0 0
        %2112 = vmatpush1.bf16.msra.mxu0 0
        %2113 = vmatprep.subr.bf16.mxu0 0
        %2114 = vmatpush1.bf16.msra.mxu0 0
        %2115 = vmatprep.subr.bf16.mxu0 0
        %2116 = vmatpush1.bf16.msra.mxu0 0
        %2117 = vmatprep.subr.bf16.mxu0 0
        %2118 = vmatpush1.bf16.msra.mxu0 0
        %2119 = vmatprep.mubr.bf16.mxu0 0
        %2120 = vmatmul.mubr.bf16.gmra.mrb[0].mxu0 %v1725
        %v2121 = vpop.f32.mrb[0].mxu0
        %v2122 = vadd.f32 %v2009, %v2121
        %v2123 = vpop.f32.mrb[0].mxu0
        %v2124 = vadd.f32 %v2011, %v2123
        %v2125 = vpop.f32.mrb[0].mxu0
        %v2126 = vadd.f32 %v2013, %v2125
        %v2127 = vpop.f32.mrb[0].mxu0
        %v2128 = vadd.f32 %v2015, %v2127
        %2129 = vmatprep.mubr.bf16.mxu0 0
        %2130 = vmatmul.mubr.bf16.gmra.mrb[0].mxu0 %v1728
        %v2131 = vpop.f32.mrb[0].mxu0
        %v2132 = vadd.f32 %v2019, %v2131
        %v2133 = vpop.f32.mrb[0].mxu0
        %v2134 = vadd.f32 %v2021, %v2133
        %v2135 = vpop.f32.mrb[0].mxu0
        %v2136 = vadd.f32 %v2023, %v2135
        %v2137 = vpop.f32.mrb[0].mxu0
        %v2138 = vadd.f32 %v2025, %v2137
        %2139 = vmatprep.mubr.bf16.mxu0 0
        %2140 = vmatmul.mubr.bf16.gmra.mrb[0].mxu0 %v1731
        %v2141 = vpop.f32.mrb[0].mxu0
        %v2142 = vadd.f32 %v2029, %v2141
        %v2143 = vpop.f32.mrb[0].mxu0
        %v2144 = vadd.f32 %v2031, %v2143
        %v2145 = vpop.f32.mrb[0].mxu0
        %v2146 = vadd.f32 %v2033, %v2145
        %v2147 = vpop.f32.mrb[0].mxu0
        %v2148 = vadd.f32 %v2035, %v2147
        %2149 = vmatprep.mubr.bf16.mxu0 0
        %2150 = vmatmul.mubr.bf16.gmra.mrb[0].mxu0 %v1734
        %v2151 = vpop.f32.mrb[0].mxu0
        %v2152 = vadd.f32 %v2039, %v2151
        %v2153 = vpop.f32.mrb[0].mxu0
        %v2154 = vadd.f32 %v2041, %v2153
        %v2155 = vpop.f32.mrb[0].mxu0
        %v2156 = vadd.f32 %v2043, %v2155
        %v2157 = vpop.f32.mrb[0].mxu0
        %v2158 = vadd.f32 %v2045, %v2157
        %2159 = vmatprep.mubr.bf16.mxu0 0
        %2160 = vmatmul.mubr.bf16.gmra.mrb[0].mxu0 %v1737
        %v2161 = vpop.f32.mrb[0].mxu0
        %v2162 = vadd.f32 %v2049, %v2161
        %v2163 = vpop.f32.mrb[0].mxu0
        %v2164 = vadd.f32 %v2051, %v2163
        %v2165 = vpop.f32.mrb[0].mxu0
        %v2166 = vadd.f32 %v2053, %v2165
        %v2167 = vpop.f32.mrb[0].mxu0
        %v2168 = vadd.f32 %v2055, %v2167
        %2169 = vmatprep.mubr.bf16.mxu0 0
        %2170 = vmatmul.mubr.bf16.gmra.mrb[0].mxu0 %v1740
        %v2171 = vpop.f32.mrb[0].mxu0
        %v2172 = vadd.f32 %v2059, %v2171
        %v2173 = vpop.f32.mrb[0].mxu0
        %v2174 = vadd.f32 %v2061, %v2173
        %v2175 = vpop.f32.mrb[0].mxu0
        %v2176 = vadd.f32 %v2063, %v2175
        %v2177 = vpop.f32.mrb[0].mxu0
        %v2178 = vadd.f32 %v2065, %v2177
        %2179 = vmatprep.mubr.bf16.mxu0 0
        %2180 = vmatmul.mubr.bf16.gmra.mrb[0].mxu0 %v1743
        %v2181 = vpop.f32.mrb[0].mxu0
        %v2182 = vadd.f32 %v2069, %v2181
        %v2183 = vpop.f32.mrb[0].mxu0
        %v2184 = vadd.f32 %v2071, %v2183
        %v2185 = vpop.f32.mrb[0].mxu0
        %v2186 = vadd.f32 %v2073, %v2185
        %v2187 = vpop.f32.mrb[0].mxu0
        %v2188 = vadd.f32 %v2075, %v2187
        %2189 = vmatprep.mubr.bf16.mxu0 0
        %2190 = vmatmul.mubr.bf16.gmra.mrb[0].mxu0 %v1746
        %v2191 = vpop.f32.mrb[0].mxu0
        %v2192 = vadd.f32 %v2079, %v2191
        %v2193 = vpop.f32.mrb[0].mxu0
        %v2194 = vadd.f32 %v2081, %v2193
        %v2195 = vpop.f32.mrb[0].mxu0
        %v2196 = vadd.f32 %v2083, %v2195
        %v2197 = vpop.f32.mrb[0].mxu0
        %v2198 = vadd.f32 %v2085, %v2197
        %2199 = vdwg.mxu0
        %2200 = vmatprep.subr.bf16.mxu0 %v1334
        %2201 = vmatpush1.bf16.msra.mxu0 %v1333
        %2202 = vmatprep.subr.bf16.mxu0 %v1338
        %2203 = vmatpush1.bf16.msra.mxu0 %v1337
        %2204 = vmatprep.subr.bf16.mxu0 %v1342
        %2205 = vmatpush1.bf16.msra.mxu0 %v1341
        %2206 = vmatprep.subr.bf16.mxu0 %v1346
        %2207 = vmatpush1.bf16.msra.mxu0 %v1345
        %2208 = vmatprep.subr.bf16.mxu0 %v1350
        %2209 = vmatpush1.bf16.msra.mxu0 %v1349
        %2210 = vmatprep.subr.bf16.mxu0 %v1354
        %2211 = vmatpush1.bf16.msra.mxu0 %v1353
        %2212 = vmatprep.subr.bf16.mxu0 %v1358
        %2213 = vmatpush1.bf16.msra.mxu0 %v1357
        %2214 = vmatprep.subr.bf16.mxu0 %v1362
        %2215 = vmatpush1.bf16.msra.mxu0 %v1361
        %2216 = vmatprep.subr.bf16.mxu0 %v1366
        %2217 = vmatpush1.bf16.msra.mxu0 %v1365
        %2218 = vmatprep.subr.bf16.mxu0 %v1370
        %2219 = vmatpush1.bf16.msra.mxu0 %v1369
        %2220 = vmatprep.subr.bf16.mxu0 %v1374
        %2221 = vmatpush1.bf16.msra.mxu0 %v1373
        %2222 = vmatprep.subr.bf16.mxu0 %v1378
        %2223 = vmatpush1.bf16.msra.mxu0 %v1377
        %2224 = vmatprep.subr.bf16.mxu0 %v1382
        %2225 = vmatpush1.bf16.msra.mxu0 %v1381
        %2226 = vmatprep.subr.bf16.mxu0 %v1386
        %2227 = vmatpush1.bf16.msra.mxu0 %v1385
        %2228 = vmatprep.subr.bf16.mxu0 %v1390
        %2229 = vmatpush1.bf16.msra.mxu0 %v1389
        %2230 = vmatprep.subr.bf16.mxu0 %v1394
        %2231 = vmatpush1.bf16.msra.mxu0 %v1393
        %2232 = vmatprep.mubr.bf16.mxu0 %v470
        %2233 = vmatmul.mubr.bf16.gmra.mrb[0].mxu0 %v469
        %v2234 = vpop.f32.mrb[0].mxu0
        %v2235 = vadd.f32 %v734, %v2234
        %v2236 = vpop.f32.mrb[0].mxu0
        %v2237 = vadd.f32 %v738, %v2236
        %v2238 = vpop.f32.mrb[0].mxu0
        %v2239 = vadd.f32 %v734, %v2238
        %v2240 = vpop.f32.mrb[0].mxu0
        %v2241 = vadd.f32 %v738, %v2240
        %2242 = vmatprep.mubr.bf16.mxu0 %v477
        %2243 = vmatmul.mubr.bf16.gmra.mrb[0].mxu0 %v476
        %v2244 = vpop.f32.mrb[0].mxu0
        %v2245 = vadd.f32 %v734, %v2244
        %v2246 = vpop.f32.mrb[0].mxu0
        %v2247 = vadd.f32 %v738, %v2246
        %v2248 = vpop.f32.mrb[0].mxu0
        %v2249 = vadd.f32 %v734, %v2248
        %v2250 = vpop.f32.mrb[0].mxu0
        %v2251 = vadd.f32 %v738, %v2250
        %2252 = vmatprep.mubr.bf16.mxu0 %v484
        %2253 = vmatmul.mubr.bf16.gmra.mrb[0].mxu0 %v483
        %v2254 = vpop.f32.mrb[0].mxu0
        %v2255 = vadd.f32 %v734, %v2254
        %v2256 = vpop.f32.mrb[0].mxu0
        %v2257 = vadd.f32 %v738, %v2256
        %v2258 = vpop.f32.mrb[0].mxu0
        %v2259 = vadd.f32 %v734, %v2258
        %v2260 = vpop.f32.mrb[0].mxu0
        %v2261 = vadd.f32 %v738, %v2260
        %2262 = vmatprep.mubr.bf16.mxu0 %v491
        %2263 = vmatmul.mubr.bf16.gmra.mrb[0].mxu0 %v490
        %v2264 = vpop.f32.mrb[0].mxu0
        %v2265 = vadd.f32 %v734, %v2264
        %v2266 = vpop.f32.mrb[0].mxu0
        %v2267 = vadd.f32 %v738, %v2266
        %v2268 = vpop.f32.mrb[0].mxu0
        %v2269 = vadd.f32 %v734, %v2268
        %v2270 = vpop.f32.mrb[0].mxu0
        %v2271 = vadd.f32 %v738, %v2270
        %2272 = vmatprep.mubr.bf16.mxu0 %v498
        %2273 = vmatmul.mubr.bf16.gmra.mrb[0].mxu0 %v497
        %v2274 = vpop.f32.mrb[0].mxu0
        %v2275 = vadd.f32 %v734, %v2274
        %v2276 = vpop.f32.mrb[0].mxu0
        %v2277 = vadd.f32 %v738, %v2276
        %v2278 = vpop.f32.mrb[0].mxu0
        %v2279 = vadd.f32 %v734, %v2278
        %v2280 = vpop.f32.mrb[0].mxu0
        %v2281 = vadd.f32 %v738, %v2280
        %2282 = vmatprep.mubr.bf16.mxu0 %v505
        %2283 = vmatmul.mubr.bf16.gmra.mrb[0].mxu0 %v504
        %v2284 = vpop.f32.mrb[0].mxu0
        %v2285 = vadd.f32 %v734, %v2284
        %v2286 = vpop.f32.mrb[0].mxu0
        %v2287 = vadd.f32 %v738, %v2286
        %v2288 = vpop.f32.mrb[0].mxu0
        %v2289 = vadd.f32 %v734, %v2288
        %v2290 = vpop.f32.mrb[0].mxu0
        %v2291 = vadd.f32 %v738, %v2290
        %2292 = vmatprep.mubr.bf16.mxu0 %v512
        %2293 = vmatmul.mubr.bf16.gmra.mrb[0].mxu0 %v511
        %v2294 = vpop.f32.mrb[0].mxu0
        %v2295 = vadd.f32 %v734, %v2294
        %v2296 = vpop.f32.mrb[0].mxu0
        %v2297 = vadd.f32 %v738, %v2296
        %v2298 = vpop.f32.mrb[0].mxu0
        %v2299 = vadd.f32 %v734, %v2298
        %v2300 = vpop.f32.mrb[0].mxu0
        %v2301 = vadd.f32 %v738, %v2300
        %2302 = vmatprep.mubr.bf16.mxu0 %v519
        %2303 = vmatmul.mubr.bf16.gmra.mrb[0].mxu0 %v518
        %v2304 = vpop.f32.mrb[0].mxu0
        %v2305 = vadd.f32 %v734, %v2304
        %v2306 = vpop.f32.mrb[0].mxu0
        %v2307 = vadd.f32 %v738, %v2306
        %v2308 = vpop.f32.mrb[0].mxu0
        %v2309 = vadd.f32 %v734, %v2308
        %v2310 = vpop.f32.mrb[0].mxu0
        %v2311 = vadd.f32 %v738, %v2310
        %2312 = vdwg.mxu0
        %2313 = vmatprep.subr.bf16.mxu0 %v1398
        %2314 = vmatpush1.bf16.msra.mxu0 %v1397
        %2315 = vmatprep.subr.bf16.mxu0 %v1402
        %2316 = vmatpush1.bf16.msra.mxu0 %v1401
        %2317 = vmatprep.subr.bf16.mxu0 %v1406
        %2318 = vmatpush1.bf16.msra.mxu0 %v1405
        %2319 = vmatprep.subr.bf16.mxu0 %v1410
        %2320 = vmatpush1.bf16.msra.mxu0 %v1409
        %2321 = vmatprep.subr.bf16.mxu0 %v1414
        %2322 = vmatpush1.bf16.msra.mxu0 %v1413
        %2323 = vmatprep.subr.bf16.mxu0 %v1418
        %2324 = vmatpush1.bf16.msra.mxu0 %v1417
        %2325 = vmatprep.subr.bf16.mxu0 %v1422
        %2326 = vmatpush1.bf16.msra.mxu0 %v1421
        %2327 = vmatprep.subr.bf16.mxu0 %v1426
        %2328 = vmatpush1.bf16.msra.mxu0 %v1425
        %2329 = vmatprep.subr.bf16.mxu0 %v1430
        %2330 = vmatpush1.bf16.msra.mxu0 %v1429
        %2331 = vmatprep.subr.bf16.mxu0 %v1434
        %2332 = vmatpush1.bf16.msra.mxu0 %v1433
        %2333 = vmatprep.subr.bf16.mxu0 %v1438
        %2334 = vmatpush1.bf16.msra.mxu0 %v1437
        %2335 = vmatprep.subr.bf16.mxu0 %v1442
        %2336 = vmatpush1.bf16.msra.mxu0 %v1441
        %2337 = vmatprep.subr.bf16.mxu0 %v1446
        %2338 = vmatpush1.bf16.msra.mxu0 %v1445
        %2339 = vmatprep.subr.bf16.mxu0 %v1450
        %2340 = vmatpush1.bf16.msra.mxu0 %v1449
        %2341 = vmatprep.subr.bf16.mxu0 %v1454
        %2342 = vmatpush1.bf16.msra.mxu0 %v1453
        %2343 = vmatprep.subr.bf16.mxu0 %v1458
        %2344 = vmatpush1.bf16.msra.mxu0 %v1457
        %2345 = vmatprep.mubr.bf16.mxu0 %v472
        %2346 = vmatmul.mubr.bf16.gmra.mrb[0].mxu0 %v471
        %v2347 = vpop.f32.mrb[0].mxu0
        %v2348 = vadd.f32 %v2235, %v2347
        %v2349 = vpop.f32.mrb[0].mxu0
        %v2350 = vadd.f32 %v2237, %v2349
        %v2351 = vpop.f32.mrb[0].mxu0
        %v2352 = vadd.f32 %v2239, %v2351
        %v2353 = vpop.f32.mrb[0].mxu0
        %v2354 = vadd.f32 %v2241, %v2353
        %2355 = vmatprep.mubr.bf16.mxu0 %v479
        %2356 = vmatmul.mubr.bf16.gmra.mrb[0].mxu0 %v478
        %v2357 = vpop.f32.mrb[0].mxu0
        %v2358 = vadd.f32 %v2245, %v2357
        %v2359 = vpop.f32.mrb[0].mxu0
        %v2360 = vadd.f32 %v2247, %v2359
        %v2361 = vpop.f32.mrb[0].mxu0
        %v2362 = vadd.f32 %v2249, %v2361
        %v2363 = vpop.f32.mrb[0].mxu0
        %v2364 = vadd.f32 %v2251, %v2363
        %2365 = vmatprep.mubr.bf16.mxu0 %v486
        %2366 = vmatmul.mubr.bf16.gmra.mrb[0].mxu0 %v485
        %v2367 = vpop.f32.mrb[0].mxu0
        %v2368 = vadd.f32 %v2255, %v2367
        %v2369 = vpop.f32.mrb[0].mxu0
        %v2370 = vadd.f32 %v2257, %v2369
        %v2371 = vpop.f32.mrb[0].mxu0
        %v2372 = vadd.f32 %v2259, %v2371
        %v2373 = vpop.f32.mrb[0].mxu0
        %v2374 = vadd.f32 %v2261, %v2373
        %2375 = vmatprep.mubr.bf16.mxu0 %v493
        %2376 = vmatmul.mubr.bf16.gmra.mrb[0].mxu0 %v492
        %v2377 = vpop.f32.mrb[0].mxu0
        %v2378 = vadd.f32 %v2265, %v2377
        %v2379 = vpop.f32.mrb[0].mxu0
        %v2380 = vadd.f32 %v2267, %v2379
        %v2381 = vpop.f32.mrb[0].mxu0
        %v2382 = vadd.f32 %v2269, %v2381
        %v2383 = vpop.f32.mrb[0].mxu0
        %v2384 = vadd.f32 %v2271, %v2383
        %2385 = vmatprep.mubr.bf16.mxu0 %v500
        %2386 = vmatmul.mubr.bf16.gmra.mrb[0].mxu0 %v499
        %v2387 = vpop.f32.mrb[0].mxu0
        %v2388 = vadd.f32 %v2275, %v2387
        %v2389 = vpop.f32.mrb[0].mxu0
        %v2390 = vadd.f32 %v2277, %v2389
        %v2391 = vpop.f32.mrb[0].mxu0
        %v2392 = vadd.f32 %v2279, %v2391
        %v2393 = vpop.f32.mrb[0].mxu0
        %v2394 = vadd.f32 %v2281, %v2393
        %2395 = vmatprep.mubr.bf16.mxu0 %v507
        %2396 = vmatmul.mubr.bf16.gmra.mrb[0].mxu0 %v506
        %v2397 = vpop.f32.mrb[0].mxu0
        %v2398 = vadd.f32 %v2285, %v2397
        %v2399 = vpop.f32.mrb[0].mxu0
        %v2400 = vadd.f32 %v2287, %v2399
        %v2401 = vpop.f32.mrb[0].mxu0
        %v2402 = vadd.f32 %v2289, %v2401
        %v2403 = vpop.f32.mrb[0].mxu0
        %v2404 = vadd.f32 %v2291, %v2403
        %2405 = vmatprep.mubr.bf16.mxu0 %v514
        %2406 = vmatmul.mubr.bf16.gmra.mrb[0].mxu0 %v513
        %v2407 = vpop.f32.mrb[0].mxu0
        %v2408 = vadd.f32 %v2295, %v2407
        %v2409 = vpop.f32.mrb[0].mxu0
        %v2410 = vadd.f32 %v2297, %v2409
        %v2411 = vpop.f32.mrb[0].mxu0
        %v2412 = vadd.f32 %v2299, %v2411
        %v2413 = vpop.f32.mrb[0].mxu0
        %v2414 = vadd.f32 %v2301, %v2413
        %2415 = vmatprep.mubr.bf16.mxu0 %v521
        %2416 = vmatmul.mubr.bf16.gmra.mrb[0].mxu0 %v520
        %v2417 = vpop.f32.mrb[0].mxu0
        %v2418 = vadd.f32 %v2305, %v2417
        %v2419 = vpop.f32.mrb[0].mxu0
        %v2420 = vadd.f32 %v2307, %v2419
        %v2421 = vpop.f32.mrb[0].mxu0
        %v2422 = vadd.f32 %v2309, %v2421
        %v2423 = vpop.f32.mrb[0].mxu0
        %v2424 = vadd.f32 %v2311, %v2423
        %2425 = vdwg.mxu0
        %2426 = vmatprep.subr.bf16.mxu0 %v1462
        %2427 = vmatpush1.bf16.msra.mxu0 %v1461
        %2428 = vmatprep.subr.bf16.mxu0 %v1466
        %2429 = vmatpush1.bf16.msra.mxu0 %v1465
        %2430 = vmatprep.subr.bf16.mxu0 %v1470
        %2431 = vmatpush1.bf16.msra.mxu0 %v1469
        %2432 = vmatprep.subr.bf16.mxu0 %v1474
        %2433 = vmatpush1.bf16.msra.mxu0 %v1473
        %2434 = vmatprep.subr.bf16.mxu0 %v1478
        %2435 = vmatpush1.bf16.msra.mxu0 %v1477
        %2436 = vmatprep.subr.bf16.mxu0 %v1482
        %2437 = vmatpush1.bf16.msra.mxu0 %v1481
        %2438 = vmatprep.subr.bf16.mxu0 %v1486
        %2439 = vmatpush1.bf16.msra.mxu0 %v1485
        %2440 = vmatprep.subr.bf16.mxu0 %v1490
        %2441 = vmatpush1.bf16.msra.mxu0 %v1489
        %2442 = vmatprep.subr.bf16.mxu0 %v1494
        %2443 = vmatpush1.bf16.msra.mxu0 %v1493
        %2444 = vmatprep.subr.bf16.mxu0 %v1498
        %2445 = vmatpush1.bf16.msra.mxu0 %v1497
        %2446 = vmatprep.subr.bf16.mxu0 %v1502
        %2447 = vmatpush1.bf16.msra.mxu0 %v1501
        %2448 = vmatprep.subr.bf16.mxu0 %v1506
        %2449 = vmatpush1.bf16.msra.mxu0 %v1505
        %2450 = vmatprep.subr.bf16.mxu0 %v1510
        %2451 = vmatpush1.bf16.msra.mxu0 %v1509
        %2452 = vmatprep.subr.bf16.mxu0 %v1514
        %2453 = vmatpush1.bf16.msra.mxu0 %v1513
        %2454 = vmatprep.subr.bf16.mxu0 %v1518
        %2455 = vmatpush1.bf16.msra.mxu0 %v1517
        %2456 = vmatprep.subr.bf16.mxu0 %v1522
        %2457 = vmatpush1.bf16.msra.mxu0 %v1521
        %2458 = vmatprep.mubr.bf16.mxu0 %v474
        %2459 = vmatmul.mubr.bf16.gmra.mrb[0].mxu0 %v473
        %v2460 = vpop.f32.mrb[0].mxu0
        %v2461 = vadd.f32 %v2348, %v2460
        %v2462 = vpop.f32.mrb[0].mxu0
        %v2463 = vadd.f32 %v2350, %v2462
        %v2464 = vpop.f32.mrb[0].mxu0
        %v2465 = vadd.f32 %v2352, %v2464
        %v2466 = vpop.f32.mrb[0].mxu0
        %v2467 = vadd.f32 %v2354, %v2466
        %2468 = vmatprep.mubr.bf16.mxu0 %v481
        %2469 = vmatmul.mubr.bf16.gmra.mrb[0].mxu0 %v480
        %v2470 = vpop.f32.mrb[0].mxu0
        %v2471 = vadd.f32 %v2358, %v2470
        %v2472 = vpop.f32.mrb[0].mxu0
        %v2473 = vadd.f32 %v2360, %v2472
        %v2474 = vpop.f32.mrb[0].mxu0
        %v2475 = vadd.f32 %v2362, %v2474
        %v2476 = vpop.f32.mrb[0].mxu0
        %v2477 = vadd.f32 %v2364, %v2476
        %2478 = vmatprep.mubr.bf16.mxu0 %v488
        %2479 = vmatmul.mubr.bf16.gmra.mrb[0].mxu0 %v487
        %v2480 = vpop.f32.mrb[0].mxu0
        %v2481 = vadd.f32 %v2368, %v2480
        %v2482 = vpop.f32.mrb[0].mxu0
        %v2483 = vadd.f32 %v2370, %v2482
        %v2484 = vpop.f32.mrb[0].mxu0
        %v2485 = vadd.f32 %v2372, %v2484
        %v2486 = vpop.f32.mrb[0].mxu0
        %v2487 = vadd.f32 %v2374, %v2486
        %2488 = vmatprep.mubr.bf16.mxu0 %v495
        %2489 = vmatmul.mubr.bf16.gmra.mrb[0].mxu0 %v494
        %v2490 = vpop.f32.mrb[0].mxu0
        %v2491 = vadd.f32 %v2378, %v2490
        %v2492 = vpop.f32.mrb[0].mxu0
        %v2493 = vadd.f32 %v2380, %v2492
        %v2494 = vpop.f32.mrb[0].mxu0
        %v2495 = vadd.f32 %v2382, %v2494
        %v2496 = vpop.f32.mrb[0].mxu0
        %v2497 = vadd.f32 %v2384, %v2496
        %2498 = vmatprep.mubr.bf16.mxu0 %v502
        %2499 = vmatmul.mubr.bf16.gmra.mrb[0].mxu0 %v501
        %v2500 = vpop.f32.mrb[0].mxu0
        %v2501 = vadd.f32 %v2388, %v2500
        %v2502 = vpop.f32.mrb[0].mxu0
        %v2503 = vadd.f32 %v2390, %v2502
        %v2504 = vpop.f32.mrb[0].mxu0
        %v2505 = vadd.f32 %v2392, %v2504
        %v2506 = vpop.f32.mrb[0].mxu0
        %v2507 = vadd.f32 %v2394, %v2506
        %2508 = vmatprep.mubr.bf16.mxu0 %v509
        %2509 = vmatmul.mubr.bf16.gmra.mrb[0].mxu0 %v508
        %v2510 = vpop.f32.mrb[0].mxu0
        %v2511 = vadd.f32 %v2398, %v2510
        %v2512 = vpop.f32.mrb[0].mxu0
        %v2513 = vadd.f32 %v2400, %v2512
        %v2514 = vpop.f32.mrb[0].mxu0
        %v2515 = vadd.f32 %v2402, %v2514
        %v2516 = vpop.f32.mrb[0].mxu0
        %v2517 = vadd.f32 %v2404, %v2516
        %2518 = vmatprep.mubr.bf16.mxu0 %v516
        %2519 = vmatmul.mubr.bf16.gmra.mrb[0].mxu0 %v515
        %v2520 = vpop.f32.mrb[0].mxu0
        %v2521 = vadd.f32 %v2408, %v2520
        %v2522 = vpop.f32.mrb[0].mxu0
        %v2523 = vadd.f32 %v2410, %v2522
        %v2524 = vpop.f32.mrb[0].mxu0
        %v2525 = vadd.f32 %v2412, %v2524
        %v2526 = vpop.f32.mrb[0].mxu0
        %v2527 = vadd.f32 %v2414, %v2526
        %2528 = vmatprep.mubr.bf16.mxu0 %v523
        %2529 = vmatmul.mubr.bf16.gmra.mrb[0].mxu0 %v522
        %v2530 = vpop.f32.mrb[0].mxu0
        %v2531 = vadd.f32 %v2418, %v2530
        %v2532 = vpop.f32.mrb[0].mxu0
        %v2533 = vadd.f32 %v2420, %v2532
        %v2534 = vpop.f32.mrb[0].mxu0
        %v2535 = vadd.f32 %v2422, %v2534
        %v2536 = vpop.f32.mrb[0].mxu0
        %v2537 = vadd.f32 %v2424, %v2536
        %2538 = vdwg.mxu0
        %2539 = vmatprep.subr.bf16.mxu0 %v1526
        %2540 = vmatpush1.bf16.msra.mxu0 %v1525
        %2541 = vmatprep.subr.bf16.mxu0 0
        %2542 = vmatpush1.bf16.msra.mxu0 0
        %2543 = vmatprep.subr.bf16.mxu0 0
        %2544 = vmatpush1.bf16.msra.mxu0 0
        %2545 = vmatprep.subr.bf16.mxu0 0
        %2546 = vmatpush1.bf16.msra.mxu0 0
        %2547 = vmatprep.subr.bf16.mxu0 0
        %2548 = vmatpush1.bf16.msra.mxu0 0
        %2549 = vmatprep.subr.bf16.mxu0 0
        %2550 = vmatpush1.bf16.msra.mxu0 0
        %2551 = vmatprep.subr.bf16.mxu0 0
        %2552 = vmatpush1.bf16.msra.mxu0 0
        %2553 = vmatprep.subr.bf16.mxu0 0
        %2554 = vmatpush1.bf16.msra.mxu0 0
        %2555 = vmatprep.subr.bf16.mxu0 0
        %2556 = vmatpush1.bf16.msra.mxu0 0
        %2557 = vmatprep.subr.bf16.mxu0 0
        %2558 = vmatpush1.bf16.msra.mxu0 0
        %2559 = vmatprep.subr.bf16.mxu0 0
        %2560 = vmatpush1.bf16.msra.mxu0 0
        %2561 = vmatprep.subr.bf16.mxu0 0
        %2562 = vmatpush1.bf16.msra.mxu0 0
        %2563 = vmatprep.subr.bf16.mxu0 0
        %2564 = vmatpush1.bf16.msra.mxu0 0
        %2565 = vmatprep.subr.bf16.mxu0 0
        %2566 = vmatpush1.bf16.msra.mxu0 0
        %2567 = vmatprep.subr.bf16.mxu0 0
        %2568 = vmatpush1.bf16.msra.mxu0 0
        %2569 = vmatprep.subr.bf16.mxu0 0
        %2570 = vmatpush1.bf16.msra.mxu0 0
        %2571 = vmatprep.mubr.bf16.mxu0 0
        %2572 = vmatmul.mubr.bf16.gmra.mrb[0].mxu0 %v1725
        %v2573 = vpop.f32.mrb[0].mxu0
        %v2574 = vadd.f32 %v2461, %v2573
        %v2575 = vpop.f32.mrb[0].mxu0
        %v2576 = vadd.f32 %v2463, %v2575
        %v2577 = vpop.f32.mrb[0].mxu0
        %v2578 = vadd.f32 %v2465, %v2577
        %v2579 = vpop.f32.mrb[0].mxu0
        %v2580 = vadd.f32 %v2467, %v2579
        %2581 = vmatprep.mubr.bf16.mxu0 0
        %2582 = vmatmul.mubr.bf16.gmra.mrb[0].mxu0 %v1728
        %v2583 = vpop.f32.mrb[0].mxu0
        %v2584 = vadd.f32 %v2471, %v2583
        %v2585 = vpop.f32.mrb[0].mxu0
        %v2586 = vadd.f32 %v2473, %v2585
        %v2587 = vpop.f32.mrb[0].mxu0
        %v2588 = vadd.f32 %v2475, %v2587
        %v2589 = vpop.f32.mrb[0].mxu0
        %v2590 = vadd.f32 %v2477, %v2589
        %2591 = vmatprep.mubr.bf16.mxu0 0
        %2592 = vmatmul.mubr.bf16.gmra.mrb[0].mxu0 %v1731
        %v2593 = vpop.f32.mrb[0].mxu0
        %v2594 = vadd.f32 %v2481, %v2593
        %v2595 = vpop.f32.mrb[0].mxu0
        %v2596 = vadd.f32 %v2483, %v2595
        %v2597 = vpop.f32.mrb[0].mxu0
        %v2598 = vadd.f32 %v2485, %v2597
        %v2599 = vpop.f32.mrb[0].mxu0
        %v2600 = vadd.f32 %v2487, %v2599
        %2601 = vmatprep.mubr.bf16.mxu0 0
        %2602 = vmatmul.mubr.bf16.gmra.mrb[0].mxu0 %v1734
        %v2603 = vpop.f32.mrb[0].mxu0
        %v2604 = vadd.f32 %v2491, %v2603
        %v2605 = vpop.f32.mrb[0].mxu0
        %v2606 = vadd.f32 %v2493, %v2605
        %v2607 = vpop.f32.mrb[0].mxu0
        %v2608 = vadd.f32 %v2495, %v2607
        %v2609 = vpop.f32.mrb[0].mxu0
        %v2610 = vadd.f32 %v2497, %v2609
        %2611 = vmatprep.mubr.bf16.mxu0 0
        %2612 = vmatmul.mubr.bf16.gmra.mrb[0].mxu0 %v1737
        %v2613 = vpop.f32.mrb[0].mxu0
        %v2614 = vadd.f32 %v2501, %v2613
        %v2615 = vpop.f32.mrb[0].mxu0
        %v2616 = vadd.f32 %v2503, %v2615
        %v2617 = vpop.f32.mrb[0].mxu0
        %v2618 = vadd.f32 %v2505, %v2617
        %v2619 = vpop.f32.mrb[0].mxu0
        %v2620 = vadd.f32 %v2507, %v2619
        %2621 = vmatprep.mubr.bf16.mxu0 0
        %2622 = vmatmul.mubr.bf16.gmra.mrb[0].mxu0 %v1740
        %v2623 = vpop.f32.mrb[0].mxu0
        %v2624 = vadd.f32 %v2511, %v2623
        %v2625 = vpop.f32.mrb[0].mxu0
        %v2626 = vadd.f32 %v2513, %v2625
        %v2627 = vpop.f32.mrb[0].mxu0
        %v2628 = vadd.f32 %v2515, %v2627
        %v2629 = vpop.f32.mrb[0].mxu0
        %v2630 = vadd.f32 %v2517, %v2629
        %2631 = vmatprep.mubr.bf16.mxu0 0
        %2632 = vmatmul.mubr.bf16.gmra.mrb[0].mxu0 %v1743
        %v2633 = vpop.f32.mrb[0].mxu0
        %v2634 = vadd.f32 %v2521, %v2633
        %v2635 = vpop.f32.mrb[0].mxu0
        %v2636 = vadd.f32 %v2523, %v2635
        %v2637 = vpop.f32.mrb[0].mxu0
        %v2638 = vadd.f32 %v2525, %v2637
        %v2639 = vpop.f32.mrb[0].mxu0
        %v2640 = vadd.f32 %v2527, %v2639
        %2641 = vmatprep.mubr.bf16.mxu0 0
        %2642 = vmatmul.mubr.bf16.gmra.mrb[0].mxu0 %v1746
        %v2643 = vpop.f32.mrb[0].mxu0
        %v2644 = vadd.f32 %v2531, %v2643
        %v2645 = vpop.f32.mrb[0].mxu0
        %v2646 = vadd.f32 %v2533, %v2645
        %v2647 = vpop.f32.mrb[0].mxu0
        %v2648 = vadd.f32 %v2535, %v2647
        %v2649 = vpop.f32.mrb[0].mxu0
        %v2650 = vadd.f32 %v2537, %v2649
        %2651 = vdwg.mxu0
        %v2652 = vmax.f32 %v2122, 0.0
        %v2653 = vmax.f32 %v2124, 0.0
        %v2654 = vmax.f32 %v2574, 0.0
        %v2655 = vmax.f32 %v2576, 0.0
        %v2656 = vmax.f32 %v2126, 0.0
        %v2657 = vmax.f32 %v2128, 0.0
        %v2658 = vmax.f32 %v2578, 0.0
        %v2659 = vmax.f32 %v2580, 0.0
        %v2660 = vmax.f32 %v2132, 0.0
        %v2661 = vmax.f32 %v2134, 0.0
        %v2662 = vmax.f32 %v2584, 0.0
        %v2663 = vmax.f32 %v2586, 0.0
        %v2664 = vmax.f32 %v2136, 0.0
        %v2665 = vmax.f32 %v2138, 0.0
        %v2666 = vmax.f32 %v2588, 0.0
        %v2667 = vmax.f32 %v2590, 0.0
        %v2668 = vmax.f32 %v2142, 0.0
        %v2669 = vmax.f32 %v2144, 0.0
        %v2670 = vmax.f32 %v2594, 0.0
        %v2671 = vmax.f32 %v2596, 0.0
        %v2672 = vmax.f32 %v2146, 0.0
        %v2673 = vmax.f32 %v2148, 0.0
        %v2674 = vmax.f32 %v2598, 0.0
        %v2675 = vmax.f32 %v2600, 0.0
        %v2676 = vmax.f32 %v2152, 0.0
        %v2677 = vmax.f32 %v2154, 0.0
        %v2678 = vmax.f32 %v2604, 0.0
        %v2679 = vmax.f32 %v2606, 0.0
        %v2680 = vmax.f32 %v2156, 0.0
        %v2681 = vmax.f32 %v2158, 0.0
        %v2682 = vmax.f32 %v2608, 0.0
        %v2683 = vmax.f32 %v2610, 0.0
        %v2684 = vmax.f32 %v2162, 0.0
        %v2685 = vmax.f32 %v2164, 0.0
        %v2686 = vmax.f32 %v2614, 0.0
        %v2687 = vmax.f32 %v2616, 0.0
        %v2688 = vmax.f32 %v2166, 0.0
        %v2689 = vmax.f32 %v2168, 0.0
        %v2690 = vmax.f32 %v2618, 0.0
        %v2691 = vmax.f32 %v2620, 0.0
        %v2692 = vmax.f32 %v2172, 0.0
        %v2693 = vmax.f32 %v2174, 0.0
        %v2694 = vmax.f32 %v2624, 0.0
        %v2695 = vmax.f32 %v2626, 0.0
        %v2696 = vmax.f32 %v2176, 0.0
        %v2697 = vmax.f32 %v2178, 0.0
        %v2698 = vmax.f32 %v2628, 0.0
        %v2699 = vmax.f32 %v2630, 0.0
        %v2700 = vmax.f32 %v2182, 0.0
        %v2701 = vmax.f32 %v2184, 0.0
        %v2702 = vmax.f32 %v2634, 0.0
        %v2703 = vmax.f32 %v2636, 0.0
        %v2704 = vmax.f32 %v2186, 0.0
        %v2705 = vmax.f32 %v2188, 0.0
        %v2706 = vmax.f32 %v2638, 0.0
        %v2707 = vmax.f32 %v2640, 0.0
        %v2708 = vmax.f32 %v2192, 0.0
        %v2709 = vmax.f32 %v2194, 0.0
        %v2710 = vmax.f32 %v2644, 0.0
        %v2711 = vmax.f32 %v2646, 0.0
        %v2712 = vmax.f32 %v2196, 0.0
        %v2713 = vmax.f32 %v2198, 0.0
        %v2714 = vmax.f32 %v2648, 0.0
        %v2715 = vmax.f32 %v2650, 0.0
        %v2716 = vpack.c.bf16 %v2656, %v2652
        %v2717 = vpack.c.bf16 %v2657, %v2653
        %v2718 = vpack.c.bf16 %v2658, %v2654
        %v2719 = vpack.c.bf16 %v2659, %v2655
        %v2720 = vpack.c.bf16 %v2664, %v2660
        %v2721 = vpack.c.bf16 %v2665, %v2661
        %v2722 = vpack.c.bf16 %v2666, %v2662
        %v2723 = vpack.c.bf16 %v2667, %v2663
        %v2724 = vpack.c.bf16 %v2672, %v2668
        %v2725 = vpack.c.bf16 %v2673, %v2669
        %v2726 = vpack.c.bf16 %v2674, %v2670
        %v2727 = vpack.c.bf16 %v2675, %v2671
        %v2728 = vpack.c.bf16 %v2680, %v2676
        %v2729 = vpack.c.bf16 %v2681, %v2677
        %v2730 = vpack.c.bf16 %v2682, %v2678
        %v2731 = vpack.c.bf16 %v2683, %v2679
        %v2732 = vpack.c.bf16 %v2688, %v2684
        %v2733 = vpack.c.bf16 %v2689, %v2685
        %v2734 = vpack.c.bf16 %v2690, %v2686
        %v2735 = vpack.c.bf16 %v2691, %v2687
        %v2736 = vpack.c.bf16 %v2696, %v2692
        %v2737 = vpack.c.bf16 %v2697, %v2693
        %v2738 = vpack.c.bf16 %v2698, %v2694
        %v2739 = vpack.c.bf16 %v2699, %v2695
        %v2740 = vpack.c.bf16 %v2704, %v2700
        %v2741 = vpack.c.bf16 %v2705, %v2701
        %v2742 = vpack.c.bf16 %v2706, %v2702
        %v2743 = vpack.c.bf16 %v2707, %v2703
        %v2744 = vpack.c.bf16 %v2712, %v2708
        %v2745 = vpack.c.bf16 %v2713, %v2709
        %v2746 = vpack.c.bf16 %v2714, %v2710
        %v2747 = vpack.c.bf16 %v2715, %v2711
        %v2748 = vld [vmem:[#allocation6] sm:$0xff]
        %v2749 = vld [vmem:[#allocation6 + $0x8] sm:$0xff]
        %v2750 = vld [vmem:[#allocation6 + $0x10] sm:$0xff]
        %v2751 = vld [vmem:[#allocation6 + $0x18] sm:$0xff]
        %v2752 = vld [vmem:[#allocation6 + $0x20] sm:$0xff]
        %v2753 = vld [vmem:[#allocation6 + $0x28] sm:$0xff]
        %v2754 = vld [vmem:[#allocation6 + $0x30] sm:$0xff]
        %v2755 = vld [vmem:[#allocation6 + $0x38] sm:$0xff]
        %v2756 = vld [vmem:[#allocation6 + $0x40] sm:$0xff]
        %v2757 = vld [vmem:[#allocation6 + $0x48] sm:$0xff]
        %v2758 = vld [vmem:[#allocation6 + $0x50] sm:$0xff]
        %v2759 = vld [vmem:[#allocation6 + $0x58] sm:$0xff]
        %v2760 = vld [vmem:[#allocation6 + $0x60] sm:$0xff]
        %v2761 = vld [vmem:[#allocation6 + $0x68] sm:$0xff]
        %v2762 = vld [vmem:[#allocation6 + $0x70] sm:$0xff]
        %v2763 = vld [vmem:[#allocation6 + $0x78] sm:$0xff]
        %v2764 = vld [vmem:[#allocation6 + $0x80] sm:$0xff]
        %v2765 = vld [vmem:[#allocation6 + $0x88] sm:$0xff]
        %v2766 = vld [vmem:[#allocation6 + $0x90] sm:$0xff]
        %v2767 = vld [vmem:[#allocation6 + $0x98] sm:$0xff]
        %v2768 = vld [vmem:[#allocation6 + $0xa0] sm:$0xff]
        %v2769 = vld [vmem:[#allocation6 + $0xa8] sm:$0xff]
        %v2770 = vld [vmem:[#allocation6 + $0xb0] sm:$0xff]
        %v2771 = vld [vmem:[#allocation6 + $0xb8] sm:$0xff]
        %v2772 = vld [vmem:[#allocation6 + $0xc0] sm:$0xff]
        %v2773 = vld [vmem:[#allocation6 + $0xc8] sm:$0xff]
        %v2774 = vld [vmem:[#allocation6 + $0xd0] sm:$0xff]
        %v2775 = vld [vmem:[#allocation6 + $0xd8] sm:$0xff]
        %v2776 = vld [vmem:[#allocation6 + $0xe0] sm:$0xff]
        %v2777 = vld [vmem:[#allocation6 + $0xe8] sm:$0xff]
        %v2778 = vld [vmem:[#allocation6 + $0xf0] sm:$0xff]
        %v2779 = vld [vmem:[#allocation6 + $0xf8] sm:$0xff]
        %v2780 = vld [vmem:[#allocation6 + $0x100] sm:$0xff]
        %v2781 = vld [vmem:[#allocation6 + $0x108] sm:$0xff]
        %v2782 = vld [vmem:[#allocation6 + $0x110] sm:$0xff]
        %v2783 = vld [vmem:[#allocation6 + $0x118] sm:$0xff]
        %v2784 = vld [vmem:[#allocation6 + $0x120] sm:$0xff]
        %v2785 = vld [vmem:[#allocation6 + $0x128] sm:$0xff]
        %v2786 = vld [vmem:[#allocation6 + $0x130] sm:$0xff]
        %v2787 = vld [vmem:[#allocation6 + $0x138] sm:$0xff]
        %v2788 = vld [vmem:[#allocation6 + $0x140] sm:$0xff]
        %v2789 = vld [vmem:[#allocation6 + $0x148] sm:$0xff]
        %v2790 = vld [vmem:[#allocation6 + $0x150] sm:$0xff]
        %v2791 = vld [vmem:[#allocation6 + $0x158] sm:$0xff]
        %v2792 = vld [vmem:[#allocation6 + $0x160] sm:$0xff]
        %v2793 = vld [vmem:[#allocation6 + $0x168] sm:$0xff]
        %v2794 = vld [vmem:[#allocation6 + $0x170] sm:$0xff]
        %v2795 = vld [vmem:[#allocation6 + $0x178] sm:$0xff]
        %v2796 = vld [vmem:[#allocation6 + $0x180] sm:$0xff]
        %v2797 = vld [vmem:[#allocation6 + $0x188] sm:$0xff]
        %v2798 = vld [vmem:[#allocation6 + $0x190] sm:$0xff]
        %v2799 = vld [vmem:[#allocation6 + $0x198] sm:$0xff]
        %v2800 = vld [vmem:[#allocation6 + $0x1a0] sm:$0xff]
        %v2801 = vld [vmem:[#allocation6 + $0x1a8] sm:$0xff]
        %v2802 = vld [vmem:[#allocation6 + $0x1b0] sm:$0xff]
        %v2803 = vld [vmem:[#allocation6 + $0x1b8] sm:$0xff]
        %v2804 = vld [vmem:[#allocation6 + $0x1c0] sm:$0xff]
        %v2805 = vld [vmem:[#allocation6 + $0x1c8] sm:$0xff]
        %v2806 = vld [vmem:[#allocation6 + $0x1d0] sm:$0xff]
        %v2807 = vld [vmem:[#allocation6 + $0x1d8] sm:$0xff]
        %v2808 = vld [vmem:[#allocation6 + $0x1e0] sm:$0xff]
        %v2809 = vld [vmem:[#allocation6 + $0x1e8] sm:$0xff]
        %v2810 = vld [vmem:[#allocation6 + $0x1f0] sm:$0xff]
        %v2811 = vld [vmem:[#allocation6 + $0x1f8] sm:$0xff]
        %v2812 = vld [vmem:[%s4] sm:$0x3]
        %v2814 = vlaneseq
        %v2815 = vshrl.u32 %v2814, 7
        %v2816 = vsub.s32 0, %v2815
        %v2817 = vrot.slane %v2812, %v2816
        %v2818 = vlaneseq
        %v2819 = vshrl.u32 %v2818, 7
        %v2820 = vsub.s32 1, %v2819
        %v2821 = vrot.slane %v2812, %v2820
        %v2888 = vunpack.c.l.b16 %v2748
        %v2889 = vunpack.c.h.b16 %v2748
        %v2890 = vunpack.c.l.b16 %v2749
        %v2891 = vunpack.c.h.b16 %v2749
        %v2892 = vunpack.c.l.b16 %v2750
        %v2893 = vunpack.c.h.b16 %v2750
        %v2894 = vunpack.c.l.b16 %v2751
        %v2895 = vunpack.c.h.b16 %v2751
        %v2896 = vunpack.c.l.b16 %v2752
        %v2897 = vunpack.c.h.b16 %v2752
        %v2898 = vunpack.c.l.b16 %v2753
        %v2899 = vunpack.c.h.b16 %v2753
        %v2900 = vunpack.c.l.b16 %v2754
        %v2901 = vunpack.c.h.b16 %v2754
        %v2902 = vunpack.c.l.b16 %v2755
        %v2903 = vunpack.c.h.b16 %v2755
        %v2904 = vunpack.c.l.b16 %v2756
        %v2905 = vunpack.c.h.b16 %v2756
        %v2906 = vunpack.c.l.b16 %v2757
        %v2907 = vunpack.c.h.b16 %v2757
        %v2908 = vunpack.c.l.b16 %v2758
        %v2909 = vunpack.c.h.b16 %v2758
        %v2910 = vunpack.c.l.b16 %v2759
        %v2911 = vunpack.c.h.b16 %v2759
        %v2912 = vunpack.c.l.b16 %v2760
        %v2913 = vunpack.c.h.b16 %v2760
        %v2914 = vunpack.c.l.b16 %v2761
        %v2915 = vunpack.c.h.b16 %v2761
        %v2916 = vunpack.c.l.b16 %v2762
        %v2917 = vunpack.c.h.b16 %v2762
        %v2918 = vunpack.c.l.b16 %v2763
        %v2919 = vunpack.c.h.b16 %v2763
        %v2920 = vunpack.c.l.b16 %v2764
        %v2921 = vunpack.c.h.b16 %v2764
        %v2922 = vunpack.c.l.b16 %v2765
        %v2923 = vunpack.c.h.b16 %v2765
        %v2924 = vunpack.c.l.b16 %v2766
        %v2925 = vunpack.c.h.b16 %v2766
        %v2926 = vunpack.c.l.b16 %v2767
        %v2927 = vunpack.c.h.b16 %v2767
        %v2928 = vunpack.c.l.b16 %v2768
        %v2929 = vunpack.c.h.b16 %v2768
        %v2930 = vunpack.c.l.b16 %v2769
        %v2931 = vunpack.c.h.b16 %v2769
        %v2932 = vunpack.c.l.b16 %v2770
        %v2933 = vunpack.c.h.b16 %v2770
        %v2934 = vunpack.c.l.b16 %v2771
        %v2935 = vunpack.c.h.b16 %v2771
        %v2936 = vunpack.c.l.b16 %v2772
        %v2937 = vunpack.c.h.b16 %v2772
        %v2938 = vunpack.c.l.b16 %v2773
        %v2939 = vunpack.c.h.b16 %v2773
        %v2940 = vunpack.c.l.b16 %v2774
        %v2941 = vunpack.c.h.b16 %v2774
        %v2942 = vunpack.c.l.b16 %v2775
        %v2943 = vunpack.c.h.b16 %v2775
        %v2944 = vunpack.c.l.b16 %v2776
        %v2945 = vunpack.c.h.b16 %v2776
        %v2946 = vunpack.c.l.b16 %v2777
        %v2947 = vunpack.c.h.b16 %v2777
        %v2948 = vunpack.c.l.b16 %v2778
        %v2949 = vunpack.c.h.b16 %v2778
        %v2950 = vunpack.c.l.b16 %v2779
        %v2951 = vunpack.c.h.b16 %v2779
        %v2952 = vunpack.c.l.b16 %v2780
        %v2953 = vunpack.c.h.b16 %v2780
        %v2954 = vunpack.c.l.b16 %v2781
        %v2955 = vunpack.c.h.b16 %v2781
        %v2956 = vunpack.c.l.b16 %v2782
        %v2957 = vunpack.c.h.b16 %v2782
        %v2958 = vunpack.c.l.b16 %v2783
        %v2959 = vunpack.c.h.b16 %v2783
        %v2960 = vunpack.c.l.b16 %v2784
        %v2961 = vunpack.c.h.b16 %v2784
        %v2962 = vunpack.c.l.b16 %v2785
        %v2963 = vunpack.c.h.b16 %v2785
        %v2964 = vunpack.c.l.b16 %v2786
        %v2965 = vunpack.c.h.b16 %v2786
        %v2966 = vunpack.c.l.b16 %v2787
        %v2967 = vunpack.c.h.b16 %v2787
        %v2968 = vunpack.c.l.b16 %v2788
        %v2969 = vunpack.c.h.b16 %v2788
        %v2970 = vunpack.c.l.b16 %v2789
        %v2971 = vunpack.c.h.b16 %v2789
        %v2972 = vunpack.c.l.b16 %v2790
        %v2973 = vunpack.c.h.b16 %v2790
        %v2974 = vunpack.c.l.b16 %v2791
        %v2975 = vunpack.c.h.b16 %v2791
        %v2976 = vunpack.c.l.b16 %v2792
        %v2977 = vunpack.c.h.b16 %v2792
        %v2978 = vunpack.c.l.b16 %v2793
        %v2979 = vunpack.c.h.b16 %v2793
        %v2980 = vunpack.c.l.b16 %v2794
        %v2981 = vunpack.c.h.b16 %v2794
        %v2982 = vunpack.c.l.b16 %v2795
        %v2983 = vunpack.c.h.b16 %v2795
        %v2984 = vunpack.c.l.b16 %v2796
        %v2985 = vunpack.c.h.b16 %v2796
        %v2986 = vunpack.c.l.b16 %v2797
        %v2987 = vunpack.c.h.b16 %v2797
        %v2988 = vunpack.c.l.b16 %v2798
        %v2989 = vunpack.c.h.b16 %v2798
        %v2990 = vunpack.c.l.b16 %v2799
        %v2991 = vunpack.c.h.b16 %v2799
        %v2992 = vunpack.c.l.b16 %v2800
        %v2993 = vunpack.c.h.b16 %v2800
        %v2994 = vunpack.c.l.b16 %v2801
        %v2995 = vunpack.c.h.b16 %v2801
        %v2996 = vunpack.c.l.b16 %v2802
        %v2997 = vunpack.c.h.b16 %v2802
        %v2998 = vunpack.c.l.b16 %v2803
        %v2999 = vunpack.c.h.b16 %v2803
        %v3000 = vunpack.c.l.b16 %v2804
        %v3001 = vunpack.c.h.b16 %v2804
        %v3002 = vunpack.c.l.b16 %v2805
        %v3003 = vunpack.c.h.b16 %v2805
        %v3004 = vunpack.c.l.b16 %v2806
        %v3005 = vunpack.c.h.b16 %v2806
        %v3006 = vunpack.c.l.b16 %v2807
        %v3007 = vunpack.c.h.b16 %v2807
        %v3008 = vunpack.c.l.b16 %v2808
        %v3009 = vunpack.c.h.b16 %v2808
        %v3010 = vunpack.c.l.b16 %v2809
        %v3011 = vunpack.c.h.b16 %v2809
        %v3012 = vunpack.c.l.b16 %v2810
        %v3013 = vunpack.c.h.b16 %v2810
        %v3014 = vunpack.c.l.b16 %v2811
        %v3015 = vunpack.c.h.b16 %v2811
        %v3016 = vpack.c.b16 %v2890, %v2888
        %v3017 = vpack.c.b16 %v2891, %v2889
        %v3018 = vpack.c.b16 %v2894, %v2892
        %v3019 = vpack.c.b16 %v2895, %v2893
        %v3020 = vpack.c.b16 %v2898, %v2896
        %v3021 = vpack.c.b16 %v2899, %v2897
        %v3022 = vpack.c.b16 %v2902, %v2900
        %v3023 = vpack.c.b16 %v2903, %v2901
        %v3024 = vpack.c.b16 %v2906, %v2904
        %v3025 = vpack.c.b16 %v2907, %v2905
        %v3026 = vpack.c.b16 %v2910, %v2908
        %v3027 = vpack.c.b16 %v2911, %v2909
        %v3028 = vpack.c.b16 %v2914, %v2912
        %v3029 = vpack.c.b16 %v2915, %v2913
        %v3030 = vpack.c.b16 %v2918, %v2916
        %v3031 = vpack.c.b16 %v2919, %v2917
        %v3032 = vpack.c.b16 %v2922, %v2920
        %v3033 = vpack.c.b16 %v2923, %v2921
        %v3034 = vpack.c.b16 %v2926, %v2924
        %v3035 = vpack.c.b16 %v2927, %v2925
        %v3036 = vpack.c.b16 %v2930, %v2928
        %v3037 = vpack.c.b16 %v2931, %v2929
        %v3038 = vpack.c.b16 %v2934, %v2932
        %v3039 = vpack.c.b16 %v2935, %v2933
        %v3040 = vpack.c.b16 %v2938, %v2936
        %v3041 = vpack.c.b16 %v2939, %v2937
        %v3042 = vpack.c.b16 %v2942, %v2940
        %v3043 = vpack.c.b16 %v2943, %v2941
        %v3044 = vpack.c.b16 %v2946, %v2944
        %v3045 = vpack.c.b16 %v2947, %v2945
        %v3046 = vpack.c.b16 %v2950, %v2948
        %v3047 = vpack.c.b16 %v2951, %v2949
        %v3048 = vpack.c.b16 %v2954, %v2952
        %v3049 = vpack.c.b16 %v2955, %v2953
        %v3050 = vpack.c.b16 %v2958, %v2956
        %v3051 = vpack.c.b16 %v2959, %v2957
        %v3052 = vpack.c.b16 %v2962, %v2960
        %v3053 = vpack.c.b16 %v2963, %v2961
        %v3054 = vpack.c.b16 %v2966, %v2964
        %v3055 = vpack.c.b16 %v2967, %v2965
        %v3056 = vpack.c.b16 %v2970, %v2968
        %v3057 = vpack.c.b16 %v2971, %v2969
        %v3058 = vpack.c.b16 %v2974, %v2972
        %v3059 = vpack.c.b16 %v2975, %v2973
        %v3060 = vpack.c.b16 %v2978, %v2976
        %v3061 = vpack.c.b16 %v2979, %v2977
        %v3062 = vpack.c.b16 %v2982, %v2980
        %v3063 = vpack.c.b16 %v2983, %v2981
        %v3064 = vpack.c.b16 %v2986, %v2984
        %v3065 = vpack.c.b16 %v2987, %v2985
        %v3066 = vpack.c.b16 %v2990, %v2988
        %v3067 = vpack.c.b16 %v2991, %v2989
        %v3068 = vpack.c.b16 %v2994, %v2992
        %v3069 = vpack.c.b16 %v2995, %v2993
        %v3070 = vpack.c.b16 %v2998, %v2996
        %v3071 = vpack.c.b16 %v2999, %v2997
        %v3072 = vpack.c.b16 %v3002, %v3000
        %v3073 = vpack.c.b16 %v3003, %v3001
        %v3074 = vpack.c.b16 %v3006, %v3004
        %v3075 = vpack.c.b16 %v3007, %v3005
        %v3076 = vpack.c.b16 %v3010, %v3008
        %v3077 = vpack.c.b16 %v3011, %v3009
        %v3078 = vpack.c.b16 %v3014, %v3012
        %v3079 = vpack.c.b16 %v3015, %v3013
        %3144 = vmatprep.subr.bf16.mxu0 %v3017
        %3145 = vmatpush1.bf16.msra.mxu0 %v3016
        %3146 = vmatprep.subr.bf16.mxu0 %v3019
        %3147 = vmatpush1.bf16.msra.mxu0 %v3018
        %3148 = vmatprep.subr.bf16.mxu0 %v3021
        %3149 = vmatpush1.bf16.msra.mxu0 %v3020
        %3150 = vmatprep.subr.bf16.mxu0 %v3023
        %3151 = vmatpush1.bf16.msra.mxu0 %v3022
        %3152 = vmatprep.subr.bf16.mxu0 %v3025
        %3153 = vmatpush1.bf16.msra.mxu0 %v3024
        %3154 = vmatprep.subr.bf16.mxu0 %v3027
        %3155 = vmatpush1.bf16.msra.mxu0 %v3026
        %3156 = vmatprep.subr.bf16.mxu0 %v3029
        %3157 = vmatpush1.bf16.msra.mxu0 %v3028
        %3158 = vmatprep.subr.bf16.mxu0 %v3031
        %3159 = vmatpush1.bf16.msra.mxu0 %v3030
        %3160 = vmatprep.subr.bf16.mxu0 %v3033
        %3161 = vmatpush1.bf16.msra.mxu0 %v3032
        %3162 = vmatprep.subr.bf16.mxu0 %v3035
        %3163 = vmatpush1.bf16.msra.mxu0 %v3034
        %3164 = vmatprep.subr.bf16.mxu0 %v3037
        %3165 = vmatpush1.bf16.msra.mxu0 %v3036
        %3166 = vmatprep.subr.bf16.mxu0 %v3039
        %3167 = vmatpush1.bf16.msra.mxu0 %v3038
        %3168 = vmatprep.subr.bf16.mxu0 %v3041
        %3169 = vmatpush1.bf16.msra.mxu0 %v3040
        %3170 = vmatprep.subr.bf16.mxu0 %v3043
        %3171 = vmatpush1.bf16.msra.mxu0 %v3042
        %3172 = vmatprep.subr.bf16.mxu0 %v3045
        %3173 = vmatpush1.bf16.msra.mxu0 %v3044
        %3174 = vmatprep.subr.bf16.mxu0 %v3047
        %3175 = vmatpush1.bf16.msra.mxu0 %v3046
        %3176 = vmatprep.mubr.bf16.mxu0 %v2717
        %3177 = vmatmul.mubr.bf16.gmra.mrb[0].mxu0 %v2716
        %v3178 = vpop.f32.mrb[0].mxu0
        %v3179 = vadd.f32 %v2817, %v3178
        %v3180 = vpop.f32.mrb[0].mxu0
        %v3181 = vadd.f32 %v2821, %v3180
        %v3182 = vpop.f32.mrb[0].mxu0
        %v3183 = vadd.f32 %v2817, %v3182
        %v3184 = vpop.f32.mrb[0].mxu0
        %v3185 = vadd.f32 %v2821, %v3184
        %3186 = vmatprep.mubr.bf16.mxu0 %v2721
        %3187 = vmatmul.mubr.bf16.gmra.mrb[0].mxu0 %v2720
        %v3188 = vpop.f32.mrb[0].mxu0
        %v3189 = vadd.f32 %v2817, %v3188
        %v3190 = vpop.f32.mrb[0].mxu0
        %v3191 = vadd.f32 %v2821, %v3190
        %v3192 = vpop.f32.mrb[0].mxu0
        %v3193 = vadd.f32 %v2817, %v3192
        %v3194 = vpop.f32.mrb[0].mxu0
        %v3195 = vadd.f32 %v2821, %v3194
        %3196 = vmatprep.mubr.bf16.mxu0 %v2725
        %3197 = vmatmul.mubr.bf16.gmra.mrb[0].mxu0 %v2724
        %v3198 = vpop.f32.mrb[0].mxu0
        %v3199 = vadd.f32 %v2817, %v3198
        %v3200 = vpop.f32.mrb[0].mxu0
        %v3201 = vadd.f32 %v2821, %v3200
        %v3202 = vpop.f32.mrb[0].mxu0
        %v3203 = vadd.f32 %v2817, %v3202
        %v3204 = vpop.f32.mrb[0].mxu0
        %v3205 = vadd.f32 %v2821, %v3204
        %3206 = vmatprep.mubr.bf16.mxu0 %v2729
        %3207 = vmatmul.mubr.bf16.gmra.mrb[0].mxu0 %v2728
        %v3208 = vpop.f32.mrb[0].mxu0
        %v3209 = vadd.f32 %v2817, %v3208
        %v3210 = vpop.f32.mrb[0].mxu0
        %v3211 = vadd.f32 %v2821, %v3210
        %v3212 = vpop.f32.mrb[0].mxu0
        %v3213 = vadd.f32 %v2817, %v3212
        %v3214 = vpop.f32.mrb[0].mxu0
        %v3215 = vadd.f32 %v2821, %v3214
        %3216 = vmatprep.mubr.bf16.mxu0 %v2733
        %3217 = vmatmul.mubr.bf16.gmra.mrb[0].mxu0 %v2732
        %v3218 = vpop.f32.mrb[0].mxu0
        %v3219 = vadd.f32 %v2817, %v3218
        %v3220 = vpop.f32.mrb[0].mxu0
        %v3221 = vadd.f32 %v2821, %v3220
        %v3222 = vpop.f32.mrb[0].mxu0
        %v3223 = vadd.f32 %v2817, %v3222
        %v3224 = vpop.f32.mrb[0].mxu0
        %v3225 = vadd.f32 %v2821, %v3224
        %3226 = vmatprep.mubr.bf16.mxu0 %v2737
        %3227 = vmatmul.mubr.bf16.gmra.mrb[0].mxu0 %v2736
        %v3228 = vpop.f32.mrb[0].mxu0
        %v3229 = vadd.f32 %v2817, %v3228
        %v3230 = vpop.f32.mrb[0].mxu0
        %v3231 = vadd.f32 %v2821, %v3230
        %v3232 = vpop.f32.mrb[0].mxu0
        %v3233 = vadd.f32 %v2817, %v3232
        %v3234 = vpop.f32.mrb[0].mxu0
        %v3235 = vadd.f32 %v2821, %v3234
        %3236 = vmatprep.mubr.bf16.mxu0 %v2741
        %3237 = vmatmul.mubr.bf16.gmra.mrb[0].mxu0 %v2740
        %v3238 = vpop.f32.mrb[0].mxu0
        %v3239 = vadd.f32 %v2817, %v3238
        %v3240 = vpop.f32.mrb[0].mxu0
        %v3241 = vadd.f32 %v2821, %v3240
        %v3242 = vpop.f32.mrb[0].mxu0
        %v3243 = vadd.f32 %v2817, %v3242
        %v3244 = vpop.f32.mrb[0].mxu0
        %v3245 = vadd.f32 %v2821, %v3244
        %3246 = vmatprep.mubr.bf16.mxu0 %v2745
        %3247 = vmatmul.mubr.bf16.gmra.mrb[0].mxu0 %v2744
        %v3248 = vpop.f32.mrb[0].mxu0
        %v3249 = vadd.f32 %v2817, %v3248
        %v3250 = vpop.f32.mrb[0].mxu0
        %v3251 = vadd.f32 %v2821, %v3250
        %v3252 = vpop.f32.mrb[0].mxu0
        %v3253 = vadd.f32 %v2817, %v3252
        %v3254 = vpop.f32.mrb[0].mxu0
        %v3255 = vadd.f32 %v2821, %v3254
        %3256 = vdwg.mxu0
        %3257 = vmatprep.subr.bf16.mxu0 %v3049
        %3258 = vmatpush1.bf16.msra.mxu0 %v3048
        %3259 = vmatprep.subr.bf16.mxu0 %v3051
        %3260 = vmatpush1.bf16.msra.mxu0 %v3050
        %3261 = vmatprep.subr.bf16.mxu0 %v3053
        %3262 = vmatpush1.bf16.msra.mxu0 %v3052
        %3263 = vmatprep.subr.bf16.mxu0 %v3055
        %3264 = vmatpush1.bf16.msra.mxu0 %v3054
        %3265 = vmatprep.subr.bf16.mxu0 %v3057
        %3266 = vmatpush1.bf16.msra.mxu0 %v3056
        %3267 = vmatprep.subr.bf16.mxu0 %v3059
        %3268 = vmatpush1.bf16.msra.mxu0 %v3058
        %3269 = vmatprep.subr.bf16.mxu0 %v3061
        %3270 = vmatpush1.bf16.msra.mxu0 %v3060
        %3271 = vmatprep.subr.bf16.mxu0 %v3063
        %3272 = vmatpush1.bf16.msra.mxu0 %v3062
        %3273 = vmatprep.subr.bf16.mxu0 %v3065
        %3274 = vmatpush1.bf16.msra.mxu0 %v3064
        %3275 = vmatprep.subr.bf16.mxu0 %v3067
        %3276 = vmatpush1.bf16.msra.mxu0 %v3066
        %3277 = vmatprep.subr.bf16.mxu0 %v3069
        %3278 = vmatpush1.bf16.msra.mxu0 %v3068
        %3279 = vmatprep.subr.bf16.mxu0 %v3071
        %3280 = vmatpush1.bf16.msra.mxu0 %v3070
        %3281 = vmatprep.subr.bf16.mxu0 %v3073
        %3282 = vmatpush1.bf16.msra.mxu0 %v3072
        %3283 = vmatprep.subr.bf16.mxu0 %v3075
        %3284 = vmatpush1.bf16.msra.mxu0 %v3074
        %3285 = vmatprep.subr.bf16.mxu0 %v3077
        %3286 = vmatpush1.bf16.msra.mxu0 %v3076
        %3287 = vmatprep.subr.bf16.mxu0 %v3079
        %3288 = vmatpush1.bf16.msra.mxu0 %v3078
        %3289 = vmatprep.mubr.bf16.mxu0 %v2719
        %3290 = vmatmul.mubr.bf16.gmra.mrb[0].mxu0 %v2718
        %v3291 = vpop.f32.mrb[0].mxu0
        %v3292 = vadd.f32 %v3179, %v3291
        %v3293 = vpop.f32.mrb[0].mxu0
        %v3294 = vadd.f32 %v3181, %v3293
        %v3295 = vpop.f32.mrb[0].mxu0
        %v3296 = vadd.f32 %v3183, %v3295
        %v3297 = vpop.f32.mrb[0].mxu0
        %v3298 = vadd.f32 %v3185, %v3297
        %3299 = vmatprep.mubr.bf16.mxu0 %v2723
        %3300 = vmatmul.mubr.bf16.gmra.mrb[0].mxu0 %v2722
        %v3301 = vpop.f32.mrb[0].mxu0
        %v3302 = vadd.f32 %v3189, %v3301
        %v3303 = vpop.f32.mrb[0].mxu0
        %v3304 = vadd.f32 %v3191, %v3303
        %v3305 = vpop.f32.mrb[0].mxu0
        %v3306 = vadd.f32 %v3193, %v3305
        %v3307 = vpop.f32.mrb[0].mxu0
        %v3308 = vadd.f32 %v3195, %v3307
        %3309 = vmatprep.mubr.bf16.mxu0 %v2727
        %3310 = vmatmul.mubr.bf16.gmra.mrb[0].mxu0 %v2726
        %v3311 = vpop.f32.mrb[0].mxu0
        %v3312 = vadd.f32 %v3199, %v3311
        %v3313 = vpop.f32.mrb[0].mxu0
        %v3314 = vadd.f32 %v3201, %v3313
        %v3315 = vpop.f32.mrb[0].mxu0
        %v3316 = vadd.f32 %v3203, %v3315
        %v3317 = vpop.f32.mrb[0].mxu0
        %v3318 = vadd.f32 %v3205, %v3317
        %3319 = vmatprep.mubr.bf16.mxu0 %v2731
        %3320 = vmatmul.mubr.bf16.gmra.mrb[0].mxu0 %v2730
        %v3321 = vpop.f32.mrb[0].mxu0
        %v3322 = vadd.f32 %v3209, %v3321
        %v3323 = vpop.f32.mrb[0].mxu0
        %v3324 = vadd.f32 %v3211, %v3323
        %v3325 = vpop.f32.mrb[0].mxu0
        %v3326 = vadd.f32 %v3213, %v3325
        %v3327 = vpop.f32.mrb[0].mxu0
        %v3328 = vadd.f32 %v3215, %v3327
        %3329 = vmatprep.mubr.bf16.mxu0 %v2735
        %3330 = vmatmul.mubr.bf16.gmra.mrb[0].mxu0 %v2734
        %v3331 = vpop.f32.mrb[0].mxu0
        %v3332 = vadd.f32 %v3219, %v3331
        %v3333 = vpop.f32.mrb[0].mxu0
        %v3334 = vadd.f32 %v3221, %v3333
        %v3335 = vpop.f32.mrb[0].mxu0
        %v3336 = vadd.f32 %v3223, %v3335
        %v3337 = vpop.f32.mrb[0].mxu0
        %v3338 = vadd.f32 %v3225, %v3337
        %3339 = vmatprep.mubr.bf16.mxu0 %v2739
        %3340 = vmatmul.mubr.bf16.gmra.mrb[0].mxu0 %v2738
        %v3341 = vpop.f32.mrb[0].mxu0
        %v3342 = vadd.f32 %v3229, %v3341
        %v3343 = vpop.f32.mrb[0].mxu0
        %v3344 = vadd.f32 %v3231, %v3343
        %v3345 = vpop.f32.mrb[0].mxu0
        %v3346 = vadd.f32 %v3233, %v3345
        %v3347 = vpop.f32.mrb[0].mxu0
        %v3348 = vadd.f32 %v3235, %v3347
        %3349 = vmatprep.mubr.bf16.mxu0 %v2743
        %3350 = vmatmul.mubr.bf16.gmra.mrb[0].mxu0 %v2742
        %v3351 = vpop.f32.mrb[0].mxu0
        %v3352 = vadd.f32 %v3239, %v3351
        %v3353 = vpop.f32.mrb[0].mxu0
        %v3354 = vadd.f32 %v3241, %v3353
        %v3355 = vpop.f32.mrb[0].mxu0
        %v3356 = vadd.f32 %v3243, %v3355
        %v3357 = vpop.f32.mrb[0].mxu0
        %v3358 = vadd.f32 %v3245, %v3357
        %3359 = vmatprep.mubr.bf16.mxu0 %v2747
        %3360 = vmatmul.mubr.bf16.gmra.mrb[0].mxu0 %v2746
        %v3361 = vpop.f32.mrb[0].mxu0
        %v3362 = vadd.f32 %v3249, %v3361
        %v3363 = vpop.f32.mrb[0].mxu0
        %v3364 = vadd.f32 %v3251, %v3363
        %v3365 = vpop.f32.mrb[0].mxu0
        %v3366 = vadd.f32 %v3253, %v3365
        %v3367 = vpop.f32.mrb[0].mxu0
        %v3368 = vadd.f32 %v3255, %v3367
        %3369 = vdwg.mxu0
        %v3370 = vmax.f32 %v3292, 0.0
        %v3371 = vmax.f32 %v3294, 0.0
        %v3372 = vmax.f32 %v3296, 0.0
        %v3373 = vmax.f32 %v3298, 0.0
        %v3374 = vmax.f32 %v3302, 0.0
        %v3375 = vmax.f32 %v3304, 0.0
        %v3376 = vmax.f32 %v3306, 0.0
        %v3377 = vmax.f32 %v3308, 0.0
        %v3378 = vmax.f32 %v3312, 0.0
        %v3379 = vmax.f32 %v3314, 0.0
        %v3380 = vmax.f32 %v3316, 0.0
        %v3381 = vmax.f32 %v3318, 0.0
        %v3382 = vmax.f32 %v3322, 0.0
        %v3383 = vmax.f32 %v3324, 0.0
        %v3384 = vmax.f32 %v3326, 0.0
        %v3385 = vmax.f32 %v3328, 0.0
        %v3386 = vmax.f32 %v3332, 0.0
        %v3387 = vmax.f32 %v3334, 0.0
        %v3388 = vmax.f32 %v3336, 0.0
        %v3389 = vmax.f32 %v3338, 0.0
        %v3390 = vmax.f32 %v3342, 0.0
        %v3391 = vmax.f32 %v3344, 0.0
        %v3392 = vmax.f32 %v3346, 0.0
        %v3393 = vmax.f32 %v3348, 0.0
        %v3394 = vmax.f32 %v3352, 0.0
        %v3395 = vmax.f32 %v3354, 0.0
        %v3396 = vmax.f32 %v3356, 0.0
        %v3397 = vmax.f32 %v3358, 0.0
        %v3398 = vmax.f32 %v3362, 0.0
        %v3399 = vmax.f32 %v3364, 0.0
        %v3400 = vmax.f32 %v3366, 0.0
        %v3401 = vmax.f32 %v3368, 0.0
        %v3402 = vpack.c.bf16 %v3372, %v3370
        %v3403 = vpack.c.bf16 %v3373, %v3371
        %v3404 = vpack.c.bf16 %v3376, %v3374
        %v3405 = vpack.c.bf16 %v3377, %v3375
        %v3406 = vpack.c.bf16 %v3380, %v3378
        %v3407 = vpack.c.bf16 %v3381, %v3379
        %v3408 = vpack.c.bf16 %v3384, %v3382
        %v3409 = vpack.c.bf16 %v3385, %v3383
        %v3410 = vpack.c.bf16 %v3388, %v3386
        %v3411 = vpack.c.bf16 %v3389, %v3387
        %v3412 = vpack.c.bf16 %v3392, %v3390
        %v3413 = vpack.c.bf16 %v3393, %v3391
        %v3414 = vpack.c.bf16 %v3396, %v3394
        %v3415 = vpack.c.bf16 %v3397, %v3395
        %v3416 = vpack.c.bf16 %v3400, %v3398
        %v3417 = vpack.c.bf16 %v3401, %v3399
        %v3418 = vld [vmem:[#allocation7] sm:$0xf]
        %v3419 = vld [vmem:[#allocation7 + $0x4] sm:$0xf]
        %v3420 = vld [vmem:[#allocation7 + $0x8] sm:$0xf]
        %v3421 = vld [vmem:[#allocation7 + $0xc] sm:$0xf]
        %v3422 = vld [vmem:[#allocation7 + $0x10] sm:$0xf]
        %v3423 = vld [vmem:[#allocation7 + $0x14] sm:$0xf]
        %v3424 = vld [vmem:[#allocation7 + $0x18] sm:$0xf]
        %v3425 = vld [vmem:[#allocation7 + $0x1c] sm:$0xf]
        %v3426 = vld [vmem:[#allocation7 + $0x20] sm:$0xf]
        %v3427 = vld [vmem:[#allocation7 + $0x24] sm:$0xf]
        %v3428 = vld [vmem:[#allocation7 + $0x28] sm:$0xf]
        %v3429 = vld [vmem:[#allocation7 + $0x2c] sm:$0xf]
        %v3430 = vld [vmem:[#allocation7 + $0x30] sm:$0xf]
        %v3431 = vld [vmem:[#allocation7 + $0x34] sm:$0xf]
        %v3432 = vld [vmem:[#allocation7 + $0x38] sm:$0xf]
        %v3433 = vld [vmem:[#allocation7 + $0x3c] sm:$0xf]
        %v3434 = vld [vmem:[#allocation7 + $0x40] sm:$0xf]
        %v3435 = vld [vmem:[#allocation7 + $0x44] sm:$0xf]
        %v3436 = vld [vmem:[#allocation7 + $0x48] sm:$0xf]
        %v3437 = vld [vmem:[#allocation7 + $0x4c] sm:$0xf]
        %v3438 = vld [vmem:[#allocation7 + $0x50] sm:$0xf]
        %v3439 = vld [vmem:[#allocation7 + $0x54] sm:$0xf]
        %v3440 = vld [vmem:[#allocation7 + $0x58] sm:$0xf]
        %v3441 = vld [vmem:[#allocation7 + $0x5c] sm:$0xf]
        %v3442 = vld [vmem:[#allocation7 + $0x60] sm:$0xf]
        %v3443 = vld [vmem:[#allocation7 + $0x64] sm:$0xf]
        %v3444 = vld [vmem:[#allocation7 + $0x68] sm:$0xf]
        %v3445 = vld [vmem:[#allocation7 + $0x6c] sm:$0xf]
        %v3446 = vld [vmem:[#allocation7 + $0x70] sm:$0xf]
        %v3447 = vld [vmem:[#allocation7 + $0x74] sm:$0xf]
        %v3448 = vld [vmem:[#allocation7 + $0x78] sm:$0xf]
        %v3449 = vld [vmem:[#allocation7 + $0x7c] sm:$0xf]
        %v3450 = vld [vmem:[%s6] sm:$0x1]
        %v3452 = vlaneseq
        %v3453 = vshrl.u32 %v3452, 7
        %v3454 = vsub.s32 0, %v3453
        %v3455 = vrot.slane %v3450, %v3454
        %v3489 = vunpack.c.l.b16 %v3418
        %v3490 = vunpack.c.l.b16 %v3419
        %v3491 = vunpack.c.l.b16 %v3420
        %v3492 = vunpack.c.l.b16 %v3421
        %v3493 = vunpack.c.l.b16 %v3422
        %v3494 = vunpack.c.l.b16 %v3423
        %v3495 = vunpack.c.l.b16 %v3424
        %v3496 = vunpack.c.l.b16 %v3425
        %v3497 = vunpack.c.l.b16 %v3426
        %v3498 = vunpack.c.l.b16 %v3427
        %v3499 = vunpack.c.l.b16 %v3428
        %v3500 = vunpack.c.l.b16 %v3429
        %v3501 = vunpack.c.l.b16 %v3430
        %v3502 = vunpack.c.l.b16 %v3431
        %v3503 = vunpack.c.l.b16 %v3432
        %v3504 = vunpack.c.l.b16 %v3433
        %v3505 = vunpack.c.l.b16 %v3434
        %v3506 = vunpack.c.l.b16 %v3435
        %v3507 = vunpack.c.l.b16 %v3436
        %v3508 = vunpack.c.l.b16 %v3437
        %v3509 = vunpack.c.l.b16 %v3438
        %v3510 = vunpack.c.l.b16 %v3439
        %v3511 = vunpack.c.l.b16 %v3440
        %v3512 = vunpack.c.l.b16 %v3441
        %v3513 = vunpack.c.l.b16 %v3442
        %v3514 = vunpack.c.l.b16 %v3443
        %v3515 = vunpack.c.l.b16 %v3444
        %v3516 = vunpack.c.l.b16 %v3445
        %v3517 = vunpack.c.l.b16 %v3446
        %v3518 = vunpack.c.l.b16 %v3447
        %v3519 = vunpack.c.l.b16 %v3448
        %v3520 = vunpack.c.l.b16 %v3449
        %v3521 = vpack.c.b16 %v3490, %v3489
        %v3522 = vpack.c.b16 %v3492, %v3491
        %v3523 = vpack.c.b16 %v3494, %v3493
        %v3524 = vpack.c.b16 %v3496, %v3495
        %v3525 = vpack.c.b16 %v3498, %v3497
        %v3526 = vpack.c.b16 %v3500, %v3499
        %v3527 = vpack.c.b16 %v3502, %v3501
        %v3528 = vpack.c.b16 %v3504, %v3503
        %v3529 = vpack.c.b16 %v3506, %v3505
        %v3530 = vpack.c.b16 %v3508, %v3507
        %v3531 = vpack.c.b16 %v3510, %v3509
        %v3532 = vpack.c.b16 %v3512, %v3511
        %v3533 = vpack.c.b16 %v3514, %v3513
        %v3534 = vpack.c.b16 %v3516, %v3515
        %v3535 = vpack.c.b16 %v3518, %v3517
        %v3536 = vpack.c.b16 %v3520, %v3519
        %3553 = vmatprep.subr.bf16.mxu0 0
        %3554 = vmatpush1.bf16.msra.mxu0 %v3521
        %3555 = vmatprep.subr.bf16.mxu0 0
        %3556 = vmatpush1.bf16.msra.mxu0 %v3522
        %3557 = vmatprep.subr.bf16.mxu0 0
        %3558 = vmatpush1.bf16.msra.mxu0 %v3523
        %3559 = vmatprep.subr.bf16.mxu0 0
        %3560 = vmatpush1.bf16.msra.mxu0 %v3524
        %3561 = vmatprep.subr.bf16.mxu0 0
        %3562 = vmatpush1.bf16.msra.mxu0 %v3525
        %3563 = vmatprep.subr.bf16.mxu0 0
        %3564 = vmatpush1.bf16.msra.mxu0 %v3526
        %3565 = vmatprep.subr.bf16.mxu0 0
        %3566 = vmatpush1.bf16.msra.mxu0 %v3527
        %3567 = vmatprep.subr.bf16.mxu0 0
        %3568 = vmatpush1.bf16.msra.mxu0 %v3528
        %3569 = vmatprep.subr.bf16.mxu0 0
        %3570 = vmatpush1.bf16.msra.mxu0 %v3529
        %3571 = vmatprep.subr.bf16.mxu0 0
        %3572 = vmatpush1.bf16.msra.mxu0 %v3530
        %3573 = vmatprep.subr.bf16.mxu0 0
        %3574 = vmatpush1.bf16.msra.mxu0 %v3531
        %3575 = vmatprep.subr.bf16.mxu0 0
        %3576 = vmatpush1.bf16.msra.mxu0 %v3532
        %3577 = vmatprep.subr.bf16.mxu0 0
        %3578 = vmatpush1.bf16.msra.mxu0 %v3533
        %3579 = vmatprep.subr.bf16.mxu0 0
        %3580 = vmatpush1.bf16.msra.mxu0 %v3534
        %3581 = vmatprep.subr.bf16.mxu0 0
        %3582 = vmatpush1.bf16.msra.mxu0 %v3535
        %3583 = vmatprep.subr.bf16.mxu0 0
        %3584 = vmatpush1.bf16.msra.mxu0 %v3536
        %3585 = vmatprep.mubr.bf16.mxu0 %v3403
        %3586 = vmatmul.mubr.bf16.gmra.mrb[0].mxu0 %v3402
        %v3587 = vpop.f32.mrb[0].mxu0
        %v3588 = vadd.f32 %v3455, %v3587
        %v3589 = vpop.f32.mrb[0].mxu0
        %v3590 = vpop.f32.mrb[0].mxu0
        %v3591 = vadd.f32 %v3455, %v3590
        %v3592 = vpop.f32.mrb[0].mxu0
        %3593 = vmatprep.mubr.bf16.mxu0 %v3405
        %3594 = vmatmul.mubr.bf16.gmra.mrb[0].mxu0 %v3404
        %v3595 = vpop.f32.mrb[0].mxu0
        %v3596 = vadd.f32 %v3455, %v3595
        %v3597 = vpop.f32.mrb[0].mxu0
        %v3598 = vpop.f32.mrb[0].mxu0
        %v3599 = vadd.f32 %v3455, %v3598
        %v3600 = vpop.f32.mrb[0].mxu0
        %3601 = vmatprep.mubr.bf16.mxu0 %v3407
        %3602 = vmatmul.mubr.bf16.gmra.mrb[0].mxu0 %v3406
        %v3603 = vpop.f32.mrb[0].mxu0
        %v3604 = vadd.f32 %v3455, %v3603
        %v3605 = vpop.f32.mrb[0].mxu0
        %v3606 = vpop.f32.mrb[0].mxu0
        %v3607 = vadd.f32 %v3455, %v3606
        %v3608 = vpop.f32.mrb[0].mxu0
        %3609 = vmatprep.mubr.bf16.mxu0 %v3409
        %3610 = vmatmul.mubr.bf16.gmra.mrb[0].mxu0 %v3408
        %v3611 = vpop.f32.mrb[0].mxu0
        %v3612 = vadd.f32 %v3455, %v3611
        %v3613 = vpop.f32.mrb[0].mxu0
        %v3614 = vpop.f32.mrb[0].mxu0
        %v3615 = vadd.f32 %v3455, %v3614
        %v3616 = vpop.f32.mrb[0].mxu0
        %3617 = vmatprep.mubr.bf16.mxu0 %v3411
        %3618 = vmatmul.mubr.bf16.gmra.mrb[0].mxu0 %v3410
        %v3619 = vpop.f32.mrb[0].mxu0
        %v3620 = vadd.f32 %v3455, %v3619
        %v3621 = vpop.f32.mrb[0].mxu0
        %v3622 = vpop.f32.mrb[0].mxu0
        %v3623 = vadd.f32 %v3455, %v3622
        %v3624 = vpop.f32.mrb[0].mxu0
        %3625 = vmatprep.mubr.bf16.mxu0 %v3413
        %3626 = vmatmul.mubr.bf16.gmra.mrb[0].mxu0 %v3412
        %v3627 = vpop.f32.mrb[0].mxu0
        %v3628 = vadd.f32 %v3455, %v3627
        %v3629 = vpop.f32.mrb[0].mxu0
        %v3630 = vpop.f32.mrb[0].mxu0
        %v3631 = vadd.f32 %v3455, %v3630
        %v3632 = vpop.f32.mrb[0].mxu0
        %3633 = vmatprep.mubr.bf16.mxu0 %v3415
        %3634 = vmatmul.mubr.bf16.gmra.mrb[0].mxu0 %v3414
        %v3635 = vpop.f32.mrb[0].mxu0
        %v3636 = vadd.f32 %v3455, %v3635
        %v3637 = vpop.f32.mrb[0].mxu0
        %v3638 = vpop.f32.mrb[0].mxu0
        %v3639 = vadd.f32 %v3455, %v3638
        %v3640 = vpop.f32.mrb[0].mxu0
        %3641 = vmatprep.mubr.bf16.mxu0 %v3417
        %3642 = vmatmul.mubr.bf16.gmra.mrb[0].mxu0 %v3416
        %v3643 = vpop.f32.mrb[0].mxu0
        %v3644 = vadd.f32 %v3455, %v3643
        %v3645 = vpop.f32.mrb[0].mxu0
        %v3646 = vpop.f32.mrb[0].mxu0
        %v3647 = vadd.f32 %v3455, %v3646
        %v3648 = vpop.f32.mrb[0].mxu0
        %3649 = vdwg.mxu0
        %v3650 = vpack.c.bf16 %v3591, %v3588
        %v3651 = vpack.c.bf16 %v3599, %v3596
        %v3652 = vpack.c.bf16 %v3607, %v3604
        %v3653 = vpack.c.bf16 %v3615, %v3612
        %v3654 = vpack.c.bf16 %v3623, %v3620
        %v3655 = vpack.c.bf16 %v3631, %v3628
        %v3656 = vpack.c.bf16 %v3639, %v3636
        %v3657 = vpack.c.bf16 %v3647, %v3644
        %v3666 = vunpack.c.l.b16 %v3650
        %v3667 = vunpack.c.h.b16 %v3650
        %v3668 = vunpack.c.l.b16 %v3651
        %v3669 = vunpack.c.h.b16 %v3651
        %v3670 = vunpack.c.l.b16 %v3652
        %v3671 = vunpack.c.h.b16 %v3652
        %v3672 = vunpack.c.l.b16 %v3653
        %v3673 = vunpack.c.h.b16 %v3653
        %v3674 = vunpack.c.l.b16 %v3654
        %v3675 = vunpack.c.h.b16 %v3654
        %v3676 = vunpack.c.l.b16 %v3655
        %v3677 = vunpack.c.h.b16 %v3655
        %v3678 = vunpack.c.l.b16 %v3656
        %v3679 = vunpack.c.h.b16 %v3656
        %v3680 = vunpack.c.l.b16 %v3657
        %v3681 = vunpack.c.h.b16 %v3657
        %v3682 = vpack.c.b16 %v3666, %v3666
        %v3683 = vpack.c.b16 %v3667, %v3667
        %v3684 = vpack.c.b16 %v3668, %v3668
        %v3685 = vpack.c.b16 %v3669, %v3669
        %v3686 = vpack.c.b16 %v3670, %v3670
        %v3687 = vpack.c.b16 %v3671, %v3671
        %v3688 = vpack.c.b16 %v3672, %v3672
        %v3689 = vpack.c.b16 %v3673, %v3673
        %v3690 = vpack.c.b16 %v3674, %v3674
        %v3691 = vpack.c.b16 %v3675, %v3675
        %v3692 = vpack.c.b16 %v3676, %v3676
        %v3693 = vpack.c.b16 %v3677, %v3677
        %v3694 = vpack.c.b16 %v3678, %v3678
        %v3695 = vpack.c.b16 %v3679, %v3679
        %v3696 = vpack.c.b16 %v3680, %v3680
        %v3697 = vpack.c.b16 %v3681, %v3681
        %3714 = vst [vmem:[%s344] sm:$0xf] %v3682
        %3715 = vst [vmem:[%s344 + $0x4] sm:$0xf] %v3683
        %3716 = vst [vmem:[%s344 + $0x8] sm:$0xf] %v3684
        %3717 = vst [vmem:[%s344 + $0xc] sm:$0xf] %v3685
        %3718 = vst [vmem:[%s344 + $0x10] sm:$0xf] %v3686
        %3719 = vst [vmem:[%s344 + $0x14] sm:$0xf] %v3687
        %3720 = vst [vmem:[%s344 + $0x18] sm:$0xf] %v3688
        %3721 = vst [vmem:[%s344 + $0x1c] sm:$0xf] %v3689
        %3722 = vst [vmem:[%s344 + $0x20] sm:$0xf] %v3690
        %3723 = vst [vmem:[%s344 + $0x24] sm:$0xf] %v3691
        %3724 = vst [vmem:[%s344 + $0x28] sm:$0xf] %v3692
        %3725 = vst [vmem:[%s344 + $0x2c] sm:$0xf] %v3693
        %3726 = vst [vmem:[%s344 + $0x30] sm:$0xf] %v3694
        %3727 = vst [vmem:[%s344 + $0x34] sm:$0xf] %v3695
        %3728 = vst [vmem:[%s344 + $0x38] sm:$0xf] %v3696
        %3729 = vst [vmem:[%s344 + $0x3c] sm:$0xf] %v3697
        %s3730 = sand.u32 %s183, 1
        %s3731 = sand.u32 %s183, 1
        %s3732 = smul.addr %s3731, 64
        %s3733 = scalar_lea.vmem [#allocation9], %s3732
        // Predicated region
        $region65: #{net_forward.1} parent=47 // pred_check
          %p3734 = pneg %p193
        $region66: #{net_forward.1} parent=47 // pred_check_branch
          %3736 = sbr.rel (%p3734) target = $region68
        $region67: #{net_forward.1} parent=47 // pred_region
          %s3737 = smul.u32 16, %s23
          %s3738 = ssub.s32 25, %s3737
          %p3739 = scmp.lt.s32.totalorder %s3738, 16
          %s3740 = scalar_select %p3739, %s3738, 16
          %s3741 = smul.u32 64, %s3740
          %p3742 = scmp.ne.s32.totalorder 0, %s3741
          %s3743 = smul.addr %s3737, 4
          %s3744 = scalar_lea.vmem %s7, %s3743
          // Predicated region
          $region69: #{net_forward.1} parent=67 // pred_check
            %p3745 = pneg %p3742
          $region70: #{net_forward.1} parent=67 // pred_check_branch
            %3747 = sbr.rel (%p3745) target = $region72
          $region71: #{net_forward.1} parent=67 // pred_region
            // Predicated region
            $region73: #{net_forward.1} parent=71 // pred_check
              _
            $region74: #{net_forward.1} parent=71 // pred_check_branch
              %3749 = sbr.rel target = $region76
            $region75: #{net_forward.1} parent=71 // pred_region
              // Predicated region
              $region95: #{net_forward.1} parent=75 // pred_check
                _
              $region96: #{net_forward.1} parent=75 // pred_check_branch
                %3828 = sbr.rel (0) target = $region98
              $region97: #{net_forward.1} parent=75 // pred_region
                %s3830 = sshrl.u32 %s3740, 4
                // While loop
                $region99: #{net_forward.1} parent=97 // loop_pre_header
                  _
                $region100: #{net_forward.1} parent=97 // loop_header
                  %s3832 = sphi 0, %s3834
                  %p3833 = scmp.ge.s32.totalorder %s3832, %s3830
                  %s3837 = sphi 0, %s3874
                  %s3838 = sphi %s3733, %s3877
                  %s3839 = sphi %s3744, %s3878
                $region101: #{net_forward.1} parent=97 // loop_header_branch
                  %3836 = sbr.rel (%p3833) target = $region105
                $region102: #{net_forward.1} parent=97 // loop_body
                  %v3840 = vld [vmem:[%s3838] sm:$0xf]
                  %3841 = vst [vmem:[%s3839] sm:$0xf] %v3840
                  %v3842 = vld [vmem:[%s3838 + $0x4] sm:$0xf]
                  %3843 = vst [vmem:[%s3839 + $0x4] sm:$0xf] %v3842
                  %v3844 = vld [vmem:[%s3838 + $0x8] sm:$0xf]
                  %3845 = vst [vmem:[%s3839 + $0x8] sm:$0xf] %v3844
                  %v3846 = vld [vmem:[%s3838 + $0xc] sm:$0xf]
                  %3847 = vst [vmem:[%s3839 + $0xc] sm:$0xf] %v3846
                  %v3848 = vld [vmem:[%s3838 + $0x10] sm:$0xf]
                  %3849 = vst [vmem:[%s3839 + $0x10] sm:$0xf] %v3848
                  %v3850 = vld [vmem:[%s3838 + $0x14] sm:$0xf]
                  %3851 = vst [vmem:[%s3839 + $0x14] sm:$0xf] %v3850
                  %v3852 = vld [vmem:[%s3838 + $0x18] sm:$0xf]
                  %3853 = vst [vmem:[%s3839 + $0x18] sm:$0xf] %v3852
                  %v3854 = vld [vmem:[%s3838 + $0x1c] sm:$0xf]
                  %3855 = vst [vmem:[%s3839 + $0x1c] sm:$0xf] %v3854
                  %v3856 = vld [vmem:[%s3838 + $0x20] sm:$0xf]
                  %3857 = vst [vmem:[%s3839 + $0x20] sm:$0xf] %v3856
                  %v3858 = vld [vmem:[%s3838 + $0x24] sm:$0xf]
                  %3859 = vst [vmem:[%s3839 + $0x24] sm:$0xf] %v3858
                  %v3860 = vld [vmem:[%s3838 + $0x28] sm:$0xf]
                  %3861 = vst [vmem:[%s3839 + $0x28] sm:$0xf] %v3860
                  %v3862 = vld [vmem:[%s3838 + $0x2c] sm:$0xf]
                  %3863 = vst [vmem:[%s3839 + $0x2c] sm:$0xf] %v3862
                  %v3864 = vld [vmem:[%s3838 + $0x30] sm:$0xf]
                  %3865 = vst [vmem:[%s3839 + $0x30] sm:$0xf] %v3864
                  %v3866 = vld [vmem:[%s3838 + $0x34] sm:$0xf]
                  %3867 = vst [vmem:[%s3839 + $0x34] sm:$0xf] %v3866
                  %v3868 = vld [vmem:[%s3838 + $0x38] sm:$0xf]
                  %3869 = vst [vmem:[%s3839 + $0x38] sm:$0xf] %v3868
                  %v3870 = vld [vmem:[%s3838 + $0x3c] sm:$0xf]
                  %3871 = vst [vmem:[%s3839 + $0x3c] sm:$0xf] %v3870
                  %s3872 = sadd.s32 1, %s3837
                  %p3873 = scmp.ge.s32.totalorder %s3872, %s3830
                  %s3874 = scalar_select %p3873, 0, %s3872
                  %s3875 = smul.u32 %s3874, 64
                  %s3876 = smul.u32 %s3874, 64
                  %s3877 = scalar_lea.vmem %s3733, %s3875 [#allocation9]
                  %s3878 = scalar_lea.vmem %s3744, %s3876
                $region103: #{net_forward.1} parent=97 // loop_footer
                  %s3834 = sadd.s32 %s3832, 1
                $region104: #{net_forward.1} parent=97 // loop_footer_branch
                  %3831 = sbr.rel target = $region100
                $region105: #{net_forward.1} parent=97 // loop_exit
                  _
                %s3879 = sshrl.u32 %s3740, 4
                %s3880 = sand.u32 %s3740, 15
                %s3881 = smul.u32 %s3879, 16
                %s3882 = smul.u32 4, %s3881
                %s3883 = scalar_lea.vmem %s3733, %s3882 [#allocation9]
                %s3884 = smul.u32 4, %s3881
                %s3885 = scalar_lea.vmem %s3744, %s3884
                // While loop
                $region106: #{net_forward.1} parent=97 // loop_pre_header
                  _
                $region107: #{net_forward.1} parent=97 // loop_header
                  %s3887 = sphi 0, %s3889
                  %p3888 = scmp.ge.s32.totalorder %s3887, %s3880
                  %s3892 = sphi 0, %s3899
                  %s3893 = sphi %s3883, %s3902
                  %s3894 = sphi %s3885, %s3903
                $region108: #{net_forward.1} parent=97 // loop_header_branch
                  %3891 = sbr.rel (%p3888) target = $region112
                $region109: #{net_forward.1} parent=97 // loop_body
                  %v3895 = vld [vmem:[%s3893] sm:$0xf]
                  %3896 = vst [vmem:[%s3894] sm:$0xf] %v3895
                  %s3897 = sadd.s32 1, %s3892
                  %p3898 = scmp.ge.s32.totalorder %s3897, %s3880
                  %s3899 = scalar_select %p3898, 0, %s3897
                  %s3900 = smul.u32 %s3899, 4
                  %s3901 = smul.u32 %s3899, 4
                  %s3902 = scalar_lea.vmem %s3883, %s3900 [#allocation9]
                  %s3903 = scalar_lea.vmem %s3885, %s3901
                $region110: #{net_forward.1} parent=97 // loop_footer
                  %s3889 = sadd.s32 %s3887, 1
                $region111: #{net_forward.1} parent=97 // loop_footer_branch
                  %3886 = sbr.rel target = $region107
                $region112: #{net_forward.1} parent=97 // loop_exit
                  _
              $region98: #{net_forward.1} parent=75 // pred_fallthru
                _
            $region76: #{net_forward.1} parent=71 // pred_fallthru
              _
            // Predicated region
            $region77: #{net_forward.1} parent=71 // pred_check
              _
            $region78: #{net_forward.1} parent=71 // pred_check_branch
              %3751 = sbr.rel (0) target = $region80
            $region79: #{net_forward.1} parent=71 // pred_region
              %s3753 = sshrl.u32 %s3740, 4
              // While loop
              $region81: #{net_forward.1} parent=79 // loop_pre_header
                _
              $region82: #{net_forward.1} parent=79 // loop_header
                %s3755 = sphi 0, %s3757
                %p3756 = scmp.ge.s32.totalorder %s3755, %s3753
                %s3760 = sphi 0, %s3797
                %s3761 = sphi %s3733, %s3800
                %s3762 = sphi %s3744, %s3801
              $region83: #{net_forward.1} parent=79 // loop_header_branch
                %3759 = sbr.rel (%p3756) target = $region87
              $region84: #{net_forward.1} parent=79 // loop_body
                %v3763 = vld [vmem:[%s3761] sm:$0xf]
                %3764 = vst [vmem:[%s3762] sm:$0xf] %v3763
                %v3765 = vld [vmem:[%s3761 + $0x4] sm:$0xf]
                %3766 = vst [vmem:[%s3762 + $0x4] sm:$0xf] %v3765
                %v3767 = vld [vmem:[%s3761 + $0x8] sm:$0xf]
                %3768 = vst [vmem:[%s3762 + $0x8] sm:$0xf] %v3767
                %v3769 = vld [vmem:[%s3761 + $0xc] sm:$0xf]
                %3770 = vst [vmem:[%s3762 + $0xc] sm:$0xf] %v3769
                %v3771 = vld [vmem:[%s3761 + $0x10] sm:$0xf]
                %3772 = vst [vmem:[%s3762 + $0x10] sm:$0xf] %v3771
                %v3773 = vld [vmem:[%s3761 + $0x14] sm:$0xf]
                %3774 = vst [vmem:[%s3762 + $0x14] sm:$0xf] %v3773
                %v3775 = vld [vmem:[%s3761 + $0x18] sm:$0xf]
                %3776 = vst [vmem:[%s3762 + $0x18] sm:$0xf] %v3775
                %v3777 = vld [vmem:[%s3761 + $0x1c] sm:$0xf]
                %3778 = vst [vmem:[%s3762 + $0x1c] sm:$0xf] %v3777
                %v3779 = vld [vmem:[%s3761 + $0x20] sm:$0xf]
                %3780 = vst [vmem:[%s3762 + $0x20] sm:$0xf] %v3779
                %v3781 = vld [vmem:[%s3761 + $0x24] sm:$0xf]
                %3782 = vst [vmem:[%s3762 + $0x24] sm:$0xf] %v3781
                %v3783 = vld [vmem:[%s3761 + $0x28] sm:$0xf]
                %3784 = vst [vmem:[%s3762 + $0x28] sm:$0xf] %v3783
                %v3785 = vld [vmem:[%s3761 + $0x2c] sm:$0xf]
                %3786 = vst [vmem:[%s3762 + $0x2c] sm:$0xf] %v3785
                %v3787 = vld [vmem:[%s3761 + $0x30] sm:$0xf]
                %3788 = vst [vmem:[%s3762 + $0x30] sm:$0xf] %v3787
                %v3789 = vld [vmem:[%s3761 + $0x34] sm:$0xf]
                %3790 = vst [vmem:[%s3762 + $0x34] sm:$0xf] %v3789
                %v3791 = vld [vmem:[%s3761 + $0x38] sm:$0xf]
                %3792 = vst [vmem:[%s3762 + $0x38] sm:$0xf] %v3791
                %v3793 = vld [vmem:[%s3761 + $0x3c] sm:$0xf]
                %3794 = vst [vmem:[%s3762 + $0x3c] sm:$0xf] %v3793
                %s3795 = sadd.s32 1, %s3760
                %p3796 = scmp.ge.s32.totalorder %s3795, %s3753
                %s3797 = scalar_select %p3796, 0, %s3795
                %s3798 = smul.u32 %s3797, 64
                %s3799 = smul.u32 %s3797, 64
                %s3800 = scalar_lea.vmem %s3733, %s3798 [#allocation9]
                %s3801 = scalar_lea.vmem %s3744, %s3799
              $region85: #{net_forward.1} parent=79 // loop_footer
                %s3757 = sadd.s32 %s3755, 1
              $region86: #{net_forward.1} parent=79 // loop_footer_branch
                %3754 = sbr.rel target = $region82
              $region87: #{net_forward.1} parent=79 // loop_exit
                _
              %s3802 = sshrl.u32 %s3740, 4
              %s3803 = sand.u32 %s3740, 15
              %s3804 = smul.u32 %s3802, 16
              %s3805 = smul.u32 4, %s3804
              %s3806 = scalar_lea.vmem %s3733, %s3805 [#allocation9]
              %s3807 = smul.u32 4, %s3804
              %s3808 = scalar_lea.vmem %s3744, %s3807
              // While loop
              $region88: #{net_forward.1} parent=79 // loop_pre_header
                _
              $region89: #{net_forward.1} parent=79 // loop_header
                %s3810 = sphi 0, %s3812
                %p3811 = scmp.ge.s32.totalorder %s3810, %s3803
                %s3815 = sphi 0, %s3822
                %s3816 = sphi %s3806, %s3825
                %s3817 = sphi %s3808, %s3826
              $region90: #{net_forward.1} parent=79 // loop_header_branch
                %3814 = sbr.rel (%p3811) target = $region94
              $region91: #{net_forward.1} parent=79 // loop_body
                %v3818 = vld [vmem:[%s3816] sm:$0xf]
                %3819 = vst [vmem:[%s3817] sm:$0xf] %v3818
                %s3820 = sadd.s32 1, %s3815
                %p3821 = scmp.ge.s32.totalorder %s3820, %s3803
                %s3822 = scalar_select %p3821, 0, %s3820
                %s3823 = smul.u32 %s3822, 4
                %s3824 = smul.u32 %s3822, 4
                %s3825 = scalar_lea.vmem %s3806, %s3823 [#allocation9]
                %s3826 = scalar_lea.vmem %s3808, %s3824
              $region92: #{net_forward.1} parent=79 // loop_footer
                %s3812 = sadd.s32 %s3810, 1
              $region93: #{net_forward.1} parent=79 // loop_footer_branch
                %3809 = sbr.rel target = $region89
              $region94: #{net_forward.1} parent=79 // loop_exit
                _
            $region80: #{net_forward.1} parent=71 // pred_fallthru
              _
          $region72: #{net_forward.1} parent=67 // pred_fallthru
            _
          %3904 = vnop
        $region68: #{net_forward.1} parent=47 // pred_fallthru
          _
      $region48: #{net_forward.1} parent=5 // pred_fallthru
        _
      %p3905 = scmp.le.s32.totalorder 2, %s18
      // Predicated region
      $region113: #{net_forward.1} parent=5 // pred_check
        %p3906 = pneg %p3905
      $region114: #{net_forward.1} parent=5 // pred_check_branch
        %3908 = sbr.rel (%p3906) target = $region116
      $region115: #{net_forward.1} parent=5 // pred_region
        %s3909 = ssub.s32 %s18, 2
        // Predicated region
        $region117: #{net_forward.1} parent=115 // pred_check
          %p3910 = pneg %p199
        $region118: #{net_forward.1} parent=115 // pred_check_branch
          %3912 = sbr.rel (%p3910) target = $region120
        $region119: #{net_forward.1} parent=115 // pred_region
          %s3913 = sand.u32 %s184, 1
          %s3914 = sand.u32 %s184, 1
          %s3915 = smul.addr %s3914, 64
          %s3916 = scalar_lea.vmem [#allocation9], %s3915
        $region120: #{net_forward.1} parent=115 // pred_fallthru
          _
      $region116: #{net_forward.1} parent=5 // pred_fallthru
        _
    $region6: #{net_forward.1} parent=1 // loop_footer
      %s22 = sadd.s32 1, %s18
    $region7: #{net_forward.1} parent=1 // loop_footer_branch
      %17 = sbr.rel target = $region3
    $region8: #{net_forward.1} parent=1 // loop_exit
      _
    %3917 = vsyncpa [#allocation3], 1
    %s3918 = scalar_lea.sflag [#allocation3], 1
    %3919 = vsyncpa %s3918, 1
    %3920 = vsyncpa [#allocation5], 1
    %3921 = vsyncpa [#allocation8], 1

</llo_original>
